<compile_context>
chip_gen: v6e
topology: v6e:2x2x1
jax: 0.10.0
libtpu: 0.0.40
codegen_flags: <defaults>
</compile_context>

<pallas_src>
import functools

import jax
import jax.numpy as jnp
from jax.experimental import pallas as pl
from jax.experimental.pallas import tpu as pltpu


_MAX_TN = 4096                           # cap on locations-per-tile (lanes)
_TARGET_BLOCK_BYTES = 4 * 1024 * 1024    # aim ~4 MB of cls logits per grid step


def _choose_tile(n_loc, bytes_per_loc):
    """Lane tile big enough to amortize per-step overhead, small enough that
    double-buffered blocks fit every generation's scoped-VMEM budget."""
    tn = _TARGET_BLOCK_BYTES // max(int(bytes_per_loc), 1)
    tn = max(128, min(_MAX_TN, (tn // 128) * 128))
    if n_loc <= tn:
        return n_loc          # single full-extent block (always layout-legal)
    return tn                 # multiple of 128; tail handled as a partial block


def _decoder_kernel(*refs, add_centerness):
    if add_centerness:
        cls_ref, cnt_ref, scores_ref, classes_ref = refs
    else:
        cls_ref, scores_ref, classes_ref = refs
        cnt_ref = None

    logits = cls_ref[...]                               # (B, C, TN), input dtype
    num_classes = logits.shape[1]

    # max + argmax over the class (sublane) axis on the RAW logits. Sigmoid is
    # strictly monotonic so this matches torch.max(sigmoid(logits)); the only
    # divergence is tie-breaking when two distinct logits both saturate to
    # exactly 1.0 in f32 sigmoid (rare; raw-logit argmax is the "more correct"
    # pick).  First-index tie-breaking via min-over-matching-indices.
    max_logit = jnp.max(logits, axis=1)                 # (B, TN)
    cls_idx = jax.lax.broadcasted_iota(jnp.int32, logits.shape, 1)
    is_max = logits == max_logit[:, None, :]
    classes = jnp.min(jnp.where(is_max, cls_idx, num_classes), axis=1)
    classes = classes.astype(jnp.int32) + 1

    # Single sigmoid per location (EUP slot), in f32.
    scores = jax.nn.sigmoid(max_logit.astype(jnp.float32))
    if add_centerness:
        cnt = jax.nn.sigmoid(cnt_ref[...].astype(jnp.float32))   # (B, TN)
        scores = jnp.sqrt(scores * cnt)

    scores_ref[...] = scores
    classes_ref[...] = classes


def _run_decode_level(cls_lv, cnt_lv, add_centerness):
    """cls_lv [B,C,N], cnt_lv [B,N] -> scores [B,N] f32, classes(+1) [B,N] i32."""
    B, C, N = cls_lv.shape
    tn = _choose_tile(N, B * C * cls_lv.dtype.itemsize)
    grid = (pl.cdiv(N, tn),)

    in_specs = [pl.BlockSpec((B, C, tn), lambda n: (0, 0, n))]
    args = [cls_lv]
    if add_centerness:
        in_specs.append(pl.BlockSpec((B, tn), lambda n: (0, n)))
        args.append(cnt_lv)

    kernel = functools.partial(_decoder_kernel, add_centerness=add_centerness)
    scores, classes = pl.pallas_call(
        kernel,
        out_shape=(
            jax.ShapeDtypeStruct((B, N), jnp.float32),
            jax.ShapeDtypeStruct((B, N), jnp.int32),
        ),
        grid_spec=pltpu.PrefetchScalarGridSpec(
            num_scalar_prefetch=0,
            grid=grid,
            in_specs=in_specs,
            out_specs=[
                pl.BlockSpec((B, tn), lambda n: (0, n)),
                pl.BlockSpec((B, tn), lambda n: (0, n)),
            ],
        ),
        compiler_params=pltpu.CompilerParams(
            dimension_semantics=("parallel",),
            vmem_limit_bytes=32 * 1024 * 1024),
    )(*args)
    return scores, classes


# ----------------------------- plain-JAX glue ------------------------------

def coords_fmap2orig(h, w, stride):
    shifts_x = jnp.arange(0, w * stride, stride, dtype=jnp.float32)
    shifts_y = jnp.arange(0, h * stride, stride, dtype=jnp.float32)
    shift_y, shift_x = jnp.meshgrid(shifts_y, shifts_x, indexing="ij")
    coords = jnp.stack([shift_x.reshape(-1), shift_y.reshape(-1)], -1) + stride // 2
    return coords  # [h*w, 2]


def decoder_forward(cls_logits, cnt_logits, reg_preds, *, strides,
                    add_centerness, max_detection):
    B, C = cls_logits[0].shape[:2]
    hw_list = [(p.shape[2], p.shape[3]) for p in cls_logits]
    N = sum(h * w for h, w in hw_list)

    # Per-level decode on free channel-major reshape views (no HBM concat of
    # the big logits tensors); only the small [B,N_l] outputs get concatenated.
    scores_lv, classes_lv = [], []
    for cls_p, cnt_p in zip(cls_logits, cnt_logits):
        s, c = _run_decode_level(
            cls_p.reshape(B, C, -1), cnt_p.reshape(B, -1), add_centerness)
        scores_lv.append(s)
        classes_lv.append(c)
    scores = jnp.concatenate(scores_lv, axis=1)                   # [B, N]
    classes = jnp.concatenate(classes_lv, axis=1)                 # [B, N]

    max_num = min(max_detection, N)
    topk_scores, topk_ind = jax.lax.top_k(scores, max_num)        # [B, K]
    classes_topk = jnp.take_along_axis(classes, topk_ind, axis=1)

    # Box decode in plain JAX only for the K top-k locations; gather from the
    # channel-major [B,4,N] view (free reshapes, no full transpose pass).
    reg_cat = jnp.concatenate([p.reshape(B, 4, -1) for p in reg_preds],
                              axis=-1)                            # [B,4,N] ltrb
    coords = jnp.concatenate(
        [coords_fmap2orig(h, w, s) for (h, w), s in zip(hw_list, strides)],
        axis=0)                                                   # [N,2]

    reg_topk = jnp.take_along_axis(reg_cat, topk_ind[:, None, :], axis=2)  # [B,4,K]
    lt = jnp.transpose(reg_topk[:, :2, :], (0, 2, 1))                      # [B,K,2]
    rb = jnp.transpose(reg_topk[:, 2:, :], (0, 2, 1))                      # [B,K,2]
    coords_topk = jnp.take(coords, topk_ind, axis=0)                       # [B,K,2]
    boxes_topk = jnp.concatenate(
        [coords_topk - lt, coords_topk + rb], axis=-1)            # [B,K,4]

    # TODO(synk): score-threshold boolean masking + sequential batched NMS of
    # the torch `_post_process` produce data-dependent (ragged) output shapes
    # and an inherently serial loop; no clean static-shape Pallas equivalent.
    return topk_scores, classes_topk, boxes_topk


# pure-JAX reference for the same decode path (no Pallas), used as a check
def decoder_reference(cls_logits, cnt_logits, reg_preds, *, strides,
                      add_centerness, max_detection):
    B, C = cls_logits[0].shape[:2]
    hw_list = [(p.shape[2], p.shape[3]) for p in cls_logits]
    cls_cat = jnp.concatenate(
        [p.transpose(0, 2, 3, 1).reshape(B, -1, C) for p in cls_logits], axis=1)
    cnt_cat = jnp.concatenate(
        [p.transpose(0, 2, 3, 1).reshape(B, -1, 1) for p in cnt_logits], axis=1)
    reg_cat = jnp.concatenate(
        [p.transpose(0, 2, 3, 1).reshape(B, -1, 4) for p in reg_preds], axis=1)
    coords = jnp.concatenate(
        [coords_fmap2orig(h, w, s) for (h, w), s in zip(hw_list, strides)], axis=0)

    cls_preds = jax.nn.sigmoid(cls_cat)                           # [B,N,C]
    cnt_preds = jax.nn.sigmoid(cnt_cat)                           # [B,N,1]
    scores = jnp.max(cls_preds, axis=-1)
    classes = jnp.argmax(cls_preds, axis=-1).astype(jnp.int32) + 1
    if add_centerness:
        scores = jnp.sqrt(scores * cnt_preds[..., 0])
    x1y1 = coords[None] - reg_cat[..., :2]
    x2y2 = coords[None] + reg_cat[..., 2:]
    boxes = jnp.concatenate([x1y1, x2y2], axis=-1)
    max_num = min(max_detection, scores.shape[-1])
    topk_scores, topk_ind = jax.lax.top_k(scores, max_num)
    return (topk_scores,
            jnp.take_along_axis(classes, topk_ind, axis=1),
            jnp.take_along_axis(boxes, topk_ind[:, :, None], axis=1))


if __name__ == "__main__":
    key = jax.random.PRNGKey(0)
    B, C = 2, 4
    # Level 0 has 4608 locations -> exercises a multi-step grid with a partial
    # tail block; the smaller levels run as single full-extent blocks.
    level_hw = [(72, 64), (36, 32), (18, 16)]
    strides = [8, 16, 32]
    add_centerness = True
    max_detection = 8

    keys = jax.random.split(key, 3 * len(level_hw))
    cls_logits, cnt_logits, reg_preds = [], [], []
    for i, (h, w) in enumerate(level_hw):
        cls_logits.append(jax.random.normal(keys[3 * i + 0], (B, C, h, w), jnp.float32))
        cnt_logits.append(jax.random.normal(keys[3 * i + 1], (B, 1, h, w), jnp.float32))
        # ltrb offsets (positive, like exp-activated regression heads)
        reg_preds.append(jnp.exp(jax.random.normal(keys[3 * i + 2], (B, 4, h, w),
                                                   jnp.float32)))

    scores, classes, boxes = decoder_forward(
        cls_logits, cnt_logits, reg_preds,
        strides=strides, add_centerness=add_centerness, max_detection=max_detection)
    jax.block_until_ready((scores, classes, boxes))

    r_scores, r_classes, r_boxes = decoder_reference(
        cls_logits, cnt_logits, reg_preds,
        strides=strides, add_centerness=add_centerness, max_detection=max_detection)

    assert scores.shape == (B, max_detection)
    assert classes.shape == (B, max_detection)
    assert boxes.shape == (B, max_detection, 4)
    assert jnp.allclose(scores, r_scores, atol=1e-5)
    assert jnp.array_equal(classes, r_classes)
    assert jnp.allclose(boxes, r_boxes, atol=1e-4)

    print("KERNEL_OK")
</pallas_src>

<mosaic_0001>
module attributes {stable_mosaic.version = 11 : i64} {
  func.func @_decoder_kernel(%arg0: i32, %arg1: memref<2x4x4096xf32, #tpu.memory_space<vmem>>, %arg2: memref<2x4096xf32, #tpu.memory_space<vmem>>, %arg3: memref<2x4096xf32, #tpu.memory_space<vmem>>, %arg4: memref<2x4096xi32, #tpu.memory_space<vmem>>) attributes {dimension_semantics = [#tpu.dimension_semantics<parallel>], iteration_bounds = array<i64: 2>, scalar_prefetch = 0 : i64, scratch_operands = 0 : i64, tpu.core_type = #tpu.core_type<tc>, window_params = [{transform_indices = @transform_0, window_bounds = array<i64: 2, 4, 4096>}, {transform_indices = @transform_1, window_bounds = array<i64: 2, 4096>}, {transform_indices = @transform_2, window_bounds = array<i64: 2, 4096>}, {transform_indices = @transform_3, window_bounds = array<i64: 2, 4096>}]} {
    %c0 = arith.constant 0 : index
    %c0_0 = arith.constant 0 : index
    %c0_1 = arith.constant 0 : index
    %0 = vector.load %arg1[%c0, %c0_0, %c0_1] : memref<2x4x4096xf32, #tpu.memory_space<vmem>>, vector<2x4x4096xf32>
    %cst = arith.constant dense<0xFF800000> : vector<2x4096xf32>
    %1 = vector.multi_reduction <maximumf>, %0, %cst [1] : vector<2x4x4096xf32> to vector<2x4096xf32>
    %2 = tpu.iota {dimensions = array<i32: 1>} : vector<2x4x4096xi32>
    %3 = vector.shape_cast %1 : vector<2x4096xf32> to vector<2x1x4096xf32>
    %4 = vector.broadcast %3 : vector<2x1x4096xf32> to vector<2x4x4096xf32>
    %5 = arith.cmpf oeq, %0, %4 : vector<2x4x4096xf32>
    %c4_i32 = arith.constant 4 : i32
    %6 = vector.broadcast %c4_i32 : i32 to vector<2x4x4096xi32>
    %7 = arith.select %5, %2, %6 : vector<2x4x4096xi1>, vector<2x4x4096xi32>
    %cst_2 = arith.constant dense<2147483647> : vector<2x4096xi32>
    %8 = vector.multi_reduction <minsi>, %7, %cst_2 [1] : vector<2x4x4096xi32> to vector<2x4096xi32>
    %c1_i32 = arith.constant 1 : i32
    %9 = vector.broadcast %c1_i32 : i32 to vector<2x4096xi32>
    %10 = arith.addi %8, %9 : vector<2x4096xi32>
    %11 = arith.negf %1 : vector<2x4096xf32>
    %12 = math.exp %11 : vector<2x4096xf32>
    %cst_3 = arith.constant 1.000000e+00 : f32
    %13 = vector.broadcast %cst_3 : f32 to vector<2x4096xf32>
    %14 = arith.addf %13, %12 : vector<2x4096xf32>
    %15 = arith.divf %13, %14 : vector<2x4096xf32>
    %c0_4 = arith.constant 0 : index
    %c0_5 = arith.constant 0 : index
    %16 = vector.load %arg2[%c0_4, %c0_5] : memref<2x4096xf32, #tpu.memory_space<vmem>>, vector<2x4096xf32>
    %17 = arith.negf %16 : vector<2x4096xf32>
    %18 = math.exp %17 : vector<2x4096xf32>
    %cst_6 = arith.constant 1.000000e+00 : f32
    %19 = vector.broadcast %cst_6 : f32 to vector<2x4096xf32>
    %20 = arith.addf %19, %18 : vector<2x4096xf32>
    %21 = arith.divf %19, %20 : vector<2x4096xf32>
    %22 = arith.mulf %15, %21 : vector<2x4096xf32>
    %23 = math.sqrt %22 : vector<2x4096xf32>
    %c0_7 = arith.constant 0 : index
    %c0_8 = arith.constant 0 : index
    %24 = vector.load %arg3[%c0_7, %c0_8] : memref<2x4096xf32, #tpu.memory_space<vmem>>, vector<2x4096xf32>
    tpu.vector_store %arg3[%c0_7, %c0_8], %23 {strides = array<i32>} : memref<2x4096xf32, #tpu.memory_space<vmem>>, vector<2x4096xf32>,
    %c0_9 = arith.constant 0 : index
    %c0_10 = arith.constant 0 : index
    %25 = vector.load %arg4[%c0_9, %c0_10] : memref<2x4096xi32, #tpu.memory_space<vmem>>, vector<2x4096xi32>
    tpu.vector_store %arg4[%c0_9, %c0_10], %10 {strides = array<i32>} : memref<2x4096xi32, #tpu.memory_space<vmem>>, vector<2x4096xi32>,
    return
  }
  func.func @transform_0(%arg0: i32) -> (i32, i32, i32) {
    %c0_i32 = arith.constant 0 : i32
    %c0_i32_0 = arith.constant 0 : i32
    %c0_i32_1 = arith.constant 0 : i32
    return %c0_i32, %c0_i32_0, %arg0 : i32, i32, i32
  }
  func.func @transform_1(%arg0: i32) -> (i32, i32) {
    %c0_i32 = arith.constant 0 : i32
    %c0_i32_0 = arith.constant 0 : i32
    return %c0_i32, %arg0 : i32, i32
  }
  func.func @transform_2(%arg0: i32) -> (i32, i32) {
    %c0_i32 = arith.constant 0 : i32
    %c0_i32_0 = arith.constant 0 : i32
    return %c0_i32, %arg0 : i32, i32
  }
  func.func @transform_3(%arg0: i32) -> (i32, i32) {
    %c0_i32 = arith.constant 0 : i32
    %c0_i32_0 = arith.constant 0 : i32
    return %c0_i32, %arg0 : i32, i32
  }
}

</mosaic_0001>

<llo_original>
// kernel: tpu_custom_call.1
$region0: #{tpu_custom_call.1}
  #allocation0 [shape = 'u32[]', space=smem, size = 0x4, offset = 0x4, fixed_abs, tag = 'smem constant byte address 0x4 - core index']
  #allocation1 [shape = 'u32[144,128]{1,0:T(1,128)}', space=vmem, size = 0x12000, scoped, tag = 'internal scratch']
  %s0 = inlined_call_operand.hbm [shape: f32[2,4,4608], index: 0, kind: input, shape index: {}]
  %s1 = inlined_call_operand.hbm [shape: f32[2,4608], index: 1, kind: input, shape index: {}]
  %s2 = inlined_call_operand.hbm [shape: f32[2,4608], index: 2, kind: output, shape index: {0}]
  %s3 = inlined_call_operand.hbm [shape: s32[2,4608], index: 3, kind: output, shape index: {1}]
  %4 = xla_tuple %s2, %s3
  %s5 = sld [smem:[#allocation0]]
  $region57: #{tpu_custom_call.1} parent=0
    _
  %s7 = ssub.s32 1, %s5
  %s8 = scalar_select 0, %s7, %s5
  $region1: #{tpu_custom_call.1} parent=0
    #allocation2 [shape = 'u8[262144]{0}', space=vmem, size = 0x40000, scoped, tag = 'input window, operand 0']
    #allocation3 [shape = 's32[2]{0}', space=sflag, size = 0x8, scoped, tag = 'scoped memory for tpu_custom_call.1']
    #allocation4 [shape = 's32[2]{0}', space=sflag, size = 0x8, scoped, tag = 'scoped memory for tpu_custom_call.1']
    #allocation5 [shape = 'u8[65536]{0}', space=vmem, size = 0x10000, scoped, tag = 'input window, operand 1']
    #allocation6 [shape = 's32[2]{0}', space=sflag, size = 0x8, scoped, tag = 'scoped memory for tpu_custom_call.1']
    #allocation7 [shape = 'u8[65536]{0}', space=vmem, size = 0x10000, scoped, tag = 'output window, operand 0']
    #allocation8 [shape = 'u8[65536]{0}', space=vmem, size = 0x10000, scoped, tag = 'output window, operand 1']
    #allocation9 [shape = 's32[2]{0}', space=sflag, size = 0x8, scoped, tag = 'scoped memory for tpu_custom_call.1']
    %9 = vsyncpa [#allocation3], 0
    %s10 = scalar_lea.sflag [#allocation3], 1
    %11 = vsyncpa %s10, 0
    %12 = vsyncpa [#allocation6], 0
    %s13 = scalar_lea.sflag [#allocation6], 1
    %14 = vsyncpa %s13, 0
    %15 = vsyncpa [#allocation4], 0
    %s16 = scalar_lea.sflag [#allocation4], 1
    %17 = vsyncpa %s16, 0
    %18 = vsyncpa [#allocation9], 0
    %s19 = scalar_lea.sflag [#allocation9], 1
    %20 = vsyncpa %s19, 0
    loop: start=0, step=1, limit=4
    $region2: #{tpu_custom_call.1} parent=1 // loop_pre_header
      _
    $region3: #{tpu_custom_call.1} parent=1 // loop_header
      %s22 = sphi 0, %s26
      %p23 = scmp.ge.s32.totalorder %s22, 4
      %s32 = sphi 0, %s34
      %s35 = sphi 0, %s32
      %s36 = sphi 0, %s35
      %s52 = sphi 0, %s36
      %s58 = sphi 0, %s60
      %s61 = sphi 0, %s58
      %s62 = sphi 0, %s61
      %s78 = sphi 0, %s62
      %s84 = sphi 0, %s86
      %s87 = sphi 0, %s84
      %s88 = sphi 0, %s87
      %s104 = sphi 0, %s88
      %s110 = sphi 0, %s112
      %s113 = sphi 0, %s110
      %s114 = sphi 0, %s113
      %s130 = sphi 0, %s114
    $region4: #{tpu_custom_call.1} parent=1 // loop_header_branch
      %25 = sbr.rel (%p23) target = $region8
    $region5: #{tpu_custom_call.1} parent=1 // loop_body
      %s27 = ssub.s32 %s22, 1
      %s28 = ssub.s32 %s22, 2
      %s29 = sadd.s32 %s22, 1
      %s30 = ssub.s32 %s22, %s29
      %p31 = scmp.eq.s32.totalorder %s30, 0
      %s33 = sadd.s32 %s32, 1
      %s34 = scalar_select %p31, %s32, %s33
      %p37 = pneg %p31
      %p38 = scmp.eq.s32.totalorder %s22, 1
      %p39 = por %p37, %p38
      %p40 = scmp.ne.s32.totalorder %s32, %s35
      %p41 = scmp.eq.s32.totalorder %s22, 0
      %p42 = por %p40, %p41
      %p43 = scmp.ne.s32.totalorder %s32, %s35
      %p44 = scmp.eq.s32.totalorder %s27, 1
      %p45 = por %p43, %p44
      %p46 = scmp.ne.s32.totalorder %s35, %s36
      %p47 = scmp.eq.s32.totalorder %s27, 0
      %p48 = por %p46, %p47
      %p49 = scmp.ne.s32.totalorder %s35, %s36
      %p50 = scmp.eq.s32.totalorder %s28, 1
      %p51 = por %p49, %p50
      %p53 = scmp.ne.s32.totalorder %s36, %s52
      %p54 = scmp.eq.s32.totalorder %s28, 0
      %p55 = por %p53, %p54
      %s56 = ssub.s32 %s22, %s29
      %p57 = scmp.eq.s32.totalorder %s56, 0
      %s59 = sadd.s32 %s58, 1
      %s60 = scalar_select %p57, %s58, %s59
      %p63 = pneg %p57
      %p64 = scmp.eq.s32.totalorder %s22, 1
      %p65 = por %p63, %p64
      %p66 = scmp.ne.s32.totalorder %s58, %s61
      %p67 = scmp.eq.s32.totalorder %s22, 0
      %p68 = por %p66, %p67
      %p69 = scmp.ne.s32.totalorder %s58, %s61
      %p70 = scmp.eq.s32.totalorder %s27, 1
      %p71 = por %p69, %p70
      %p72 = scmp.ne.s32.totalorder %s61, %s62
      %p73 = scmp.eq.s32.totalorder %s27, 0
      %p74 = por %p72, %p73
      %p75 = scmp.ne.s32.totalorder %s61, %s62
      %p76 = scmp.eq.s32.totalorder %s28, 1
      %p77 = por %p75, %p76
      %p79 = scmp.ne.s32.totalorder %s62, %s78
      %p80 = scmp.eq.s32.totalorder %s28, 0
      %p81 = por %p79, %p80
      %s82 = ssub.s32 %s22, %s29
      %p83 = scmp.eq.s32.totalorder %s82, 0
      %s85 = sadd.s32 %s84, 1
      %s86 = scalar_select %p83, %s84, %s85
      %p89 = pneg %p83
      %p90 = scmp.eq.s32.totalorder %s22, 1
      %p91 = por %p89, %p90
      %p92 = scmp.ne.s32.totalorder %s84, %s87
      %p93 = scmp.eq.s32.totalorder %s22, 0
      %p94 = por %p92, %p93
      %p95 = scmp.ne.s32.totalorder %s84, %s87
      %p96 = scmp.eq.s32.totalorder %s27, 1
      %p97 = por %p95, %p96
      %p98 = scmp.ne.s32.totalorder %s87, %s88
      %p99 = scmp.eq.s32.totalorder %s27, 0
      %p100 = por %p98, %p99
      %p101 = scmp.ne.s32.totalorder %s87, %s88
      %p102 = scmp.eq.s32.totalorder %s28, 1
      %p103 = por %p101, %p102
      %p105 = scmp.ne.s32.totalorder %s88, %s104
      %p106 = scmp.eq.s32.totalorder %s28, 0
      %p107 = por %p105, %p106
      %s108 = ssub.s32 %s22, %s29
      %p109 = scmp.eq.s32.totalorder %s108, 0
      %s111 = sadd.s32 %s110, 1
      %s112 = scalar_select %p109, %s110, %s111
      %p115 = pneg %p109
      %p116 = scmp.eq.s32.totalorder %s22, 1
      %p117 = por %p115, %p116
      %p118 = scmp.ne.s32.totalorder %s110, %s113
      %p119 = scmp.eq.s32.totalorder %s22, 0
      %p120 = por %p118, %p119
      %p121 = scmp.ne.s32.totalorder %s110, %s113
      %p122 = scmp.eq.s32.totalorder %s27, 1
      %p123 = por %p121, %p122
      %p124 = scmp.ne.s32.totalorder %s113, %s114
      %p125 = scmp.eq.s32.totalorder %s27, 0
      %p126 = por %p124, %p125
      %p127 = scmp.ne.s32.totalorder %s113, %s114
      %p128 = scmp.eq.s32.totalorder %s28, 1
      %p129 = por %p127, %p128
      %p131 = scmp.ne.s32.totalorder %s114, %s130
      %p132 = scmp.eq.s32.totalorder %s28, 0
      %p133 = por %p131, %p132
      %p134 = scmp.le.s32.totalorder 1, %s22
      %p135 = scmp.lt.s32.totalorder %s22, 3
      %p136 = pnand %p134, %p135
      %p137 = pneg %p136
      // Predicated region
      $region9: #{tpu_custom_call.1} parent=5 // pred_check
        _
      $region10: #{tpu_custom_call.1} parent=5 // pred_check_branch
        %139 = sbr.rel (%p136) target = $region12
      $region11: #{tpu_custom_call.1} parent=5 // pred_region
        %s140 = ssub.s32 %s22, 1
      $region12: #{tpu_custom_call.1} parent=5 // pred_fallthru
        _
      %p141 = scmp.lt.s32.totalorder %s22, 2
      // Predicated region
      $region13: #{tpu_custom_call.1} parent=5 // pred_check
        %p142 = pneg %p141
      $region14: #{tpu_custom_call.1} parent=5 // pred_check_branch
        %144 = sbr.rel (%p142) target = $region16
      $region15: #{tpu_custom_call.1} parent=5 // pred_region
        // Predicated region
        $region17: #{tpu_custom_call.1} parent=15 // pred_check
          %p145 = pneg %p42
        $region18: #{tpu_custom_call.1} parent=15 // pred_check_branch
          %147 = sbr.rel (%p145) target = $region20
        $region19: #{tpu_custom_call.1} parent=15 // pred_region
          %s148 = sand.u32 %s32, 1
          %s149 = scalar_lea.sflag [#allocation3], %s148
          %s150 = sand.u32 %s32, 1
          %s151 = smul.addr %s150, 256
          %s152 = scalar_lea.vmem [#allocation2], %s151
          %s153 = smul.u32 32, %s22
          %s154 = ssub.s32 36, %s153
          %p155 = scmp.lt.s32.totalorder %s154, 32
          %s156 = scalar_select %p155, %s154, 32
          %s157 = smul.u32 128, %s156
          %s159 = ssub.s32 4096, %s157
          %160 = vsyncadd %s149, %s159
          %p161 = scmp.ne.s32.totalorder 0, %s157
          %s162 = smul.addr %s153, 64
          %s163 = scalar_lea.hbm %s0, %s162
          %s164 = smul.u32 %s156, 4
          %s165 = smul.u32 %s164, 2
          %s166 = sshll.u32 %s152, 4
          %s167 = int_to_ptr.vmem [resolvable:$true] %s166
          %s168 = sshll.u32 %s165, 4
          %172 = dma.hbm_to_vmem [thread:$0]  (%p161), %s163, %s168, %s167, %s149, 2304, 2048, %s164
        $region20: #{tpu_custom_call.1} parent=15 // pred_fallthru
          _
        // Predicated region
        $region21: #{tpu_custom_call.1} parent=15 // pred_check
          %p173 = pneg %p68
        $region22: #{tpu_custom_call.1} parent=15 // pred_check_branch
          %175 = sbr.rel (%p173) target = $region24
        $region23: #{tpu_custom_call.1} parent=15 // pred_region
          %s176 = sand.u32 %s58, 1
          %s177 = scalar_lea.sflag [#allocation6], %s176
          %s178 = sand.u32 %s58, 1
          %s179 = smul.addr %s178, 64
          %s180 = scalar_lea.vmem [#allocation5], %s179
          %s181 = smul.u32 32, %s22
          %s182 = ssub.s32 36, %s181
          %p183 = scmp.lt.s32.totalorder %s182, 32
          %s184 = scalar_select %p183, %s182, 32
          %s185 = smul.u32 32, %s184
          %s187 = ssub.s32 1024, %s185
          %188 = vsyncadd %s177, %s187
          %p189 = scmp.ne.s32.totalorder 0, %s185
          %s190 = smul.addr %s181, 32
          %s191 = scalar_lea.hbm %s1, %s190
          %s192 = smul.u32 %s184, 2
          %s193 = sshll.u32 %s192, 4
          %s194 = sshll.u32 %s180, 4
          %s195 = int_to_ptr.vmem [resolvable:$true] %s194
          %197 = dma.hbm_to_vmem [thread:$0]  (%p189), %s191, %s193, %s195, %s177
        $region24: #{tpu_custom_call.1} parent=15 // pred_fallthru
          _
      $region16: #{tpu_custom_call.1} parent=5 // pred_fallthru
        _
      %p198 = scmp.le.s32.totalorder 1, %s22
      %p199 = scmp.lt.s32.totalorder %s22, 3
      %p200 = pnand %p198, %p199
      %p201 = pneg %p200
      // Predicated region
      $region25: #{tpu_custom_call.1} parent=5 // pred_check
        _
      $region26: #{tpu_custom_call.1} parent=5 // pred_check_branch
        %203 = sbr.rel (%p200) target = $region28
      $region27: #{tpu_custom_call.1} parent=5 // pred_region
        %s204 = ssub.s32 %s22, 1
        %s205 = sand.u32 %s35, 1
        %s206 = scalar_lea.sflag [#allocation3], %s205
        %s207 = sand.u32 %s35, 1
        %s208 = smul.addr %s207, 256
        %s209 = scalar_lea.vmem [#allocation2], %s208
        // Predicated region
        $region29: #{tpu_custom_call.1} parent=27 // pred_check
          %p210 = pneg %p48
        $region30: #{tpu_custom_call.1} parent=27 // pred_check_branch
          %212 = sbr.rel (%p210) target = $region32
        $region31: #{tpu_custom_call.1} parent=27 // pred_region
          %213 = dma.done %s206, 4096
        $region32: #{tpu_custom_call.1} parent=27 // pred_fallthru
          _
        %s214 = sand.u32 %s61, 1
        %s215 = scalar_lea.sflag [#allocation6], %s214
        %s216 = sand.u32 %s61, 1
        %s217 = smul.addr %s216, 64
        %s218 = scalar_lea.vmem [#allocation5], %s217
        // Predicated region
        $region33: #{tpu_custom_call.1} parent=27 // pred_check
          %p219 = pneg %p74
        $region34: #{tpu_custom_call.1} parent=27 // pred_check_branch
          %221 = sbr.rel (%p219) target = $region36
        $region35: #{tpu_custom_call.1} parent=27 // pred_region
          %222 = dma.done %s215, 1024
        $region36: #{tpu_custom_call.1} parent=27 // pred_fallthru
          _
        %s223 = sand.u32 %s35, 1
        %s224 = scalar_lea.sflag [#allocation3], %s223
        %s225 = sand.u32 %s35, 1
        %s226 = smul.addr %s225, 256
        %s227 = scalar_lea.vmem [#allocation2], %s226
        %p228 = pneg %p48
        %p229 = pneg %p45
        %s230 = sand.u32 %s61, 1
        %s231 = scalar_lea.sflag [#allocation6], %s230
        %s232 = sand.u32 %s61, 1
        %s233 = smul.addr %s232, 64
        %s234 = scalar_lea.vmem [#allocation5], %s233
        %p235 = pneg %p74
        %p236 = pneg %p71
        %p237 = pneg %p100
        %p238 = pneg %p97
        %s239 = sand.u32 %s87, 1
        %s240 = scalar_lea.sflag [#allocation4], %s239
        %s241 = sand.u32 %s87, 1
        %s242 = smul.addr %s241, 64
        %s243 = scalar_lea.vmem [#allocation7], %s242
        %p244 = pneg %p126
        %p245 = pneg %p123
        %s246 = sand.u32 %s113, 1
        %s247 = scalar_lea.sflag [#allocation9], %s246
        %s248 = sand.u32 %s113, 1
        %s249 = smul.addr %s248, 64
        %s250 = scalar_lea.vmem [#allocation8], %s249
        %s251 = smul.u32 32, %s27
        %s252 = ssub.s32 36, %s251
        %p253 = scmp.lt.s32.totalorder %s252, 32
        %s254 = scalar_select %p253, %s252, 32
        %s255 = smul.u32 128, %s254
        %s256 = smul.u32 32, %s27
        %s257 = ssub.s32 36, %s256
        %p258 = scmp.lt.s32.totalorder %s257, 32
        %s259 = scalar_select %p258, %s257, 32
        %s260 = smul.u32 32, %s259
        %s261 = smul.u32 32, %s27
        %s262 = ssub.s32 36, %s261
        %p263 = scmp.lt.s32.totalorder %s262, 32
        %s264 = scalar_select %p263, %s262, 32
        %s265 = smul.u32 32, %s264
        %s266 = smul.u32 32, %s27
        %s267 = ssub.s32 36, %s266
        %p268 = scmp.lt.s32.totalorder %s267, 32
        %s269 = scalar_select %p268, %s267, 32
        %s270 = smul.u32 32, %s269
        %v271 = vld [vmem:[%s209] sm:$0xff]
        %v272 = vld [vmem:[%s209 + $0x8] sm:$0xff]
        %v273 = vld [vmem:[%s209 + $0x10] sm:$0xff]
        %v274 = vld [vmem:[%s209 + $0x18] sm:$0xff]
        %v275 = vld [vmem:[%s209 + $0x20] sm:$0xff]
        %v276 = vld [vmem:[%s209 + $0x28] sm:$0xff]
        %v277 = vld [vmem:[%s209 + $0x30] sm:$0xff]
        %v278 = vld [vmem:[%s209 + $0x38] sm:$0xff]
        %v279 = vld [vmem:[%s209 + $0x40] sm:$0xff]
        %v280 = vld [vmem:[%s209 + $0x48] sm:$0xff]
        %v281 = vld [vmem:[%s209 + $0x50] sm:$0xff]
        %v282 = vld [vmem:[%s209 + $0x58] sm:$0xff]
        %v283 = vld [vmem:[%s209 + $0x60] sm:$0xff]
        %v284 = vld [vmem:[%s209 + $0x68] sm:$0xff]
        %v285 = vld [vmem:[%s209 + $0x70] sm:$0xff]
        %v286 = vld [vmem:[%s209 + $0x78] sm:$0xff]
        %v287 = vld [vmem:[%s209 + $0x80] sm:$0xff]
        %v288 = vld [vmem:[%s209 + $0x88] sm:$0xff]
        %v289 = vld [vmem:[%s209 + $0x90] sm:$0xff]
        %v290 = vld [vmem:[%s209 + $0x98] sm:$0xff]
        %v291 = vld [vmem:[%s209 + $0xa0] sm:$0xff]
        %v292 = vld [vmem:[%s209 + $0xa8] sm:$0xff]
        %v293 = vld [vmem:[%s209 + $0xb0] sm:$0xff]
        %v294 = vld [vmem:[%s209 + $0xb8] sm:$0xff]
        %v295 = vld [vmem:[%s209 + $0xc0] sm:$0xff]
        %v296 = vld [vmem:[%s209 + $0xc8] sm:$0xff]
        %v297 = vld [vmem:[%s209 + $0xd0] sm:$0xff]
        %v298 = vld [vmem:[%s209 + $0xd8] sm:$0xff]
        %v299 = vld [vmem:[%s209 + $0xe0] sm:$0xff]
        %v300 = vld [vmem:[%s209 + $0xe8] sm:$0xff]
        %v301 = vld [vmem:[%s209 + $0xf0] sm:$0xff]
        %v302 = vld [vmem:[%s209 + $0xf8] sm:$0xff]
        %v335 = vcombine.high %v271, %v271
        %v336 = vcombine.high %v272, %v272
        %v337 = vcombine.high %v273, %v273
        %v338 = vcombine.high %v274, %v274
        %v339 = vcombine.high %v275, %v275
        %v340 = vcombine.high %v276, %v276
        %v341 = vcombine.high %v277, %v277
        %v342 = vcombine.high %v278, %v278
        %v343 = vcombine.high %v279, %v279
        %v344 = vcombine.high %v280, %v280
        %v345 = vcombine.high %v281, %v281
        %v346 = vcombine.high %v282, %v282
        %v347 = vcombine.high %v283, %v283
        %v348 = vcombine.high %v284, %v284
        %v349 = vcombine.high %v285, %v285
        %v350 = vcombine.high %v286, %v286
        %v351 = vcombine.high %v287, %v287
        %v352 = vcombine.high %v288, %v288
        %v353 = vcombine.high %v289, %v289
        %v354 = vcombine.high %v290, %v290
        %v355 = vcombine.high %v291, %v291
        %v356 = vcombine.high %v292, %v292
        %v357 = vcombine.high %v293, %v293
        %v358 = vcombine.high %v294, %v294
        %v359 = vcombine.high %v295, %v295
        %v360 = vcombine.high %v296, %v296
        %v361 = vcombine.high %v297, %v297
        %v362 = vcombine.high %v298, %v298
        %v363 = vcombine.high %v299, %v299
        %v364 = vcombine.high %v300, %v300
        %v365 = vcombine.high %v301, %v301
        %v366 = vcombine.high %v302, %v302
        %vm399 = vcmask 1043456
        %v400 = vsel %vm399, %v271, -inf
        %v401 = vrot.slane %v400, 4
        %v402 = vmax.f32 %v400, %v401
        %v403 = vrot.slane %v402, 2
        %v404 = vmax.f32 %v402, %v403
        %v405 = vrot.slane %v404, 1
        %v406 = vmax.f32 %v404, %v405
        %v407 = vsel %vm399, %v335, -inf
        %v408 = vrot.slane %v407, 4
        %v409 = vmax.f32 %v407, %v408
        %v410 = vrot.slane %v409, 2
        %v411 = vmax.f32 %v409, %v410
        %v412 = vrot.slane %v411, 1
        %v413 = vmax.f32 %v411, %v412
        %v414 = vsel %vm399, %v272, -inf
        %v415 = vrot.slane %v414, 4
        %v416 = vmax.f32 %v414, %v415
        %v417 = vrot.slane %v416, 2
        %v418 = vmax.f32 %v416, %v417
        %v419 = vrot.slane %v418, 1
        %v420 = vmax.f32 %v418, %v419
        %v421 = vsel %vm399, %v336, -inf
        %v422 = vrot.slane %v421, 4
        %v423 = vmax.f32 %v421, %v422
        %v424 = vrot.slane %v423, 2
        %v425 = vmax.f32 %v423, %v424
        %v426 = vrot.slane %v425, 1
        %v427 = vmax.f32 %v425, %v426
        %v428 = vsel %vm399, %v273, -inf
        %v429 = vrot.slane %v428, 4
        %v430 = vmax.f32 %v428, %v429
        %v431 = vrot.slane %v430, 2
        %v432 = vmax.f32 %v430, %v431
        %v433 = vrot.slane %v432, 1
        %v434 = vmax.f32 %v432, %v433
        %v435 = vsel %vm399, %v337, -inf
        %v436 = vrot.slane %v435, 4
        %v437 = vmax.f32 %v435, %v436
        %v438 = vrot.slane %v437, 2
        %v439 = vmax.f32 %v437, %v438
        %v440 = vrot.slane %v439, 1
        %v441 = vmax.f32 %v439, %v440
        %v442 = vsel %vm399, %v274, -inf
        %v443 = vrot.slane %v442, 4
        %v444 = vmax.f32 %v442, %v443
        %v445 = vrot.slane %v444, 2
        %v446 = vmax.f32 %v444, %v445
        %v447 = vrot.slane %v446, 1
        %v448 = vmax.f32 %v446, %v447
        %v449 = vsel %vm399, %v338, -inf
        %v450 = vrot.slane %v449, 4
        %v451 = vmax.f32 %v449, %v450
        %v452 = vrot.slane %v451, 2
        %v453 = vmax.f32 %v451, %v452
        %v454 = vrot.slane %v453, 1
        %v455 = vmax.f32 %v453, %v454
        %v456 = vsel %vm399, %v275, -inf
        %v457 = vrot.slane %v456, 4
        %v458 = vmax.f32 %v456, %v457
        %v459 = vrot.slane %v458, 2
        %v460 = vmax.f32 %v458, %v459
        %v461 = vrot.slane %v460, 1
        %v462 = vmax.f32 %v460, %v461
        %v463 = vsel %vm399, %v339, -inf
        %v464 = vrot.slane %v463, 4
        %v465 = vmax.f32 %v463, %v464
        %v466 = vrot.slane %v465, 2
        %v467 = vmax.f32 %v465, %v466
        %v468 = vrot.slane %v467, 1
        %v469 = vmax.f32 %v467, %v468
        %v470 = vsel %vm399, %v276, -inf
        %v471 = vrot.slane %v470, 4
        %v472 = vmax.f32 %v470, %v471
        %v473 = vrot.slane %v472, 2
        %v474 = vmax.f32 %v472, %v473
        %v475 = vrot.slane %v474, 1
        %v476 = vmax.f32 %v474, %v475
        %v477 = vsel %vm399, %v340, -inf
        %v478 = vrot.slane %v477, 4
        %v479 = vmax.f32 %v477, %v478
        %v480 = vrot.slane %v479, 2
        %v481 = vmax.f32 %v479, %v480
        %v482 = vrot.slane %v481, 1
        %v483 = vmax.f32 %v481, %v482
        %v484 = vsel %vm399, %v277, -inf
        %v485 = vrot.slane %v484, 4
        %v486 = vmax.f32 %v484, %v485
        %v487 = vrot.slane %v486, 2
        %v488 = vmax.f32 %v486, %v487
        %v489 = vrot.slane %v488, 1
        %v490 = vmax.f32 %v488, %v489
        %v491 = vsel %vm399, %v341, -inf
        %v492 = vrot.slane %v491, 4
        %v493 = vmax.f32 %v491, %v492
        %v494 = vrot.slane %v493, 2
        %v495 = vmax.f32 %v493, %v494
        %v496 = vrot.slane %v495, 1
        %v497 = vmax.f32 %v495, %v496
        %v498 = vsel %vm399, %v278, -inf
        %v499 = vrot.slane %v498, 4
        %v500 = vmax.f32 %v498, %v499
        %v501 = vrot.slane %v500, 2
        %v502 = vmax.f32 %v500, %v501
        %v503 = vrot.slane %v502, 1
        %v504 = vmax.f32 %v502, %v503
        %v505 = vsel %vm399, %v342, -inf
        %v506 = vrot.slane %v505, 4
        %v507 = vmax.f32 %v505, %v506
        %v508 = vrot.slane %v507, 2
        %v509 = vmax.f32 %v507, %v508
        %v510 = vrot.slane %v509, 1
        %v511 = vmax.f32 %v509, %v510
        %v512 = vsel %vm399, %v279, -inf
        %v513 = vrot.slane %v512, 4
        %v514 = vmax.f32 %v512, %v513
        %v515 = vrot.slane %v514, 2
        %v516 = vmax.f32 %v514, %v515
        %v517 = vrot.slane %v516, 1
        %v518 = vmax.f32 %v516, %v517
        %v519 = vsel %vm399, %v343, -inf
        %v520 = vrot.slane %v519, 4
        %v521 = vmax.f32 %v519, %v520
        %v522 = vrot.slane %v521, 2
        %v523 = vmax.f32 %v521, %v522
        %v524 = vrot.slane %v523, 1
        %v525 = vmax.f32 %v523, %v524
        %v526 = vsel %vm399, %v280, -inf
        %v527 = vrot.slane %v526, 4
        %v528 = vmax.f32 %v526, %v527
        %v529 = vrot.slane %v528, 2
        %v530 = vmax.f32 %v528, %v529
        %v531 = vrot.slane %v530, 1
        %v532 = vmax.f32 %v530, %v531
        %v533 = vsel %vm399, %v344, -inf
        %v534 = vrot.slane %v533, 4
        %v535 = vmax.f32 %v533, %v534
        %v536 = vrot.slane %v535, 2
        %v537 = vmax.f32 %v535, %v536
        %v538 = vrot.slane %v537, 1
        %v539 = vmax.f32 %v537, %v538
        %v540 = vsel %vm399, %v281, -inf
        %v541 = vrot.slane %v540, 4
        %v542 = vmax.f32 %v540, %v541
        %v543 = vrot.slane %v542, 2
        %v544 = vmax.f32 %v542, %v543
        %v545 = vrot.slane %v544, 1
        %v546 = vmax.f32 %v544, %v545
        %v547 = vsel %vm399, %v345, -inf
        %v548 = vrot.slane %v547, 4
        %v549 = vmax.f32 %v547, %v548
        %v550 = vrot.slane %v549, 2
        %v551 = vmax.f32 %v549, %v550
        %v552 = vrot.slane %v551, 1
        %v553 = vmax.f32 %v551, %v552
        %v554 = vsel %vm399, %v282, -inf
        %v555 = vrot.slane %v554, 4
        %v556 = vmax.f32 %v554, %v555
        %v557 = vrot.slane %v556, 2
        %v558 = vmax.f32 %v556, %v557
        %v559 = vrot.slane %v558, 1
        %v560 = vmax.f32 %v558, %v559
        %v561 = vsel %vm399, %v346, -inf
        %v562 = vrot.slane %v561, 4
        %v563 = vmax.f32 %v561, %v562
        %v564 = vrot.slane %v563, 2
        %v565 = vmax.f32 %v563, %v564
        %v566 = vrot.slane %v565, 1
        %v567 = vmax.f32 %v565, %v566
        %v568 = vsel %vm399, %v283, -inf
        %v569 = vrot.slane %v568, 4
        %v570 = vmax.f32 %v568, %v569
        %v571 = vrot.slane %v570, 2
        %v572 = vmax.f32 %v570, %v571
        %v573 = vrot.slane %v572, 1
        %v574 = vmax.f32 %v572, %v573
        %v575 = vsel %vm399, %v347, -inf
        %v576 = vrot.slane %v575, 4
        %v577 = vmax.f32 %v575, %v576
        %v578 = vrot.slane %v577, 2
        %v579 = vmax.f32 %v577, %v578
        %v580 = vrot.slane %v579, 1
        %v581 = vmax.f32 %v579, %v580
        %v582 = vsel %vm399, %v284, -inf
        %v583 = vrot.slane %v582, 4
        %v584 = vmax.f32 %v582, %v583
        %v585 = vrot.slane %v584, 2
        %v586 = vmax.f32 %v584, %v585
        %v587 = vrot.slane %v586, 1
        %v588 = vmax.f32 %v586, %v587
        %v589 = vsel %vm399, %v348, -inf
        %v590 = vrot.slane %v589, 4
        %v591 = vmax.f32 %v589, %v590
        %v592 = vrot.slane %v591, 2
        %v593 = vmax.f32 %v591, %v592
        %v594 = vrot.slane %v593, 1
        %v595 = vmax.f32 %v593, %v594
        %v596 = vsel %vm399, %v285, -inf
        %v597 = vrot.slane %v596, 4
        %v598 = vmax.f32 %v596, %v597
        %v599 = vrot.slane %v598, 2
        %v600 = vmax.f32 %v598, %v599
        %v601 = vrot.slane %v600, 1
        %v602 = vmax.f32 %v600, %v601
        %v603 = vsel %vm399, %v349, -inf
        %v604 = vrot.slane %v603, 4
        %v605 = vmax.f32 %v603, %v604
        %v606 = vrot.slane %v605, 2
        %v607 = vmax.f32 %v605, %v606
        %v608 = vrot.slane %v607, 1
        %v609 = vmax.f32 %v607, %v608
        %v610 = vsel %vm399, %v286, -inf
        %v611 = vrot.slane %v610, 4
        %v612 = vmax.f32 %v610, %v611
        %v613 = vrot.slane %v612, 2
        %v614 = vmax.f32 %v612, %v613
        %v615 = vrot.slane %v614, 1
        %v616 = vmax.f32 %v614, %v615
        %v617 = vsel %vm399, %v350, -inf
        %v618 = vrot.slane %v617, 4
        %v619 = vmax.f32 %v617, %v618
        %v620 = vrot.slane %v619, 2
        %v621 = vmax.f32 %v619, %v620
        %v622 = vrot.slane %v621, 1
        %v623 = vmax.f32 %v621, %v622
        %v624 = vsel %vm399, %v287, -inf
        %v625 = vrot.slane %v624, 4
        %v626 = vmax.f32 %v624, %v625
        %v627 = vrot.slane %v626, 2
        %v628 = vmax.f32 %v626, %v627
        %v629 = vrot.slane %v628, 1
        %v630 = vmax.f32 %v628, %v629
        %v631 = vsel %vm399, %v351, -inf
        %v632 = vrot.slane %v631, 4
        %v633 = vmax.f32 %v631, %v632
        %v634 = vrot.slane %v633, 2
        %v635 = vmax.f32 %v633, %v634
        %v636 = vrot.slane %v635, 1
        %v637 = vmax.f32 %v635, %v636
        %v638 = vsel %vm399, %v288, -inf
        %v639 = vrot.slane %v638, 4
        %v640 = vmax.f32 %v638, %v639
        %v641 = vrot.slane %v640, 2
        %v642 = vmax.f32 %v640, %v641
        %v643 = vrot.slane %v642, 1
        %v644 = vmax.f32 %v642, %v643
        %v645 = vsel %vm399, %v352, -inf
        %v646 = vrot.slane %v645, 4
        %v647 = vmax.f32 %v645, %v646
        %v648 = vrot.slane %v647, 2
        %v649 = vmax.f32 %v647, %v648
        %v650 = vrot.slane %v649, 1
        %v651 = vmax.f32 %v649, %v650
        %v652 = vsel %vm399, %v289, -inf
        %v653 = vrot.slane %v652, 4
        %v654 = vmax.f32 %v652, %v653
        %v655 = vrot.slane %v654, 2
        %v656 = vmax.f32 %v654, %v655
        %v657 = vrot.slane %v656, 1
        %v658 = vmax.f32 %v656, %v657
        %v659 = vsel %vm399, %v353, -inf
        %v660 = vrot.slane %v659, 4
        %v661 = vmax.f32 %v659, %v660
        %v662 = vrot.slane %v661, 2
        %v663 = vmax.f32 %v661, %v662
        %v664 = vrot.slane %v663, 1
        %v665 = vmax.f32 %v663, %v664
        %v666 = vsel %vm399, %v290, -inf
        %v667 = vrot.slane %v666, 4
        %v668 = vmax.f32 %v666, %v667
        %v669 = vrot.slane %v668, 2
        %v670 = vmax.f32 %v668, %v669
        %v671 = vrot.slane %v670, 1
        %v672 = vmax.f32 %v670, %v671
        %v673 = vsel %vm399, %v354, -inf
        %v674 = vrot.slane %v673, 4
        %v675 = vmax.f32 %v673, %v674
        %v676 = vrot.slane %v675, 2
        %v677 = vmax.f32 %v675, %v676
        %v678 = vrot.slane %v677, 1
        %v679 = vmax.f32 %v677, %v678
        %v680 = vsel %vm399, %v291, -inf
        %v681 = vrot.slane %v680, 4
        %v682 = vmax.f32 %v680, %v681
        %v683 = vrot.slane %v682, 2
        %v684 = vmax.f32 %v682, %v683
        %v685 = vrot.slane %v684, 1
        %v686 = vmax.f32 %v684, %v685
        %v687 = vsel %vm399, %v355, -inf
        %v688 = vrot.slane %v687, 4
        %v689 = vmax.f32 %v687, %v688
        %v690 = vrot.slane %v689, 2
        %v691 = vmax.f32 %v689, %v690
        %v692 = vrot.slane %v691, 1
        %v693 = vmax.f32 %v691, %v692
        %v694 = vsel %vm399, %v292, -inf
        %v695 = vrot.slane %v694, 4
        %v696 = vmax.f32 %v694, %v695
        %v697 = vrot.slane %v696, 2
        %v698 = vmax.f32 %v696, %v697
        %v699 = vrot.slane %v698, 1
        %v700 = vmax.f32 %v698, %v699
        %v701 = vsel %vm399, %v356, -inf
        %v702 = vrot.slane %v701, 4
        %v703 = vmax.f32 %v701, %v702
        %v704 = vrot.slane %v703, 2
        %v705 = vmax.f32 %v703, %v704
        %v706 = vrot.slane %v705, 1
        %v707 = vmax.f32 %v705, %v706
        %v708 = vsel %vm399, %v293, -inf
        %v709 = vrot.slane %v708, 4
        %v710 = vmax.f32 %v708, %v709
        %v711 = vrot.slane %v710, 2
        %v712 = vmax.f32 %v710, %v711
        %v713 = vrot.slane %v712, 1
        %v714 = vmax.f32 %v712, %v713
        %v715 = vsel %vm399, %v357, -inf
        %v716 = vrot.slane %v715, 4
        %v717 = vmax.f32 %v715, %v716
        %v718 = vrot.slane %v717, 2
        %v719 = vmax.f32 %v717, %v718
        %v720 = vrot.slane %v719, 1
        %v721 = vmax.f32 %v719, %v720
        %v722 = vsel %vm399, %v294, -inf
        %v723 = vrot.slane %v722, 4
        %v724 = vmax.f32 %v722, %v723
        %v725 = vrot.slane %v724, 2
        %v726 = vmax.f32 %v724, %v725
        %v727 = vrot.slane %v726, 1
        %v728 = vmax.f32 %v726, %v727
        %v729 = vsel %vm399, %v358, -inf
        %v730 = vrot.slane %v729, 4
        %v731 = vmax.f32 %v729, %v730
        %v732 = vrot.slane %v731, 2
        %v733 = vmax.f32 %v731, %v732
        %v734 = vrot.slane %v733, 1
        %v735 = vmax.f32 %v733, %v734
        %v736 = vsel %vm399, %v295, -inf
        %v737 = vrot.slane %v736, 4
        %v738 = vmax.f32 %v736, %v737
        %v739 = vrot.slane %v738, 2
        %v740 = vmax.f32 %v738, %v739
        %v741 = vrot.slane %v740, 1
        %v742 = vmax.f32 %v740, %v741
        %v743 = vsel %vm399, %v359, -inf
        %v744 = vrot.slane %v743, 4
        %v745 = vmax.f32 %v743, %v744
        %v746 = vrot.slane %v745, 2
        %v747 = vmax.f32 %v745, %v746
        %v748 = vrot.slane %v747, 1
        %v749 = vmax.f32 %v747, %v748
        %v750 = vsel %vm399, %v296, -inf
        %v751 = vrot.slane %v750, 4
        %v752 = vmax.f32 %v750, %v751
        %v753 = vrot.slane %v752, 2
        %v754 = vmax.f32 %v752, %v753
        %v755 = vrot.slane %v754, 1
        %v756 = vmax.f32 %v754, %v755
        %v757 = vsel %vm399, %v360, -inf
        %v758 = vrot.slane %v757, 4
        %v759 = vmax.f32 %v757, %v758
        %v760 = vrot.slane %v759, 2
        %v761 = vmax.f32 %v759, %v760
        %v762 = vrot.slane %v761, 1
        %v763 = vmax.f32 %v761, %v762
        %v764 = vsel %vm399, %v297, -inf
        %v765 = vrot.slane %v764, 4
        %v766 = vmax.f32 %v764, %v765
        %v767 = vrot.slane %v766, 2
        %v768 = vmax.f32 %v766, %v767
        %v769 = vrot.slane %v768, 1
        %v770 = vmax.f32 %v768, %v769
        %v771 = vsel %vm399, %v361, -inf
        %v772 = vrot.slane %v771, 4
        %v773 = vmax.f32 %v771, %v772
        %v774 = vrot.slane %v773, 2
        %v775 = vmax.f32 %v773, %v774
        %v776 = vrot.slane %v775, 1
        %v777 = vmax.f32 %v775, %v776
        %v778 = vsel %vm399, %v298, -inf
        %v779 = vrot.slane %v778, 4
        %v780 = vmax.f32 %v778, %v779
        %v781 = vrot.slane %v780, 2
        %v782 = vmax.f32 %v780, %v781
        %v783 = vrot.slane %v782, 1
        %v784 = vmax.f32 %v782, %v783
        %v785 = vsel %vm399, %v362, -inf
        %v786 = vrot.slane %v785, 4
        %v787 = vmax.f32 %v785, %v786
        %v788 = vrot.slane %v787, 2
        %v789 = vmax.f32 %v787, %v788
        %v790 = vrot.slane %v789, 1
        %v791 = vmax.f32 %v789, %v790
        %v792 = vsel %vm399, %v299, -inf
        %v793 = vrot.slane %v792, 4
        %v794 = vmax.f32 %v792, %v793
        %v795 = vrot.slane %v794, 2
        %v796 = vmax.f32 %v794, %v795
        %v797 = vrot.slane %v796, 1
        %v798 = vmax.f32 %v796, %v797
        %v799 = vsel %vm399, %v363, -inf
        %v800 = vrot.slane %v799, 4
        %v801 = vmax.f32 %v799, %v800
        %v802 = vrot.slane %v801, 2
        %v803 = vmax.f32 %v801, %v802
        %v804 = vrot.slane %v803, 1
        %v805 = vmax.f32 %v803, %v804
        %v806 = vsel %vm399, %v300, -inf
        %v807 = vrot.slane %v806, 4
        %v808 = vmax.f32 %v806, %v807
        %v809 = vrot.slane %v808, 2
        %v810 = vmax.f32 %v808, %v809
        %v811 = vrot.slane %v810, 1
        %v812 = vmax.f32 %v810, %v811
        %v813 = vsel %vm399, %v364, -inf
        %v814 = vrot.slane %v813, 4
        %v815 = vmax.f32 %v813, %v814
        %v816 = vrot.slane %v815, 2
        %v817 = vmax.f32 %v815, %v816
        %v818 = vrot.slane %v817, 1
        %v819 = vmax.f32 %v817, %v818
        %v820 = vsel %vm399, %v301, -inf
        %v821 = vrot.slane %v820, 4
        %v822 = vmax.f32 %v820, %v821
        %v823 = vrot.slane %v822, 2
        %v824 = vmax.f32 %v822, %v823
        %v825 = vrot.slane %v824, 1
        %v826 = vmax.f32 %v824, %v825
        %v827 = vsel %vm399, %v365, -inf
        %v828 = vrot.slane %v827, 4
        %v829 = vmax.f32 %v827, %v828
        %v830 = vrot.slane %v829, 2
        %v831 = vmax.f32 %v829, %v830
        %v832 = vrot.slane %v831, 1
        %v833 = vmax.f32 %v831, %v832
        %v834 = vsel %vm399, %v302, -inf
        %v835 = vrot.slane %v834, 4
        %v836 = vmax.f32 %v834, %v835
        %v837 = vrot.slane %v836, 2
        %v838 = vmax.f32 %v836, %v837
        %v839 = vrot.slane %v838, 1
        %v840 = vmax.f32 %v838, %v839
        %v841 = vsel %vm399, %v366, -inf
        %v842 = vrot.slane %v841, 4
        %v843 = vmax.f32 %v841, %v842
        %v844 = vrot.slane %v843, 2
        %v845 = vmax.f32 %v843, %v844
        %v846 = vrot.slane %v845, 1
        %v847 = vmax.f32 %v845, %v846
        %v848 = vlaneseq
        %v849 = vshrl.u32 %v848, 7
        %v914 = vcombine.low %v406, %v413
        %v915 = vcombine.low %v420, %v427
        %v916 = vcombine.low %v434, %v441
        %v917 = vcombine.low %v448, %v455
        %v918 = vcombine.low %v462, %v469
        %v919 = vcombine.low %v476, %v483
        %v920 = vcombine.low %v490, %v497
        %v921 = vcombine.low %v504, %v511
        %v922 = vcombine.low %v518, %v525
        %v923 = vcombine.low %v532, %v539
        %v924 = vcombine.low %v546, %v553
        %v925 = vcombine.low %v560, %v567
        %v926 = vcombine.low %v574, %v581
        %v927 = vcombine.low %v588, %v595
        %v928 = vcombine.low %v602, %v609
        %v929 = vcombine.low %v616, %v623
        %v930 = vcombine.low %v630, %v637
        %v931 = vcombine.low %v644, %v651
        %v932 = vcombine.low %v658, %v665
        %v933 = vcombine.low %v672, %v679
        %v934 = vcombine.low %v686, %v693
        %v935 = vcombine.low %v700, %v707
        %v936 = vcombine.low %v714, %v721
        %v937 = vcombine.low %v728, %v735
        %v938 = vcombine.low %v742, %v749
        %v939 = vcombine.low %v756, %v763
        %v940 = vcombine.low %v770, %v777
        %v941 = vcombine.low %v784, %v791
        %v942 = vcombine.low %v798, %v805
        %v943 = vcombine.low %v812, %v819
        %v944 = vcombine.low %v826, %v833
        %v945 = vcombine.low %v840, %v847
        %vm978 = vcmp.eq.f32.partialorder %v271, %v914
        %vm979 = vcmp.eq.f32.partialorder %v272, %v915
        %vm980 = vcmp.eq.f32.partialorder %v273, %v916
        %vm981 = vcmp.eq.f32.partialorder %v274, %v917
        %vm982 = vcmp.eq.f32.partialorder %v275, %v918
        %vm983 = vcmp.eq.f32.partialorder %v276, %v919
        %vm984 = vcmp.eq.f32.partialorder %v277, %v920
        %vm985 = vcmp.eq.f32.partialorder %v278, %v921
        %vm986 = vcmp.eq.f32.partialorder %v279, %v922
        %vm987 = vcmp.eq.f32.partialorder %v280, %v923
        %vm988 = vcmp.eq.f32.partialorder %v281, %v924
        %vm989 = vcmp.eq.f32.partialorder %v282, %v925
        %vm990 = vcmp.eq.f32.partialorder %v283, %v926
        %vm991 = vcmp.eq.f32.partialorder %v284, %v927
        %vm992 = vcmp.eq.f32.partialorder %v285, %v928
        %vm993 = vcmp.eq.f32.partialorder %v286, %v929
        %vm994 = vcmp.eq.f32.partialorder %v287, %v930
        %vm995 = vcmp.eq.f32.partialorder %v288, %v931
        %vm996 = vcmp.eq.f32.partialorder %v289, %v932
        %vm997 = vcmp.eq.f32.partialorder %v290, %v933
        %vm998 = vcmp.eq.f32.partialorder %v291, %v934
        %vm999 = vcmp.eq.f32.partialorder %v292, %v935
        %vm1000 = vcmp.eq.f32.partialorder %v293, %v936
        %vm1001 = vcmp.eq.f32.partialorder %v294, %v937
        %vm1002 = vcmp.eq.f32.partialorder %v295, %v938
        %vm1003 = vcmp.eq.f32.partialorder %v296, %v939
        %vm1004 = vcmp.eq.f32.partialorder %v297, %v940
        %vm1005 = vcmp.eq.f32.partialorder %v298, %v941
        %vm1006 = vcmp.eq.f32.partialorder %v299, %v942
        %vm1007 = vcmp.eq.f32.partialorder %v300, %v943
        %vm1008 = vcmp.eq.f32.partialorder %v301, %v944
        %vm1009 = vcmp.eq.f32.partialorder %v302, %v945
        %v1011 = vunpack.c.l.s4 839922192
        %v1012 = vunpack.c.0.s8 %v1011
        %v1013 = vlaneseq
        %v1014 = vshrl.u32 %v1013, 7
        %v1015 = vsub.s32 %v1012, %v1014
        %v1016 = vrot.slane %v849, %v1015
        %v1017 = vsel %vm978, %v1016, 4
        %v1018 = vsel %vm979, %v1016, 4
        %v1019 = vsel %vm980, %v1016, 4
        %v1020 = vsel %vm981, %v1016, 4
        %v1021 = vsel %vm982, %v1016, 4
        %v1022 = vsel %vm983, %v1016, 4
        %v1023 = vsel %vm984, %v1016, 4
        %v1024 = vsel %vm985, %v1016, 4
        %v1025 = vsel %vm986, %v1016, 4
        %v1026 = vsel %vm987, %v1016, 4
        %v1027 = vsel %vm988, %v1016, 4
        %v1028 = vsel %vm989, %v1016, 4
        %v1029 = vsel %vm990, %v1016, 4
        %v1030 = vsel %vm991, %v1016, 4
        %v1031 = vsel %vm992, %v1016, 4
        %v1032 = vsel %vm993, %v1016, 4
        %v1033 = vsel %vm994, %v1016, 4
        %v1034 = vsel %vm995, %v1016, 4
        %v1035 = vsel %vm996, %v1016, 4
        %v1036 = vsel %vm997, %v1016, 4
        %v1037 = vsel %vm998, %v1016, 4
        %v1038 = vsel %vm999, %v1016, 4
        %v1039 = vsel %vm1000, %v1016, 4
        %v1040 = vsel %vm1001, %v1016, 4
        %v1041 = vsel %vm1002, %v1016, 4
        %v1042 = vsel %vm1003, %v1016, 4
        %v1043 = vsel %vm1004, %v1016, 4
        %v1044 = vsel %vm1005, %v1016, 4
        %v1045 = vsel %vm1006, %v1016, 4
        %v1046 = vsel %vm1007, %v1016, 4
        %v1047 = vsel %vm1008, %v1016, 4
        %v1048 = vsel %vm1009, %v1016, 4
        %v1049 = vcombine.high %v1017, %v1017
        %v1050 = vcombine.high %v1018, %v1018
        %v1051 = vcombine.high %v1019, %v1019
        %v1052 = vcombine.high %v1020, %v1020
        %v1053 = vcombine.high %v1021, %v1021
        %v1054 = vcombine.high %v1022, %v1022
        %v1055 = vcombine.high %v1023, %v1023
        %v1056 = vcombine.high %v1024, %v1024
        %v1057 = vcombine.high %v1025, %v1025
        %v1058 = vcombine.high %v1026, %v1026
        %v1059 = vcombine.high %v1027, %v1027
        %v1060 = vcombine.high %v1028, %v1028
        %v1061 = vcombine.high %v1029, %v1029
        %v1062 = vcombine.high %v1030, %v1030
        %v1063 = vcombine.high %v1031, %v1031
        %v1064 = vcombine.high %v1032, %v1032
        %v1065 = vcombine.high %v1033, %v1033
        %v1066 = vcombine.high %v1034, %v1034
        %v1067 = vcombine.high %v1035, %v1035
        %v1068 = vcombine.high %v1036, %v1036
        %v1069 = vcombine.high %v1037, %v1037
        %v1070 = vcombine.high %v1038, %v1038
        %v1071 = vcombine.high %v1039, %v1039
        %v1072 = vcombine.high %v1040, %v1040
        %v1073 = vcombine.high %v1041, %v1041
        %v1074 = vcombine.high %v1042, %v1042
        %v1075 = vcombine.high %v1043, %v1043
        %v1076 = vcombine.high %v1044, %v1044
        %v1077 = vcombine.high %v1045, %v1045
        %v1078 = vcombine.high %v1046, %v1046
        %v1079 = vcombine.high %v1047, %v1047
        %v1080 = vcombine.high %v1048, %v1048
        %v1081 = vsel %vm399, %v1017, 2147483647
        %v1082 = vrot.slane %v1081, 4
        %vm1083 = vcmp.lt.s32.totalorder %v1081, %v1082
        %v1084 = vsel %vm1083, %v1081, %v1082
        %v1085 = vrot.slane %v1084, 2
        %vm1086 = vcmp.lt.s32.totalorder %v1084, %v1085
        %v1087 = vsel %vm1086, %v1084, %v1085
        %v1088 = vrot.slane %v1087, 1
        %vm1089 = vcmp.lt.s32.totalorder %v1087, %v1088
        %v1090 = vsel %vm1089, %v1087, %v1088
        %v1091 = vsel %vm399, %v1049, 2147483647
        %v1092 = vrot.slane %v1091, 4
        %vm1093 = vcmp.lt.s32.totalorder %v1091, %v1092
        %v1094 = vsel %vm1093, %v1091, %v1092
        %v1095 = vrot.slane %v1094, 2
        %vm1096 = vcmp.lt.s32.totalorder %v1094, %v1095
        %v1097 = vsel %vm1096, %v1094, %v1095
        %v1098 = vrot.slane %v1097, 1
        %vm1099 = vcmp.lt.s32.totalorder %v1097, %v1098
        %v1100 = vsel %vm1099, %v1097, %v1098
        %v1101 = vsel %vm399, %v1018, 2147483647
        %v1102 = vrot.slane %v1101, 4
        %vm1103 = vcmp.lt.s32.totalorder %v1101, %v1102
        %v1104 = vsel %vm1103, %v1101, %v1102
        %v1105 = vrot.slane %v1104, 2
        %vm1106 = vcmp.lt.s32.totalorder %v1104, %v1105
        %v1107 = vsel %vm1106, %v1104, %v1105
        %v1108 = vrot.slane %v1107, 1
        %vm1109 = vcmp.lt.s32.totalorder %v1107, %v1108
        %v1110 = vsel %vm1109, %v1107, %v1108
        %v1111 = vsel %vm399, %v1050, 2147483647
        %v1112 = vrot.slane %v1111, 4
        %vm1113 = vcmp.lt.s32.totalorder %v1111, %v1112
        %v1114 = vsel %vm1113, %v1111, %v1112
        %v1115 = vrot.slane %v1114, 2
        %vm1116 = vcmp.lt.s32.totalorder %v1114, %v1115
        %v1117 = vsel %vm1116, %v1114, %v1115
        %v1118 = vrot.slane %v1117, 1
        %vm1119 = vcmp.lt.s32.totalorder %v1117, %v1118
        %v1120 = vsel %vm1119, %v1117, %v1118
        %v1121 = vsel %vm399, %v1019, 2147483647
        %v1122 = vrot.slane %v1121, 4
        %vm1123 = vcmp.lt.s32.totalorder %v1121, %v1122
        %v1124 = vsel %vm1123, %v1121, %v1122
        %v1125 = vrot.slane %v1124, 2
        %vm1126 = vcmp.lt.s32.totalorder %v1124, %v1125
        %v1127 = vsel %vm1126, %v1124, %v1125
        %v1128 = vrot.slane %v1127, 1
        %vm1129 = vcmp.lt.s32.totalorder %v1127, %v1128
        %v1130 = vsel %vm1129, %v1127, %v1128
        %v1131 = vsel %vm399, %v1051, 2147483647
        %v1132 = vrot.slane %v1131, 4
        %vm1133 = vcmp.lt.s32.totalorder %v1131, %v1132
        %v1134 = vsel %vm1133, %v1131, %v1132
        %v1135 = vrot.slane %v1134, 2
        %vm1136 = vcmp.lt.s32.totalorder %v1134, %v1135
        %v1137 = vsel %vm1136, %v1134, %v1135
        %v1138 = vrot.slane %v1137, 1
        %vm1139 = vcmp.lt.s32.totalorder %v1137, %v1138
        %v1140 = vsel %vm1139, %v1137, %v1138
        %v1141 = vsel %vm399, %v1020, 2147483647
        %v1142 = vrot.slane %v1141, 4
        %vm1143 = vcmp.lt.s32.totalorder %v1141, %v1142
        %v1144 = vsel %vm1143, %v1141, %v1142
        %v1145 = vrot.slane %v1144, 2
        %vm1146 = vcmp.lt.s32.totalorder %v1144, %v1145
        %v1147 = vsel %vm1146, %v1144, %v1145
        %v1148 = vrot.slane %v1147, 1
        %vm1149 = vcmp.lt.s32.totalorder %v1147, %v1148
        %v1150 = vsel %vm1149, %v1147, %v1148
        %v1151 = vsel %vm399, %v1052, 2147483647
        %v1152 = vrot.slane %v1151, 4
        %vm1153 = vcmp.lt.s32.totalorder %v1151, %v1152
        %v1154 = vsel %vm1153, %v1151, %v1152
        %v1155 = vrot.slane %v1154, 2
        %vm1156 = vcmp.lt.s32.totalorder %v1154, %v1155
        %v1157 = vsel %vm1156, %v1154, %v1155
        %v1158 = vrot.slane %v1157, 1
        %vm1159 = vcmp.lt.s32.totalorder %v1157, %v1158
        %v1160 = vsel %vm1159, %v1157, %v1158
        %v1161 = vsel %vm399, %v1021, 2147483647
        %v1162 = vrot.slane %v1161, 4
        %vm1163 = vcmp.lt.s32.totalorder %v1161, %v1162
        %v1164 = vsel %vm1163, %v1161, %v1162
        %v1165 = vrot.slane %v1164, 2
        %vm1166 = vcmp.lt.s32.totalorder %v1164, %v1165
        %v1167 = vsel %vm1166, %v1164, %v1165
        %v1168 = vrot.slane %v1167, 1
        %vm1169 = vcmp.lt.s32.totalorder %v1167, %v1168
        %v1170 = vsel %vm1169, %v1167, %v1168
        %v1171 = vsel %vm399, %v1053, 2147483647
        %v1172 = vrot.slane %v1171, 4
        %vm1173 = vcmp.lt.s32.totalorder %v1171, %v1172
        %v1174 = vsel %vm1173, %v1171, %v1172
        %v1175 = vrot.slane %v1174, 2
        %vm1176 = vcmp.lt.s32.totalorder %v1174, %v1175
        %v1177 = vsel %vm1176, %v1174, %v1175
        %v1178 = vrot.slane %v1177, 1
        %vm1179 = vcmp.lt.s32.totalorder %v1177, %v1178
        %v1180 = vsel %vm1179, %v1177, %v1178
        %v1181 = vsel %vm399, %v1022, 2147483647
        %v1182 = vrot.slane %v1181, 4
        %vm1183 = vcmp.lt.s32.totalorder %v1181, %v1182
        %v1184 = vsel %vm1183, %v1181, %v1182
        %v1185 = vrot.slane %v1184, 2
        %vm1186 = vcmp.lt.s32.totalorder %v1184, %v1185
        %v1187 = vsel %vm1186, %v1184, %v1185
        %v1188 = vrot.slane %v1187, 1
        %vm1189 = vcmp.lt.s32.totalorder %v1187, %v1188
        %v1190 = vsel %vm1189, %v1187, %v1188
        %v1191 = vsel %vm399, %v1054, 2147483647
        %v1192 = vrot.slane %v1191, 4
        %vm1193 = vcmp.lt.s32.totalorder %v1191, %v1192
        %v1194 = vsel %vm1193, %v1191, %v1192
        %v1195 = vrot.slane %v1194, 2
        %vm1196 = vcmp.lt.s32.totalorder %v1194, %v1195
        %v1197 = vsel %vm1196, %v1194, %v1195
        %v1198 = vrot.slane %v1197, 1
        %vm1199 = vcmp.lt.s32.totalorder %v1197, %v1198
        %v1200 = vsel %vm1199, %v1197, %v1198
        %v1201 = vsel %vm399, %v1023, 2147483647
        %v1202 = vrot.slane %v1201, 4
        %vm1203 = vcmp.lt.s32.totalorder %v1201, %v1202
        %v1204 = vsel %vm1203, %v1201, %v1202
        %v1205 = vrot.slane %v1204, 2
        %vm1206 = vcmp.lt.s32.totalorder %v1204, %v1205
        %v1207 = vsel %vm1206, %v1204, %v1205
        %v1208 = vrot.slane %v1207, 1
        %vm1209 = vcmp.lt.s32.totalorder %v1207, %v1208
        %v1210 = vsel %vm1209, %v1207, %v1208
        %v1211 = vsel %vm399, %v1055, 2147483647
        %v1212 = vrot.slane %v1211, 4
        %vm1213 = vcmp.lt.s32.totalorder %v1211, %v1212
        %v1214 = vsel %vm1213, %v1211, %v1212
        %v1215 = vrot.slane %v1214, 2
        %vm1216 = vcmp.lt.s32.totalorder %v1214, %v1215
        %v1217 = vsel %vm1216, %v1214, %v1215
        %v1218 = vrot.slane %v1217, 1
        %vm1219 = vcmp.lt.s32.totalorder %v1217, %v1218
        %v1220 = vsel %vm1219, %v1217, %v1218
        %v1221 = vsel %vm399, %v1024, 2147483647
        %v1222 = vrot.slane %v1221, 4
        %vm1223 = vcmp.lt.s32.totalorder %v1221, %v1222
        %v1224 = vsel %vm1223, %v1221, %v1222
        %v1225 = vrot.slane %v1224, 2
        %vm1226 = vcmp.lt.s32.totalorder %v1224, %v1225
        %v1227 = vsel %vm1226, %v1224, %v1225
        %v1228 = vrot.slane %v1227, 1
        %vm1229 = vcmp.lt.s32.totalorder %v1227, %v1228
        %v1230 = vsel %vm1229, %v1227, %v1228
        %v1231 = vsel %vm399, %v1056, 2147483647
        %v1232 = vrot.slane %v1231, 4
        %vm1233 = vcmp.lt.s32.totalorder %v1231, %v1232
        %v1234 = vsel %vm1233, %v1231, %v1232
        %v1235 = vrot.slane %v1234, 2
        %vm1236 = vcmp.lt.s32.totalorder %v1234, %v1235
        %v1237 = vsel %vm1236, %v1234, %v1235
        %v1238 = vrot.slane %v1237, 1
        %vm1239 = vcmp.lt.s32.totalorder %v1237, %v1238
        %v1240 = vsel %vm1239, %v1237, %v1238
        %v1241 = vsel %vm399, %v1025, 2147483647
        %v1242 = vrot.slane %v1241, 4
        %vm1243 = vcmp.lt.s32.totalorder %v1241, %v1242
        %v1244 = vsel %vm1243, %v1241, %v1242
        %v1245 = vrot.slane %v1244, 2
        %vm1246 = vcmp.lt.s32.totalorder %v1244, %v1245
        %v1247 = vsel %vm1246, %v1244, %v1245
        %v1248 = vrot.slane %v1247, 1
        %vm1249 = vcmp.lt.s32.totalorder %v1247, %v1248
        %v1250 = vsel %vm1249, %v1247, %v1248
        %v1251 = vsel %vm399, %v1057, 2147483647
        %v1252 = vrot.slane %v1251, 4
        %vm1253 = vcmp.lt.s32.totalorder %v1251, %v1252
        %v1254 = vsel %vm1253, %v1251, %v1252
        %v1255 = vrot.slane %v1254, 2
        %vm1256 = vcmp.lt.s32.totalorder %v1254, %v1255
        %v1257 = vsel %vm1256, %v1254, %v1255
        %v1258 = vrot.slane %v1257, 1
        %vm1259 = vcmp.lt.s32.totalorder %v1257, %v1258
        %v1260 = vsel %vm1259, %v1257, %v1258
        %v1261 = vsel %vm399, %v1026, 2147483647
        %v1262 = vrot.slane %v1261, 4
        %vm1263 = vcmp.lt.s32.totalorder %v1261, %v1262
        %v1264 = vsel %vm1263, %v1261, %v1262
        %v1265 = vrot.slane %v1264, 2
        %vm1266 = vcmp.lt.s32.totalorder %v1264, %v1265
        %v1267 = vsel %vm1266, %v1264, %v1265
        %v1268 = vrot.slane %v1267, 1
        %vm1269 = vcmp.lt.s32.totalorder %v1267, %v1268
        %v1270 = vsel %vm1269, %v1267, %v1268
        %v1271 = vsel %vm399, %v1058, 2147483647
        %v1272 = vrot.slane %v1271, 4
        %vm1273 = vcmp.lt.s32.totalorder %v1271, %v1272
        %v1274 = vsel %vm1273, %v1271, %v1272
        %v1275 = vrot.slane %v1274, 2
        %vm1276 = vcmp.lt.s32.totalorder %v1274, %v1275
        %v1277 = vsel %vm1276, %v1274, %v1275
        %v1278 = vrot.slane %v1277, 1
        %vm1279 = vcmp.lt.s32.totalorder %v1277, %v1278
        %v1280 = vsel %vm1279, %v1277, %v1278
        %v1281 = vsel %vm399, %v1027, 2147483647
        %v1282 = vrot.slane %v1281, 4
        %vm1283 = vcmp.lt.s32.totalorder %v1281, %v1282
        %v1284 = vsel %vm1283, %v1281, %v1282
        %v1285 = vrot.slane %v1284, 2
        %vm1286 = vcmp.lt.s32.totalorder %v1284, %v1285
        %v1287 = vsel %vm1286, %v1284, %v1285
        %v1288 = vrot.slane %v1287, 1
        %vm1289 = vcmp.lt.s32.totalorder %v1287, %v1288
        %v1290 = vsel %vm1289, %v1287, %v1288
        %v1291 = vsel %vm399, %v1059, 2147483647
        %v1292 = vrot.slane %v1291, 4
        %vm1293 = vcmp.lt.s32.totalorder %v1291, %v1292
        %v1294 = vsel %vm1293, %v1291, %v1292
        %v1295 = vrot.slane %v1294, 2
        %vm1296 = vcmp.lt.s32.totalorder %v1294, %v1295
        %v1297 = vsel %vm1296, %v1294, %v1295
        %v1298 = vrot.slane %v1297, 1
        %vm1299 = vcmp.lt.s32.totalorder %v1297, %v1298
        %v1300 = vsel %vm1299, %v1297, %v1298
        %v1301 = vsel %vm399, %v1028, 2147483647
        %v1302 = vrot.slane %v1301, 4
        %vm1303 = vcmp.lt.s32.totalorder %v1301, %v1302
        %v1304 = vsel %vm1303, %v1301, %v1302
        %v1305 = vrot.slane %v1304, 2
        %vm1306 = vcmp.lt.s32.totalorder %v1304, %v1305
        %v1307 = vsel %vm1306, %v1304, %v1305
        %v1308 = vrot.slane %v1307, 1
        %vm1309 = vcmp.lt.s32.totalorder %v1307, %v1308
        %v1310 = vsel %vm1309, %v1307, %v1308
        %v1311 = vsel %vm399, %v1060, 2147483647
        %v1312 = vrot.slane %v1311, 4
        %vm1313 = vcmp.lt.s32.totalorder %v1311, %v1312
        %v1314 = vsel %vm1313, %v1311, %v1312
        %v1315 = vrot.slane %v1314, 2
        %vm1316 = vcmp.lt.s32.totalorder %v1314, %v1315
        %v1317 = vsel %vm1316, %v1314, %v1315
        %v1318 = vrot.slane %v1317, 1
        %vm1319 = vcmp.lt.s32.totalorder %v1317, %v1318
        %v1320 = vsel %vm1319, %v1317, %v1318
        %v1321 = vsel %vm399, %v1029, 2147483647
        %v1322 = vrot.slane %v1321, 4
        %vm1323 = vcmp.lt.s32.totalorder %v1321, %v1322
        %v1324 = vsel %vm1323, %v1321, %v1322
        %v1325 = vrot.slane %v1324, 2
        %vm1326 = vcmp.lt.s32.totalorder %v1324, %v1325
        %v1327 = vsel %vm1326, %v1324, %v1325
        %v1328 = vrot.slane %v1327, 1
        %vm1329 = vcmp.lt.s32.totalorder %v1327, %v1328
        %v1330 = vsel %vm1329, %v1327, %v1328
        %v1331 = vsel %vm399, %v1061, 2147483647
        %v1332 = vrot.slane %v1331, 4
        %vm1333 = vcmp.lt.s32.totalorder %v1331, %v1332
        %v1334 = vsel %vm1333, %v1331, %v1332
        %v1335 = vrot.slane %v1334, 2
        %vm1336 = vcmp.lt.s32.totalorder %v1334, %v1335
        %v1337 = vsel %vm1336, %v1334, %v1335
        %v1338 = vrot.slane %v1337, 1
        %vm1339 = vcmp.lt.s32.totalorder %v1337, %v1338
        %v1340 = vsel %vm1339, %v1337, %v1338
        %v1341 = vsel %vm399, %v1030, 2147483647
        %v1342 = vrot.slane %v1341, 4
        %vm1343 = vcmp.lt.s32.totalorder %v1341, %v1342
        %v1344 = vsel %vm1343, %v1341, %v1342
        %v1345 = vrot.slane %v1344, 2
        %vm1346 = vcmp.lt.s32.totalorder %v1344, %v1345
        %v1347 = vsel %vm1346, %v1344, %v1345
        %v1348 = vrot.slane %v1347, 1
        %vm1349 = vcmp.lt.s32.totalorder %v1347, %v1348
        %v1350 = vsel %vm1349, %v1347, %v1348
        %v1351 = vsel %vm399, %v1062, 2147483647
        %v1352 = vrot.slane %v1351, 4
        %vm1353 = vcmp.lt.s32.totalorder %v1351, %v1352
        %v1354 = vsel %vm1353, %v1351, %v1352
        %v1355 = vrot.slane %v1354, 2
        %vm1356 = vcmp.lt.s32.totalorder %v1354, %v1355
        %v1357 = vsel %vm1356, %v1354, %v1355
        %v1358 = vrot.slane %v1357, 1
        %vm1359 = vcmp.lt.s32.totalorder %v1357, %v1358
        %v1360 = vsel %vm1359, %v1357, %v1358
        %v1361 = vsel %vm399, %v1031, 2147483647
        %v1362 = vrot.slane %v1361, 4
        %vm1363 = vcmp.lt.s32.totalorder %v1361, %v1362
        %v1364 = vsel %vm1363, %v1361, %v1362
        %v1365 = vrot.slane %v1364, 2
        %vm1366 = vcmp.lt.s32.totalorder %v1364, %v1365
        %v1367 = vsel %vm1366, %v1364, %v1365
        %v1368 = vrot.slane %v1367, 1
        %vm1369 = vcmp.lt.s32.totalorder %v1367, %v1368
        %v1370 = vsel %vm1369, %v1367, %v1368
        %v1371 = vsel %vm399, %v1063, 2147483647
        %v1372 = vrot.slane %v1371, 4
        %vm1373 = vcmp.lt.s32.totalorder %v1371, %v1372
        %v1374 = vsel %vm1373, %v1371, %v1372
        %v1375 = vrot.slane %v1374, 2
        %vm1376 = vcmp.lt.s32.totalorder %v1374, %v1375
        %v1377 = vsel %vm1376, %v1374, %v1375
        %v1378 = vrot.slane %v1377, 1
        %vm1379 = vcmp.lt.s32.totalorder %v1377, %v1378
        %v1380 = vsel %vm1379, %v1377, %v1378
        %v1381 = vsel %vm399, %v1032, 2147483647
        %v1382 = vrot.slane %v1381, 4
        %vm1383 = vcmp.lt.s32.totalorder %v1381, %v1382
        %v1384 = vsel %vm1383, %v1381, %v1382
        %v1385 = vrot.slane %v1384, 2
        %vm1386 = vcmp.lt.s32.totalorder %v1384, %v1385
        %v1387 = vsel %vm1386, %v1384, %v1385
        %v1388 = vrot.slane %v1387, 1
        %vm1389 = vcmp.lt.s32.totalorder %v1387, %v1388
        %v1390 = vsel %vm1389, %v1387, %v1388
        %v1391 = vsel %vm399, %v1064, 2147483647
        %v1392 = vrot.slane %v1391, 4
        %vm1393 = vcmp.lt.s32.totalorder %v1391, %v1392
        %v1394 = vsel %vm1393, %v1391, %v1392
        %v1395 = vrot.slane %v1394, 2
        %vm1396 = vcmp.lt.s32.totalorder %v1394, %v1395
        %v1397 = vsel %vm1396, %v1394, %v1395
        %v1398 = vrot.slane %v1397, 1
        %vm1399 = vcmp.lt.s32.totalorder %v1397, %v1398
        %v1400 = vsel %vm1399, %v1397, %v1398
        %v1401 = vsel %vm399, %v1033, 2147483647
        %v1402 = vrot.slane %v1401, 4
        %vm1403 = vcmp.lt.s32.totalorder %v1401, %v1402
        %v1404 = vsel %vm1403, %v1401, %v1402
        %v1405 = vrot.slane %v1404, 2
        %vm1406 = vcmp.lt.s32.totalorder %v1404, %v1405
        %v1407 = vsel %vm1406, %v1404, %v1405
        %v1408 = vrot.slane %v1407, 1
        %vm1409 = vcmp.lt.s32.totalorder %v1407, %v1408
        %v1410 = vsel %vm1409, %v1407, %v1408
        %v1411 = vsel %vm399, %v1065, 2147483647
        %v1412 = vrot.slane %v1411, 4
        %vm1413 = vcmp.lt.s32.totalorder %v1411, %v1412
        %v1414 = vsel %vm1413, %v1411, %v1412
        %v1415 = vrot.slane %v1414, 2
        %vm1416 = vcmp.lt.s32.totalorder %v1414, %v1415
        %v1417 = vsel %vm1416, %v1414, %v1415
        %v1418 = vrot.slane %v1417, 1
        %vm1419 = vcmp.lt.s32.totalorder %v1417, %v1418
        %v1420 = vsel %vm1419, %v1417, %v1418
        %v1421 = vsel %vm399, %v1034, 2147483647
        %v1422 = vrot.slane %v1421, 4
        %vm1423 = vcmp.lt.s32.totalorder %v1421, %v1422
        %v1424 = vsel %vm1423, %v1421, %v1422
        %v1425 = vrot.slane %v1424, 2
        %vm1426 = vcmp.lt.s32.totalorder %v1424, %v1425
        %v1427 = vsel %vm1426, %v1424, %v1425
        %v1428 = vrot.slane %v1427, 1
        %vm1429 = vcmp.lt.s32.totalorder %v1427, %v1428
        %v1430 = vsel %vm1429, %v1427, %v1428
        %v1431 = vsel %vm399, %v1066, 2147483647
        %v1432 = vrot.slane %v1431, 4
        %vm1433 = vcmp.lt.s32.totalorder %v1431, %v1432
        %v1434 = vsel %vm1433, %v1431, %v1432
        %v1435 = vrot.slane %v1434, 2
        %vm1436 = vcmp.lt.s32.totalorder %v1434, %v1435
        %v1437 = vsel %vm1436, %v1434, %v1435
        %v1438 = vrot.slane %v1437, 1
        %vm1439 = vcmp.lt.s32.totalorder %v1437, %v1438
        %v1440 = vsel %vm1439, %v1437, %v1438
        %v1441 = vsel %vm399, %v1035, 2147483647
        %v1442 = vrot.slane %v1441, 4
        %vm1443 = vcmp.lt.s32.totalorder %v1441, %v1442
        %v1444 = vsel %vm1443, %v1441, %v1442
        %v1445 = vrot.slane %v1444, 2
        %vm1446 = vcmp.lt.s32.totalorder %v1444, %v1445
        %v1447 = vsel %vm1446, %v1444, %v1445
        %v1448 = vrot.slane %v1447, 1
        %vm1449 = vcmp.lt.s32.totalorder %v1447, %v1448
        %v1450 = vsel %vm1449, %v1447, %v1448
        %v1451 = vsel %vm399, %v1067, 2147483647
        %v1452 = vrot.slane %v1451, 4
        %vm1453 = vcmp.lt.s32.totalorder %v1451, %v1452
        %v1454 = vsel %vm1453, %v1451, %v1452
        %v1455 = vrot.slane %v1454, 2
        %vm1456 = vcmp.lt.s32.totalorder %v1454, %v1455
        %v1457 = vsel %vm1456, %v1454, %v1455
        %v1458 = vrot.slane %v1457, 1
        %vm1459 = vcmp.lt.s32.totalorder %v1457, %v1458
        %v1460 = vsel %vm1459, %v1457, %v1458
        %v1461 = vsel %vm399, %v1036, 2147483647
        %v1462 = vrot.slane %v1461, 4
        %vm1463 = vcmp.lt.s32.totalorder %v1461, %v1462
        %v1464 = vsel %vm1463, %v1461, %v1462
        %v1465 = vrot.slane %v1464, 2
        %vm1466 = vcmp.lt.s32.totalorder %v1464, %v1465
        %v1467 = vsel %vm1466, %v1464, %v1465
        %v1468 = vrot.slane %v1467, 1
        %vm1469 = vcmp.lt.s32.totalorder %v1467, %v1468
        %v1470 = vsel %vm1469, %v1467, %v1468
        %v1471 = vsel %vm399, %v1068, 2147483647
        %v1472 = vrot.slane %v1471, 4
        %vm1473 = vcmp.lt.s32.totalorder %v1471, %v1472
        %v1474 = vsel %vm1473, %v1471, %v1472
        %v1475 = vrot.slane %v1474, 2
        %vm1476 = vcmp.lt.s32.totalorder %v1474, %v1475
        %v1477 = vsel %vm1476, %v1474, %v1475
        %v1478 = vrot.slane %v1477, 1
        %vm1479 = vcmp.lt.s32.totalorder %v1477, %v1478
        %v1480 = vsel %vm1479, %v1477, %v1478
        %v1481 = vsel %vm399, %v1037, 2147483647
        %v1482 = vrot.slane %v1481, 4
        %vm1483 = vcmp.lt.s32.totalorder %v1481, %v1482
        %v1484 = vsel %vm1483, %v1481, %v1482
        %v1485 = vrot.slane %v1484, 2
        %vm1486 = vcmp.lt.s32.totalorder %v1484, %v1485
        %v1487 = vsel %vm1486, %v1484, %v1485
        %v1488 = vrot.slane %v1487, 1
        %vm1489 = vcmp.lt.s32.totalorder %v1487, %v1488
        %v1490 = vsel %vm1489, %v1487, %v1488
        %v1491 = vsel %vm399, %v1069, 2147483647
        %v1492 = vrot.slane %v1491, 4
        %vm1493 = vcmp.lt.s32.totalorder %v1491, %v1492
        %v1494 = vsel %vm1493, %v1491, %v1492
        %v1495 = vrot.slane %v1494, 2
        %vm1496 = vcmp.lt.s32.totalorder %v1494, %v1495
        %v1497 = vsel %vm1496, %v1494, %v1495
        %v1498 = vrot.slane %v1497, 1
        %vm1499 = vcmp.lt.s32.totalorder %v1497, %v1498
        %v1500 = vsel %vm1499, %v1497, %v1498
        %v1501 = vsel %vm399, %v1038, 2147483647
        %v1502 = vrot.slane %v1501, 4
        %vm1503 = vcmp.lt.s32.totalorder %v1501, %v1502
        %v1504 = vsel %vm1503, %v1501, %v1502
        %v1505 = vrot.slane %v1504, 2
        %vm1506 = vcmp.lt.s32.totalorder %v1504, %v1505
        %v1507 = vsel %vm1506, %v1504, %v1505
        %v1508 = vrot.slane %v1507, 1
        %vm1509 = vcmp.lt.s32.totalorder %v1507, %v1508
        %v1510 = vsel %vm1509, %v1507, %v1508
        %v1511 = vsel %vm399, %v1070, 2147483647
        %v1512 = vrot.slane %v1511, 4
        %vm1513 = vcmp.lt.s32.totalorder %v1511, %v1512
        %v1514 = vsel %vm1513, %v1511, %v1512
        %v1515 = vrot.slane %v1514, 2
        %vm1516 = vcmp.lt.s32.totalorder %v1514, %v1515
        %v1517 = vsel %vm1516, %v1514, %v1515
        %v1518 = vrot.slane %v1517, 1
        %vm1519 = vcmp.lt.s32.totalorder %v1517, %v1518
        %v1520 = vsel %vm1519, %v1517, %v1518
        %v1521 = vsel %vm399, %v1039, 2147483647
        %v1522 = vrot.slane %v1521, 4
        %vm1523 = vcmp.lt.s32.totalorder %v1521, %v1522
        %v1524 = vsel %vm1523, %v1521, %v1522
        %v1525 = vrot.slane %v1524, 2
        %vm1526 = vcmp.lt.s32.totalorder %v1524, %v1525
        %v1527 = vsel %vm1526, %v1524, %v1525
        %v1528 = vrot.slane %v1527, 1
        %vm1529 = vcmp.lt.s32.totalorder %v1527, %v1528
        %v1530 = vsel %vm1529, %v1527, %v1528
        %v1531 = vsel %vm399, %v1071, 2147483647
        %v1532 = vrot.slane %v1531, 4
        %vm1533 = vcmp.lt.s32.totalorder %v1531, %v1532
        %v1534 = vsel %vm1533, %v1531, %v1532
        %v1535 = vrot.slane %v1534, 2
        %vm1536 = vcmp.lt.s32.totalorder %v1534, %v1535
        %v1537 = vsel %vm1536, %v1534, %v1535
        %v1538 = vrot.slane %v1537, 1
        %vm1539 = vcmp.lt.s32.totalorder %v1537, %v1538
        %v1540 = vsel %vm1539, %v1537, %v1538
        %v1541 = vsel %vm399, %v1040, 2147483647
        %v1542 = vrot.slane %v1541, 4
        %vm1543 = vcmp.lt.s32.totalorder %v1541, %v1542
        %v1544 = vsel %vm1543, %v1541, %v1542
        %v1545 = vrot.slane %v1544, 2
        %vm1546 = vcmp.lt.s32.totalorder %v1544, %v1545
        %v1547 = vsel %vm1546, %v1544, %v1545
        %v1548 = vrot.slane %v1547, 1
        %vm1549 = vcmp.lt.s32.totalorder %v1547, %v1548
        %v1550 = vsel %vm1549, %v1547, %v1548
        %v1551 = vsel %vm399, %v1072, 2147483647
        %v1552 = vrot.slane %v1551, 4
        %vm1553 = vcmp.lt.s32.totalorder %v1551, %v1552
        %v1554 = vsel %vm1553, %v1551, %v1552
        %v1555 = vrot.slane %v1554, 2
        %vm1556 = vcmp.lt.s32.totalorder %v1554, %v1555
        %v1557 = vsel %vm1556, %v1554, %v1555
        %v1558 = vrot.slane %v1557, 1
        %vm1559 = vcmp.lt.s32.totalorder %v1557, %v1558
        %v1560 = vsel %vm1559, %v1557, %v1558
        %v1561 = vsel %vm399, %v1041, 2147483647
        %v1562 = vrot.slane %v1561, 4
        %vm1563 = vcmp.lt.s32.totalorder %v1561, %v1562
        %v1564 = vsel %vm1563, %v1561, %v1562
        %v1565 = vrot.slane %v1564, 2
        %vm1566 = vcmp.lt.s32.totalorder %v1564, %v1565
        %v1567 = vsel %vm1566, %v1564, %v1565
        %v1568 = vrot.slane %v1567, 1
        %vm1569 = vcmp.lt.s32.totalorder %v1567, %v1568
        %v1570 = vsel %vm1569, %v1567, %v1568
        %v1571 = vsel %vm399, %v1073, 2147483647
        %v1572 = vrot.slane %v1571, 4
        %vm1573 = vcmp.lt.s32.totalorder %v1571, %v1572
        %v1574 = vsel %vm1573, %v1571, %v1572
        %v1575 = vrot.slane %v1574, 2
        %vm1576 = vcmp.lt.s32.totalorder %v1574, %v1575
        %v1577 = vsel %vm1576, %v1574, %v1575
        %v1578 = vrot.slane %v1577, 1
        %vm1579 = vcmp.lt.s32.totalorder %v1577, %v1578
        %v1580 = vsel %vm1579, %v1577, %v1578
        %v1581 = vsel %vm399, %v1042, 2147483647
        %v1582 = vrot.slane %v1581, 4
        %vm1583 = vcmp.lt.s32.totalorder %v1581, %v1582
        %v1584 = vsel %vm1583, %v1581, %v1582
        %v1585 = vrot.slane %v1584, 2
        %vm1586 = vcmp.lt.s32.totalorder %v1584, %v1585
        %v1587 = vsel %vm1586, %v1584, %v1585
        %v1588 = vrot.slane %v1587, 1
        %vm1589 = vcmp.lt.s32.totalorder %v1587, %v1588
        %v1590 = vsel %vm1589, %v1587, %v1588
        %v1591 = vsel %vm399, %v1074, 2147483647
        %v1592 = vrot.slane %v1591, 4
        %vm1593 = vcmp.lt.s32.totalorder %v1591, %v1592
        %v1594 = vsel %vm1593, %v1591, %v1592
        %v1595 = vrot.slane %v1594, 2
        %vm1596 = vcmp.lt.s32.totalorder %v1594, %v1595
        %v1597 = vsel %vm1596, %v1594, %v1595
        %v1598 = vrot.slane %v1597, 1
        %vm1599 = vcmp.lt.s32.totalorder %v1597, %v1598
        %v1600 = vsel %vm1599, %v1597, %v1598
        %v1601 = vsel %vm399, %v1043, 2147483647
        %v1602 = vrot.slane %v1601, 4
        %vm1603 = vcmp.lt.s32.totalorder %v1601, %v1602
        %v1604 = vsel %vm1603, %v1601, %v1602
        %v1605 = vrot.slane %v1604, 2
        %vm1606 = vcmp.lt.s32.totalorder %v1604, %v1605
        %v1607 = vsel %vm1606, %v1604, %v1605
        %v1608 = vrot.slane %v1607, 1
        %vm1609 = vcmp.lt.s32.totalorder %v1607, %v1608
        %v1610 = vsel %vm1609, %v1607, %v1608
        %v1611 = vsel %vm399, %v1075, 2147483647
        %v1612 = vrot.slane %v1611, 4
        %vm1613 = vcmp.lt.s32.totalorder %v1611, %v1612
        %v1614 = vsel %vm1613, %v1611, %v1612
        %v1615 = vrot.slane %v1614, 2
        %vm1616 = vcmp.lt.s32.totalorder %v1614, %v1615
        %v1617 = vsel %vm1616, %v1614, %v1615
        %v1618 = vrot.slane %v1617, 1
        %vm1619 = vcmp.lt.s32.totalorder %v1617, %v1618
        %v1620 = vsel %vm1619, %v1617, %v1618
        %v1621 = vsel %vm399, %v1044, 2147483647
        %v1622 = vrot.slane %v1621, 4
        %vm1623 = vcmp.lt.s32.totalorder %v1621, %v1622
        %v1624 = vsel %vm1623, %v1621, %v1622
        %v1625 = vrot.slane %v1624, 2
        %vm1626 = vcmp.lt.s32.totalorder %v1624, %v1625
        %v1627 = vsel %vm1626, %v1624, %v1625
        %v1628 = vrot.slane %v1627, 1
        %vm1629 = vcmp.lt.s32.totalorder %v1627, %v1628
        %v1630 = vsel %vm1629, %v1627, %v1628
        %v1631 = vsel %vm399, %v1076, 2147483647
        %v1632 = vrot.slane %v1631, 4
        %vm1633 = vcmp.lt.s32.totalorder %v1631, %v1632
        %v1634 = vsel %vm1633, %v1631, %v1632
        %v1635 = vrot.slane %v1634, 2
        %vm1636 = vcmp.lt.s32.totalorder %v1634, %v1635
        %v1637 = vsel %vm1636, %v1634, %v1635
        %v1638 = vrot.slane %v1637, 1
        %vm1639 = vcmp.lt.s32.totalorder %v1637, %v1638
        %v1640 = vsel %vm1639, %v1637, %v1638
        %v1641 = vsel %vm399, %v1045, 2147483647
        %v1642 = vrot.slane %v1641, 4
        %vm1643 = vcmp.lt.s32.totalorder %v1641, %v1642
        %v1644 = vsel %vm1643, %v1641, %v1642
        %v1645 = vrot.slane %v1644, 2
        %vm1646 = vcmp.lt.s32.totalorder %v1644, %v1645
        %v1647 = vsel %vm1646, %v1644, %v1645
        %v1648 = vrot.slane %v1647, 1
        %vm1649 = vcmp.lt.s32.totalorder %v1647, %v1648
        %v1650 = vsel %vm1649, %v1647, %v1648
        %v1651 = vsel %vm399, %v1077, 2147483647
        %v1652 = vrot.slane %v1651, 4
        %vm1653 = vcmp.lt.s32.totalorder %v1651, %v1652
        %v1654 = vsel %vm1653, %v1651, %v1652
        %v1655 = vrot.slane %v1654, 2
        %vm1656 = vcmp.lt.s32.totalorder %v1654, %v1655
        %v1657 = vsel %vm1656, %v1654, %v1655
        %v1658 = vrot.slane %v1657, 1
        %vm1659 = vcmp.lt.s32.totalorder %v1657, %v1658
        %v1660 = vsel %vm1659, %v1657, %v1658
        %v1661 = vsel %vm399, %v1046, 2147483647
        %v1662 = vrot.slane %v1661, 4
        %vm1663 = vcmp.lt.s32.totalorder %v1661, %v1662
        %v1664 = vsel %vm1663, %v1661, %v1662
        %v1665 = vrot.slane %v1664, 2
        %vm1666 = vcmp.lt.s32.totalorder %v1664, %v1665
        %v1667 = vsel %vm1666, %v1664, %v1665
        %v1668 = vrot.slane %v1667, 1
        %vm1669 = vcmp.lt.s32.totalorder %v1667, %v1668
        %v1670 = vsel %vm1669, %v1667, %v1668
        %v1671 = vsel %vm399, %v1078, 2147483647
        %v1672 = vrot.slane %v1671, 4
        %vm1673 = vcmp.lt.s32.totalorder %v1671, %v1672
        %v1674 = vsel %vm1673, %v1671, %v1672
        %v1675 = vrot.slane %v1674, 2
        %vm1676 = vcmp.lt.s32.totalorder %v1674, %v1675
        %v1677 = vsel %vm1676, %v1674, %v1675
        %v1678 = vrot.slane %v1677, 1
        %vm1679 = vcmp.lt.s32.totalorder %v1677, %v1678
        %v1680 = vsel %vm1679, %v1677, %v1678
        %v1681 = vsel %vm399, %v1047, 2147483647
        %v1682 = vrot.slane %v1681, 4
        %vm1683 = vcmp.lt.s32.totalorder %v1681, %v1682
        %v1684 = vsel %vm1683, %v1681, %v1682
        %v1685 = vrot.slane %v1684, 2
        %vm1686 = vcmp.lt.s32.totalorder %v1684, %v1685
        %v1687 = vsel %vm1686, %v1684, %v1685
        %v1688 = vrot.slane %v1687, 1
        %vm1689 = vcmp.lt.s32.totalorder %v1687, %v1688
        %v1690 = vsel %vm1689, %v1687, %v1688
        %v1691 = vsel %vm399, %v1079, 2147483647
        %v1692 = vrot.slane %v1691, 4
        %vm1693 = vcmp.lt.s32.totalorder %v1691, %v1692
        %v1694 = vsel %vm1693, %v1691, %v1692
        %v1695 = vrot.slane %v1694, 2
        %vm1696 = vcmp.lt.s32.totalorder %v1694, %v1695
        %v1697 = vsel %vm1696, %v1694, %v1695
        %v1698 = vrot.slane %v1697, 1
        %vm1699 = vcmp.lt.s32.totalorder %v1697, %v1698
        %v1700 = vsel %vm1699, %v1697, %v1698
        %v1701 = vsel %vm399, %v1048, 2147483647
        %v1702 = vrot.slane %v1701, 4
        %vm1703 = vcmp.lt.s32.totalorder %v1701, %v1702
        %v1704 = vsel %vm1703, %v1701, %v1702
        %v1705 = vrot.slane %v1704, 2
        %vm1706 = vcmp.lt.s32.totalorder %v1704, %v1705
        %v1707 = vsel %vm1706, %v1704, %v1705
        %v1708 = vrot.slane %v1707, 1
        %vm1709 = vcmp.lt.s32.totalorder %v1707, %v1708
        %v1710 = vsel %vm1709, %v1707, %v1708
        %v1711 = vsel %vm399, %v1080, 2147483647
        %v1712 = vrot.slane %v1711, 4
        %vm1713 = vcmp.lt.s32.totalorder %v1711, %v1712
        %v1714 = vsel %vm1713, %v1711, %v1712
        %v1715 = vrot.slane %v1714, 2
        %vm1716 = vcmp.lt.s32.totalorder %v1714, %v1715
        %v1717 = vsel %vm1716, %v1714, %v1715
        %v1718 = vrot.slane %v1717, 1
        %vm1719 = vcmp.lt.s32.totalorder %v1717, %v1718
        %v1720 = vsel %vm1719, %v1717, %v1718
        %v1721 = vadd.s32 %v1090, 1
        %v1722 = vadd.s32 %v1100, 1
        %v1723 = vadd.s32 %v1110, 1
        %v1724 = vadd.s32 %v1120, 1
        %v1725 = vadd.s32 %v1130, 1
        %v1726 = vadd.s32 %v1140, 1
        %v1727 = vadd.s32 %v1150, 1
        %v1728 = vadd.s32 %v1160, 1
        %v1729 = vadd.s32 %v1170, 1
        %v1730 = vadd.s32 %v1180, 1
        %v1731 = vadd.s32 %v1190, 1
        %v1732 = vadd.s32 %v1200, 1
        %v1733 = vadd.s32 %v1210, 1
        %v1734 = vadd.s32 %v1220, 1
        %v1735 = vadd.s32 %v1230, 1
        %v1736 = vadd.s32 %v1240, 1
        %v1737 = vadd.s32 %v1250, 1
        %v1738 = vadd.s32 %v1260, 1
        %v1739 = vadd.s32 %v1270, 1
        %v1740 = vadd.s32 %v1280, 1
        %v1741 = vadd.s32 %v1290, 1
        %v1742 = vadd.s32 %v1300, 1
        %v1743 = vadd.s32 %v1310, 1
        %v1744 = vadd.s32 %v1320, 1
        %v1745 = vadd.s32 %v1330, 1
        %v1746 = vadd.s32 %v1340, 1
        %v1747 = vadd.s32 %v1350, 1
        %v1748 = vadd.s32 %v1360, 1
        %v1749 = vadd.s32 %v1370, 1
        %v1750 = vadd.s32 %v1380, 1
        %v1751 = vadd.s32 %v1390, 1
        %v1752 = vadd.s32 %v1400, 1
        %v1753 = vadd.s32 %v1410, 1
        %v1754 = vadd.s32 %v1420, 1
        %v1755 = vadd.s32 %v1430, 1
        %v1756 = vadd.s32 %v1440, 1
        %v1757 = vadd.s32 %v1450, 1
        %v1758 = vadd.s32 %v1460, 1
        %v1759 = vadd.s32 %v1470, 1
        %v1760 = vadd.s32 %v1480, 1
        %v1761 = vadd.s32 %v1490, 1
        %v1762 = vadd.s32 %v1500, 1
        %v1763 = vadd.s32 %v1510, 1
        %v1764 = vadd.s32 %v1520, 1
        %v1765 = vadd.s32 %v1530, 1
        %v1766 = vadd.s32 %v1540, 1
        %v1767 = vadd.s32 %v1550, 1
        %v1768 = vadd.s32 %v1560, 1
        %v1769 = vadd.s32 %v1570, 1
        %v1770 = vadd.s32 %v1580, 1
        %v1771 = vadd.s32 %v1590, 1
        %v1772 = vadd.s32 %v1600, 1
        %v1773 = vadd.s32 %v1610, 1
        %v1774 = vadd.s32 %v1620, 1
        %v1775 = vadd.s32 %v1630, 1
        %v1776 = vadd.s32 %v1640, 1
        %v1777 = vadd.s32 %v1650, 1
        %v1778 = vadd.s32 %v1660, 1
        %v1779 = vadd.s32 %v1670, 1
        %v1780 = vadd.s32 %v1680, 1
        %v1781 = vadd.s32 %v1690, 1
        %v1782 = vadd.s32 %v1700, 1
        %v1783 = vadd.s32 %v1710, 1
        %v1784 = vadd.s32 %v1720, 1
        %v1785 = vxor.u32 %v406, 2147483648
        %v1786 = vxor.u32 %v413, 2147483648
        %v1787 = vxor.u32 %v420, 2147483648
        %v1788 = vxor.u32 %v427, 2147483648
        %v1789 = vxor.u32 %v434, 2147483648
        %v1790 = vxor.u32 %v441, 2147483648
        %v1791 = vxor.u32 %v448, 2147483648
        %v1792 = vxor.u32 %v455, 2147483648
        %v1793 = vxor.u32 %v462, 2147483648
        %v1794 = vxor.u32 %v469, 2147483648
        %v1795 = vxor.u32 %v476, 2147483648
        %v1796 = vxor.u32 %v483, 2147483648
        %v1797 = vxor.u32 %v490, 2147483648
        %v1798 = vxor.u32 %v497, 2147483648
        %v1799 = vxor.u32 %v504, 2147483648
        %v1800 = vxor.u32 %v511, 2147483648
        %v1801 = vxor.u32 %v518, 2147483648
        %v1802 = vxor.u32 %v525, 2147483648
        %v1803 = vxor.u32 %v532, 2147483648
        %v1804 = vxor.u32 %v539, 2147483648
        %v1805 = vxor.u32 %v546, 2147483648
        %v1806 = vxor.u32 %v553, 2147483648
        %v1807 = vxor.u32 %v560, 2147483648
        %v1808 = vxor.u32 %v567, 2147483648
        %v1809 = vxor.u32 %v574, 2147483648
        %v1810 = vxor.u32 %v581, 2147483648
        %v1811 = vxor.u32 %v588, 2147483648
        %v1812 = vxor.u32 %v595, 2147483648
        %v1813 = vxor.u32 %v602, 2147483648
        %v1814 = vxor.u32 %v609, 2147483648
        %v1815 = vxor.u32 %v616, 2147483648
        %v1816 = vxor.u32 %v623, 2147483648
        %v1817 = vxor.u32 %v630, 2147483648
        %v1818 = vxor.u32 %v637, 2147483648
        %v1819 = vxor.u32 %v644, 2147483648
        %v1820 = vxor.u32 %v651, 2147483648
        %v1821 = vxor.u32 %v658, 2147483648
        %v1822 = vxor.u32 %v665, 2147483648
        %v1823 = vxor.u32 %v672, 2147483648
        %v1824 = vxor.u32 %v679, 2147483648
        %v1825 = vxor.u32 %v686, 2147483648
        %v1826 = vxor.u32 %v693, 2147483648
        %v1827 = vxor.u32 %v700, 2147483648
        %v1828 = vxor.u32 %v707, 2147483648
        %v1829 = vxor.u32 %v714, 2147483648
        %v1830 = vxor.u32 %v721, 2147483648
        %v1831 = vxor.u32 %v728, 2147483648
        %v1832 = vxor.u32 %v735, 2147483648
        %v1833 = vxor.u32 %v742, 2147483648
        %v1834 = vxor.u32 %v749, 2147483648
        %v1835 = vxor.u32 %v756, 2147483648
        %v1836 = vxor.u32 %v763, 2147483648
        %v1837 = vxor.u32 %v770, 2147483648
        %v1838 = vxor.u32 %v777, 2147483648
        %v1839 = vxor.u32 %v784, 2147483648
        %v1840 = vxor.u32 %v791, 2147483648
        %v1841 = vxor.u32 %v798, 2147483648
        %v1842 = vxor.u32 %v805, 2147483648
        %v1843 = vxor.u32 %v812, 2147483648
        %v1844 = vxor.u32 %v819, 2147483648
        %v1845 = vxor.u32 %v826, 2147483648
        %v1846 = vxor.u32 %v833, 2147483648
        %v1847 = vxor.u32 %v840, 2147483648
        %v1848 = vxor.u32 %v847, 2147483648
        %v1849 = vmul.f32 %v1785, 1.442695
        %v1850 = vpow.pop %v1849
        %v1851 = vmul.f32 %v1786, 1.442695
        %v1852 = vpow.pop %v1851
        %v1853 = vmul.f32 %v1787, 1.442695
        %v1854 = vpow.pop %v1853
        %v1855 = vmul.f32 %v1788, 1.442695
        %v1856 = vpow.pop %v1855
        %v1857 = vmul.f32 %v1789, 1.442695
        %v1858 = vpow.pop %v1857
        %v1859 = vmul.f32 %v1790, 1.442695
        %v1860 = vpow.pop %v1859
        %v1861 = vmul.f32 %v1791, 1.442695
        %v1862 = vpow.pop %v1861
        %v1863 = vmul.f32 %v1792, 1.442695
        %v1864 = vpow.pop %v1863
        %v1865 = vmul.f32 %v1793, 1.442695
        %v1866 = vpow.pop %v1865
        %v1867 = vmul.f32 %v1794, 1.442695
        %v1868 = vpow.pop %v1867
        %v1869 = vmul.f32 %v1795, 1.442695
        %v1870 = vpow.pop %v1869
        %v1871 = vmul.f32 %v1796, 1.442695
        %v1872 = vpow.pop %v1871
        %v1873 = vmul.f32 %v1797, 1.442695
        %v1874 = vpow.pop %v1873
        %v1875 = vmul.f32 %v1798, 1.442695
        %v1876 = vpow.pop %v1875
        %v1877 = vmul.f32 %v1799, 1.442695
        %v1878 = vpow.pop %v1877
        %v1879 = vmul.f32 %v1800, 1.442695
        %v1880 = vpow.pop %v1879
        %v1881 = vmul.f32 %v1801, 1.442695
        %v1882 = vpow.pop %v1881
        %v1883 = vmul.f32 %v1802, 1.442695
        %v1884 = vpow.pop %v1883
        %v1885 = vmul.f32 %v1803, 1.442695
        %v1886 = vpow.pop %v1885
        %v1887 = vmul.f32 %v1804, 1.442695
        %v1888 = vpow.pop %v1887
        %v1889 = vmul.f32 %v1805, 1.442695
        %v1890 = vpow.pop %v1889
        %v1891 = vmul.f32 %v1806, 1.442695
        %v1892 = vpow.pop %v1891
        %v1893 = vmul.f32 %v1807, 1.442695
        %v1894 = vpow.pop %v1893
        %v1895 = vmul.f32 %v1808, 1.442695
        %v1896 = vpow.pop %v1895
        %v1897 = vmul.f32 %v1809, 1.442695
        %v1898 = vpow.pop %v1897
        %v1899 = vmul.f32 %v1810, 1.442695
        %v1900 = vpow.pop %v1899
        %v1901 = vmul.f32 %v1811, 1.442695
        %v1902 = vpow.pop %v1901
        %v1903 = vmul.f32 %v1812, 1.442695
        %v1904 = vpow.pop %v1903
        %v1905 = vmul.f32 %v1813, 1.442695
        %v1906 = vpow.pop %v1905
        %v1907 = vmul.f32 %v1814, 1.442695
        %v1908 = vpow.pop %v1907
        %v1909 = vmul.f32 %v1815, 1.442695
        %v1910 = vpow.pop %v1909
        %v1911 = vmul.f32 %v1816, 1.442695
        %v1912 = vpow.pop %v1911
        %v1913 = vmul.f32 %v1817, 1.442695
        %v1914 = vpow.pop %v1913
        %v1915 = vmul.f32 %v1818, 1.442695
        %v1916 = vpow.pop %v1915
        %v1917 = vmul.f32 %v1819, 1.442695
        %v1918 = vpow.pop %v1917
        %v1919 = vmul.f32 %v1820, 1.442695
        %v1920 = vpow.pop %v1919
        %v1921 = vmul.f32 %v1821, 1.442695
        %v1922 = vpow.pop %v1921
        %v1923 = vmul.f32 %v1822, 1.442695
        %v1924 = vpow.pop %v1923
        %v1925 = vmul.f32 %v1823, 1.442695
        %v1926 = vpow.pop %v1925
        %v1927 = vmul.f32 %v1824, 1.442695
        %v1928 = vpow.pop %v1927
        %v1929 = vmul.f32 %v1825, 1.442695
        %v1930 = vpow.pop %v1929
        %v1931 = vmul.f32 %v1826, 1.442695
        %v1932 = vpow.pop %v1931
        %v1933 = vmul.f32 %v1827, 1.442695
        %v1934 = vpow.pop %v1933
        %v1935 = vmul.f32 %v1828, 1.442695
        %v1936 = vpow.pop %v1935
        %v1937 = vmul.f32 %v1829, 1.442695
        %v1938 = vpow.pop %v1937
        %v1939 = vmul.f32 %v1830, 1.442695
        %v1940 = vpow.pop %v1939
        %v1941 = vmul.f32 %v1831, 1.442695
        %v1942 = vpow.pop %v1941
        %v1943 = vmul.f32 %v1832, 1.442695
        %v1944 = vpow.pop %v1943
        %v1945 = vmul.f32 %v1833, 1.442695
        %v1946 = vpow.pop %v1945
        %v1947 = vmul.f32 %v1834, 1.442695
        %v1948 = vpow.pop %v1947
        %v1949 = vmul.f32 %v1835, 1.442695
        %v1950 = vpow.pop %v1949
        %v1951 = vmul.f32 %v1836, 1.442695
        %v1952 = vpow.pop %v1951
        %v1953 = vmul.f32 %v1837, 1.442695
        %v1954 = vpow.pop %v1953
        %v1955 = vmul.f32 %v1838, 1.442695
        %v1956 = vpow.pop %v1955
        %v1957 = vmul.f32 %v1839, 1.442695
        %v1958 = vpow.pop %v1957
        %v1959 = vmul.f32 %v1840, 1.442695
        %v1960 = vpow.pop %v1959
        %v1961 = vmul.f32 %v1841, 1.442695
        %v1962 = vpow.pop %v1961
        %v1963 = vmul.f32 %v1842, 1.442695
        %v1964 = vpow.pop %v1963
        %v1965 = vmul.f32 %v1843, 1.442695
        %v1966 = vpow.pop %v1965
        %v1967 = vmul.f32 %v1844, 1.442695
        %v1968 = vpow.pop %v1967
        %v1969 = vmul.f32 %v1845, 1.442695
        %v1970 = vpow.pop %v1969
        %v1971 = vmul.f32 %v1846, 1.442695
        %v1972 = vpow.pop %v1971
        %v1973 = vmul.f32 %v1847, 1.442695
        %v1974 = vpow.pop %v1973
        %v1975 = vmul.f32 %v1848, 1.442695
        %v1976 = vpow.pop %v1975
        %v1977 = vadd.f32 %v1850, 1.0
        %v1978 = vadd.f32 %v1852, 1.0
        %v1979 = vadd.f32 %v1854, 1.0
        %v1980 = vadd.f32 %v1856, 1.0
        %v1981 = vadd.f32 %v1858, 1.0
        %v1982 = vadd.f32 %v1860, 1.0
        %v1983 = vadd.f32 %v1862, 1.0
        %v1984 = vadd.f32 %v1864, 1.0
        %v1985 = vadd.f32 %v1866, 1.0
        %v1986 = vadd.f32 %v1868, 1.0
        %v1987 = vadd.f32 %v1870, 1.0
        %v1988 = vadd.f32 %v1872, 1.0
        %v1989 = vadd.f32 %v1874, 1.0
        %v1990 = vadd.f32 %v1876, 1.0
        %v1991 = vadd.f32 %v1878, 1.0
        %v1992 = vadd.f32 %v1880, 1.0
        %v1993 = vadd.f32 %v1882, 1.0
        %v1994 = vadd.f32 %v1884, 1.0
        %v1995 = vadd.f32 %v1886, 1.0
        %v1996 = vadd.f32 %v1888, 1.0
        %v1997 = vadd.f32 %v1890, 1.0
        %v1998 = vadd.f32 %v1892, 1.0
        %v1999 = vadd.f32 %v1894, 1.0
        %v2000 = vadd.f32 %v1896, 1.0
        %v2001 = vadd.f32 %v1898, 1.0
        %v2002 = vadd.f32 %v1900, 1.0
        %v2003 = vadd.f32 %v1902, 1.0
        %v2004 = vadd.f32 %v1904, 1.0
        %v2005 = vadd.f32 %v1906, 1.0
        %v2006 = vadd.f32 %v1908, 1.0
        %v2007 = vadd.f32 %v1910, 1.0
        %v2008 = vadd.f32 %v1912, 1.0
        %v2009 = vadd.f32 %v1914, 1.0
        %v2010 = vadd.f32 %v1916, 1.0
        %v2011 = vadd.f32 %v1918, 1.0
        %v2012 = vadd.f32 %v1920, 1.0
        %v2013 = vadd.f32 %v1922, 1.0
        %v2014 = vadd.f32 %v1924, 1.0
        %v2015 = vadd.f32 %v1926, 1.0
        %v2016 = vadd.f32 %v1928, 1.0
        %v2017 = vadd.f32 %v1930, 1.0
        %v2018 = vadd.f32 %v1932, 1.0
        %v2019 = vadd.f32 %v1934, 1.0
        %v2020 = vadd.f32 %v1936, 1.0
        %v2021 = vadd.f32 %v1938, 1.0
        %v2022 = vadd.f32 %v1940, 1.0
        %v2023 = vadd.f32 %v1942, 1.0
        %v2024 = vadd.f32 %v1944, 1.0
        %v2025 = vadd.f32 %v1946, 1.0
        %v2026 = vadd.f32 %v1948, 1.0
        %v2027 = vadd.f32 %v1950, 1.0
        %v2028 = vadd.f32 %v1952, 1.0
        %v2029 = vadd.f32 %v1954, 1.0
        %v2030 = vadd.f32 %v1956, 1.0
        %v2031 = vadd.f32 %v1958, 1.0
        %v2032 = vadd.f32 %v1960, 1.0
        %v2033 = vadd.f32 %v1962, 1.0
        %v2034 = vadd.f32 %v1964, 1.0
        %v2035 = vadd.f32 %v1966, 1.0
        %v2036 = vadd.f32 %v1968, 1.0
        %v2037 = vadd.f32 %v1970, 1.0
        %v2038 = vadd.f32 %v1972, 1.0
        %v2039 = vadd.f32 %v1974, 1.0
        %v2040 = vadd.f32 %v1976, 1.0
        %v2041 = vrcp.pop %v1977
        %v2042 = vmul.f32 1.0, %v2041
        %v2043 = vrcp.pop %v1978
        %v2044 = vmul.f32 1.0, %v2043
        %v2045 = vrcp.pop %v1979
        %v2046 = vmul.f32 1.0, %v2045
        %v2047 = vrcp.pop %v1980
        %v2048 = vmul.f32 1.0, %v2047
        %v2049 = vrcp.pop %v1981
        %v2050 = vmul.f32 1.0, %v2049
        %v2051 = vrcp.pop %v1982
        %v2052 = vmul.f32 1.0, %v2051
        %v2053 = vrcp.pop %v1983
        %v2054 = vmul.f32 1.0, %v2053
        %v2055 = vrcp.pop %v1984
        %v2056 = vmul.f32 1.0, %v2055
        %v2057 = vrcp.pop %v1985
        %v2058 = vmul.f32 1.0, %v2057
        %v2059 = vrcp.pop %v1986
        %v2060 = vmul.f32 1.0, %v2059
        %v2061 = vrcp.pop %v1987
        %v2062 = vmul.f32 1.0, %v2061
        %v2063 = vrcp.pop %v1988
        %v2064 = vmul.f32 1.0, %v2063
        %v2065 = vrcp.pop %v1989
        %v2066 = vmul.f32 1.0, %v2065
        %v2067 = vrcp.pop %v1990
        %v2068 = vmul.f32 1.0, %v2067
        %v2069 = vrcp.pop %v1991
        %v2070 = vmul.f32 1.0, %v2069
        %v2071 = vrcp.pop %v1992
        %v2072 = vmul.f32 1.0, %v2071
        %v2073 = vrcp.pop %v1993
        %v2074 = vmul.f32 1.0, %v2073
        %v2075 = vrcp.pop %v1994
        %v2076 = vmul.f32 1.0, %v2075
        %v2077 = vrcp.pop %v1995
        %v2078 = vmul.f32 1.0, %v2077
        %v2079 = vrcp.pop %v1996
        %v2080 = vmul.f32 1.0, %v2079
        %v2081 = vrcp.pop %v1997
        %v2082 = vmul.f32 1.0, %v2081
        %v2083 = vrcp.pop %v1998
        %v2084 = vmul.f32 1.0, %v2083
        %v2085 = vrcp.pop %v1999
        %v2086 = vmul.f32 1.0, %v2085
        %v2087 = vrcp.pop %v2000
        %v2088 = vmul.f32 1.0, %v2087
        %v2089 = vrcp.pop %v2001
        %v2090 = vmul.f32 1.0, %v2089
        %v2091 = vrcp.pop %v2002
        %v2092 = vmul.f32 1.0, %v2091
        %v2093 = vrcp.pop %v2003
        %v2094 = vmul.f32 1.0, %v2093
        %v2095 = vrcp.pop %v2004
        %v2096 = vmul.f32 1.0, %v2095
        %v2097 = vrcp.pop %v2005
        %v2098 = vmul.f32 1.0, %v2097
        %v2099 = vrcp.pop %v2006
        %v2100 = vmul.f32 1.0, %v2099
        %v2101 = vrcp.pop %v2007
        %v2102 = vmul.f32 1.0, %v2101
        %v2103 = vrcp.pop %v2008
        %v2104 = vmul.f32 1.0, %v2103
        %v2105 = vrcp.pop %v2009
        %v2106 = vmul.f32 1.0, %v2105
        %v2107 = vrcp.pop %v2010
        %v2108 = vmul.f32 1.0, %v2107
        %v2109 = vrcp.pop %v2011
        %v2110 = vmul.f32 1.0, %v2109
        %v2111 = vrcp.pop %v2012
        %v2112 = vmul.f32 1.0, %v2111
        %v2113 = vrcp.pop %v2013
        %v2114 = vmul.f32 1.0, %v2113
        %v2115 = vrcp.pop %v2014
        %v2116 = vmul.f32 1.0, %v2115
        %v2117 = vrcp.pop %v2015
        %v2118 = vmul.f32 1.0, %v2117
        %v2119 = vrcp.pop %v2016
        %v2120 = vmul.f32 1.0, %v2119
        %v2121 = vrcp.pop %v2017
        %v2122 = vmul.f32 1.0, %v2121
        %v2123 = vrcp.pop %v2018
        %v2124 = vmul.f32 1.0, %v2123
        %v2125 = vrcp.pop %v2019
        %v2126 = vmul.f32 1.0, %v2125
        %v2127 = vrcp.pop %v2020
        %v2128 = vmul.f32 1.0, %v2127
        %v2129 = vrcp.pop %v2021
        %v2130 = vmul.f32 1.0, %v2129
        %v2131 = vrcp.pop %v2022
        %v2132 = vmul.f32 1.0, %v2131
        %v2133 = vrcp.pop %v2023
        %v2134 = vmul.f32 1.0, %v2133
        %v2135 = vrcp.pop %v2024
        %v2136 = vmul.f32 1.0, %v2135
        %v2137 = vrcp.pop %v2025
        %v2138 = vmul.f32 1.0, %v2137
        %v2139 = vrcp.pop %v2026
        %v2140 = vmul.f32 1.0, %v2139
        %v2141 = vrcp.pop %v2027
        %v2142 = vmul.f32 1.0, %v2141
        %v2143 = vrcp.pop %v2028
        %v2144 = vmul.f32 1.0, %v2143
        %v2145 = vrcp.pop %v2029
        %v2146 = vmul.f32 1.0, %v2145
        %v2147 = vrcp.pop %v2030
        %v2148 = vmul.f32 1.0, %v2147
        %v2149 = vrcp.pop %v2031
        %v2150 = vmul.f32 1.0, %v2149
        %v2151 = vrcp.pop %v2032
        %v2152 = vmul.f32 1.0, %v2151
        %v2153 = vrcp.pop %v2033
        %v2154 = vmul.f32 1.0, %v2153
        %v2155 = vrcp.pop %v2034
        %v2156 = vmul.f32 1.0, %v2155
        %v2157 = vrcp.pop %v2035
        %v2158 = vmul.f32 1.0, %v2157
        %v2159 = vrcp.pop %v2036
        %v2160 = vmul.f32 1.0, %v2159
        %v2161 = vrcp.pop %v2037
        %v2162 = vmul.f32 1.0, %v2161
        %v2163 = vrcp.pop %v2038
        %v2164 = vmul.f32 1.0, %v2163
        %v2165 = vrcp.pop %v2039
        %v2166 = vmul.f32 1.0, %v2165
        %v2167 = vrcp.pop %v2040
        %v2168 = vmul.f32 1.0, %v2167
        %v2169 = vld [vmem:[%s218] sm:$0xff]
        %v2170 = vld [vmem:[%s218 + $0x8] sm:$0xff]
        %v2171 = vld [vmem:[%s218 + $0x10] sm:$0xff]
        %v2172 = vld [vmem:[%s218 + $0x18] sm:$0xff]
        %v2173 = vld [vmem:[%s218 + $0x20] sm:$0xff]
        %v2174 = vld [vmem:[%s218 + $0x28] sm:$0xff]
        %v2175 = vld [vmem:[%s218 + $0x30] sm:$0xff]
        %v2176 = vld [vmem:[%s218 + $0x38] sm:$0xff]
        %v2177 = vxor.u32 %v2169, 2147483648
        %v2178 = vxor.u32 %v2170, 2147483648
        %v2179 = vxor.u32 %v2171, 2147483648
        %v2180 = vxor.u32 %v2172, 2147483648
        %v2181 = vxor.u32 %v2173, 2147483648
        %v2182 = vxor.u32 %v2174, 2147483648
        %v2183 = vxor.u32 %v2175, 2147483648
        %v2184 = vxor.u32 %v2176, 2147483648
        %v2185 = vmul.f32 %v2177, 1.442695
        %v2186 = vpow.pop %v2185
        %v2187 = vmul.f32 %v2178, 1.442695
        %v2188 = vpow.pop %v2187
        %v2189 = vmul.f32 %v2179, 1.442695
        %v2190 = vpow.pop %v2189
        %v2191 = vmul.f32 %v2180, 1.442695
        %v2192 = vpow.pop %v2191
        %v2193 = vmul.f32 %v2181, 1.442695
        %v2194 = vpow.pop %v2193
        %v2195 = vmul.f32 %v2182, 1.442695
        %v2196 = vpow.pop %v2195
        %v2197 = vmul.f32 %v2183, 1.442695
        %v2198 = vpow.pop %v2197
        %v2199 = vmul.f32 %v2184, 1.442695
        %v2200 = vpow.pop %v2199
        %v2201 = vadd.f32 %v2186, 1.0
        %v2202 = vadd.f32 %v2188, 1.0
        %v2203 = vadd.f32 %v2190, 1.0
        %v2204 = vadd.f32 %v2192, 1.0
        %v2205 = vadd.f32 %v2194, 1.0
        %v2206 = vadd.f32 %v2196, 1.0
        %v2207 = vadd.f32 %v2198, 1.0
        %v2208 = vadd.f32 %v2200, 1.0
        %v2209 = vrcp.pop %v2201
        %v2210 = vmul.f32 1.0, %v2209
        %v2211 = vrcp.pop %v2202
        %v2212 = vmul.f32 1.0, %v2211
        %v2213 = vrcp.pop %v2203
        %v2214 = vmul.f32 1.0, %v2213
        %v2215 = vrcp.pop %v2204
        %v2216 = vmul.f32 1.0, %v2215
        %v2217 = vrcp.pop %v2205
        %v2218 = vmul.f32 1.0, %v2217
        %v2219 = vrcp.pop %v2206
        %v2220 = vmul.f32 1.0, %v2219
        %v2221 = vrcp.pop %v2207
        %v2222 = vmul.f32 1.0, %v2221
        %v2223 = vrcp.pop %v2208
        %v2224 = vmul.f32 1.0, %v2223
        %v2233 = vcombine.high %v2210, %v2210
        %v2235 = vunpack.c.l.s4 1983009808
        %v2236 = vunpack.c.0.s8 %v2235
        %v2237 = vlaneseq
        %v2238 = vshrl.u32 %v2237, 7
        %v2239 = vsub.s32 %v2236, %v2238
        %v2240 = vrot.slane %v2210, %v2239
        %v2242 = vunpack.c.l.s4 1983009808
        %v2243 = vunpack.c.0.s8 %v2242
        %v2244 = vlaneseq
        %v2245 = vshrl.u32 %v2244, 7
        %v2246 = vsub.s32 %v2243, %v2245
        %v2247 = vrot.slane %v2233, %v2246
        %v2248 = vcombine.high %v2240, %v2240
        %v2249 = vcombine.high %v2247, %v2247
        %v2250 = vcombine.high %v2212, %v2212
        %v2252 = vunpack.c.l.s4 1983009808
        %v2253 = vunpack.c.0.s8 %v2252
        %v2254 = vlaneseq
        %v2255 = vshrl.u32 %v2254, 7
        %v2256 = vsub.s32 %v2253, %v2255
        %v2257 = vrot.slane %v2212, %v2256
        %v2259 = vunpack.c.l.s4 1983009808
        %v2260 = vunpack.c.0.s8 %v2259
        %v2261 = vlaneseq
        %v2262 = vshrl.u32 %v2261, 7
        %v2263 = vsub.s32 %v2260, %v2262
        %v2264 = vrot.slane %v2250, %v2263
        %v2265 = vcombine.high %v2257, %v2257
        %v2266 = vcombine.high %v2264, %v2264
        %v2267 = vcombine.high %v2214, %v2214
        %v2269 = vunpack.c.l.s4 1983009808
        %v2270 = vunpack.c.0.s8 %v2269
        %v2271 = vlaneseq
        %v2272 = vshrl.u32 %v2271, 7
        %v2273 = vsub.s32 %v2270, %v2272
        %v2274 = vrot.slane %v2214, %v2273
        %v2276 = vunpack.c.l.s4 1983009808
        %v2277 = vunpack.c.0.s8 %v2276
        %v2278 = vlaneseq
        %v2279 = vshrl.u32 %v2278, 7
        %v2280 = vsub.s32 %v2277, %v2279
        %v2281 = vrot.slane %v2267, %v2280
        %v2282 = vcombine.high %v2274, %v2274
        %v2283 = vcombine.high %v2281, %v2281
        %v2284 = vcombine.high %v2216, %v2216
        %v2286 = vunpack.c.l.s4 1983009808
        %v2287 = vunpack.c.0.s8 %v2286
        %v2288 = vlaneseq
        %v2289 = vshrl.u32 %v2288, 7
        %v2290 = vsub.s32 %v2287, %v2289
        %v2291 = vrot.slane %v2216, %v2290
        %v2293 = vunpack.c.l.s4 1983009808
        %v2294 = vunpack.c.0.s8 %v2293
        %v2295 = vlaneseq
        %v2296 = vshrl.u32 %v2295, 7
        %v2297 = vsub.s32 %v2294, %v2296
        %v2298 = vrot.slane %v2284, %v2297
        %v2299 = vcombine.high %v2291, %v2291
        %v2300 = vcombine.high %v2298, %v2298
        %v2301 = vcombine.high %v2218, %v2218
        %v2303 = vunpack.c.l.s4 1983009808
        %v2304 = vunpack.c.0.s8 %v2303
        %v2305 = vlaneseq
        %v2306 = vshrl.u32 %v2305, 7
        %v2307 = vsub.s32 %v2304, %v2306
        %v2308 = vrot.slane %v2218, %v2307
        %v2310 = vunpack.c.l.s4 1983009808
        %v2311 = vunpack.c.0.s8 %v2310
        %v2312 = vlaneseq
        %v2313 = vshrl.u32 %v2312, 7
        %v2314 = vsub.s32 %v2311, %v2313
        %v2315 = vrot.slane %v2301, %v2314
        %v2316 = vcombine.high %v2308, %v2308
        %v2317 = vcombine.high %v2315, %v2315
        %v2318 = vcombine.high %v2220, %v2220
        %v2320 = vunpack.c.l.s4 1983009808
        %v2321 = vunpack.c.0.s8 %v2320
        %v2322 = vlaneseq
        %v2323 = vshrl.u32 %v2322, 7
        %v2324 = vsub.s32 %v2321, %v2323
        %v2325 = vrot.slane %v2220, %v2324
        %v2327 = vunpack.c.l.s4 1983009808
        %v2328 = vunpack.c.0.s8 %v2327
        %v2329 = vlaneseq
        %v2330 = vshrl.u32 %v2329, 7
        %v2331 = vsub.s32 %v2328, %v2330
        %v2332 = vrot.slane %v2318, %v2331
        %v2333 = vcombine.high %v2325, %v2325
        %v2334 = vcombine.high %v2332, %v2332
        %v2335 = vcombine.high %v2222, %v2222
        %v2337 = vunpack.c.l.s4 1983009808
        %v2338 = vunpack.c.0.s8 %v2337
        %v2339 = vlaneseq
        %v2340 = vshrl.u32 %v2339, 7
        %v2341 = vsub.s32 %v2338, %v2340
        %v2342 = vrot.slane %v2222, %v2341
        %v2344 = vunpack.c.l.s4 1983009808
        %v2345 = vunpack.c.0.s8 %v2344
        %v2346 = vlaneseq
        %v2347 = vshrl.u32 %v2346, 7
        %v2348 = vsub.s32 %v2345, %v2347
        %v2349 = vrot.slane %v2335, %v2348
        %v2350 = vcombine.high %v2342, %v2342
        %v2351 = vcombine.high %v2349, %v2349
        %v2352 = vcombine.high %v2224, %v2224
        %v2354 = vunpack.c.l.s4 1983009808
        %v2355 = vunpack.c.0.s8 %v2354
        %v2356 = vlaneseq
        %v2357 = vshrl.u32 %v2356, 7
        %v2358 = vsub.s32 %v2355, %v2357
        %v2359 = vrot.slane %v2224, %v2358
        %v2361 = vunpack.c.l.s4 1983009808
        %v2362 = vunpack.c.0.s8 %v2361
        %v2363 = vlaneseq
        %v2364 = vshrl.u32 %v2363, 7
        %v2365 = vsub.s32 %v2362, %v2364
        %v2366 = vrot.slane %v2352, %v2365
        %v2367 = vcombine.high %v2359, %v2359
        %v2368 = vcombine.high %v2366, %v2366
        %v2369 = vrot.slane %v2240, 1
        %v2370 = vrot.slane %v2248, 1
        %v2371 = vrot.slane %v2247, 1
        %v2372 = vrot.slane %v2249, 1
        %v2373 = vrot.slane %v2257, 1
        %v2374 = vrot.slane %v2265, 1
        %v2375 = vrot.slane %v2264, 1
        %v2376 = vrot.slane %v2266, 1
        %v2377 = vrot.slane %v2274, 1
        %v2378 = vrot.slane %v2282, 1
        %v2379 = vrot.slane %v2281, 1
        %v2380 = vrot.slane %v2283, 1
        %v2381 = vrot.slane %v2291, 1
        %v2382 = vrot.slane %v2299, 1
        %v2383 = vrot.slane %v2298, 1
        %v2384 = vrot.slane %v2300, 1
        %v2385 = vrot.slane %v2308, 1
        %v2386 = vrot.slane %v2316, 1
        %v2387 = vrot.slane %v2315, 1
        %v2388 = vrot.slane %v2317, 1
        %v2389 = vrot.slane %v2325, 1
        %v2390 = vrot.slane %v2333, 1
        %v2391 = vrot.slane %v2332, 1
        %v2392 = vrot.slane %v2334, 1
        %v2393 = vrot.slane %v2342, 1
        %v2394 = vrot.slane %v2350, 1
        %v2395 = vrot.slane %v2349, 1
        %v2396 = vrot.slane %v2351, 1
        %v2397 = vrot.slane %v2359, 1
        %v2398 = vrot.slane %v2367, 1
        %v2399 = vrot.slane %v2366, 1
        %v2400 = vrot.slane %v2368, 1
        %v2465 = vmul.f32 %v2042, %v2240
        %v2466 = vmul.f32 %v2044, %v2248
        %v2467 = vmul.f32 %v2046, %v2247
        %v2468 = vmul.f32 %v2048, %v2249
        %v2469 = vmul.f32 %v2050, %v2257
        %v2470 = vmul.f32 %v2052, %v2265
        %v2471 = vmul.f32 %v2054, %v2264
        %v2472 = vmul.f32 %v2056, %v2266
        %v2473 = vmul.f32 %v2058, %v2274
        %v2474 = vmul.f32 %v2060, %v2282
        %v2475 = vmul.f32 %v2062, %v2281
        %v2476 = vmul.f32 %v2064, %v2283
        %v2477 = vmul.f32 %v2066, %v2291
        %v2478 = vmul.f32 %v2068, %v2299
        %v2479 = vmul.f32 %v2070, %v2298
        %v2480 = vmul.f32 %v2072, %v2300
        %v2481 = vmul.f32 %v2074, %v2308
        %v2482 = vmul.f32 %v2076, %v2316
        %v2483 = vmul.f32 %v2078, %v2315
        %v2484 = vmul.f32 %v2080, %v2317
        %v2485 = vmul.f32 %v2082, %v2325
        %v2486 = vmul.f32 %v2084, %v2333
        %v2487 = vmul.f32 %v2086, %v2332
        %v2488 = vmul.f32 %v2088, %v2334
        %v2489 = vmul.f32 %v2090, %v2342
        %v2490 = vmul.f32 %v2092, %v2350
        %v2491 = vmul.f32 %v2094, %v2349
        %v2492 = vmul.f32 %v2096, %v2351
        %v2493 = vmul.f32 %v2098, %v2359
        %v2494 = vmul.f32 %v2100, %v2367
        %v2495 = vmul.f32 %v2102, %v2366
        %v2496 = vmul.f32 %v2104, %v2368
        %v2497 = vmul.f32 %v2106, %v2369
        %v2498 = vmul.f32 %v2108, %v2370
        %v2499 = vmul.f32 %v2110, %v2371
        %v2500 = vmul.f32 %v2112, %v2372
        %v2501 = vmul.f32 %v2114, %v2373
        %v2502 = vmul.f32 %v2116, %v2374
        %v2503 = vmul.f32 %v2118, %v2375
        %v2504 = vmul.f32 %v2120, %v2376
        %v2505 = vmul.f32 %v2122, %v2377
        %v2506 = vmul.f32 %v2124, %v2378
        %v2507 = vmul.f32 %v2126, %v2379
        %v2508 = vmul.f32 %v2128, %v2380
        %v2509 = vmul.f32 %v2130, %v2381
        %v2510 = vmul.f32 %v2132, %v2382
        %v2511 = vmul.f32 %v2134, %v2383
        %v2512 = vmul.f32 %v2136, %v2384
        %v2513 = vmul.f32 %v2138, %v2385
        %v2514 = vmul.f32 %v2140, %v2386
        %v2515 = vmul.f32 %v2142, %v2387
        %v2516 = vmul.f32 %v2144, %v2388
        %v2517 = vmul.f32 %v2146, %v2389
        %v2518 = vmul.f32 %v2148, %v2390
        %v2519 = vmul.f32 %v2150, %v2391
        %v2520 = vmul.f32 %v2152, %v2392
        %v2521 = vmul.f32 %v2154, %v2393
        %v2522 = vmul.f32 %v2156, %v2394
        %v2523 = vmul.f32 %v2158, %v2395
        %v2524 = vmul.f32 %v2160, %v2396
        %v2525 = vmul.f32 %v2162, %v2397
        %v2526 = vmul.f32 %v2164, %v2398
        %v2527 = vmul.f32 %v2166, %v2399
        %v2528 = vmul.f32 %v2168, %v2400
        %v2529 = vrsqrt.pop %v2465
        %v2530 = vmul.f32 %v2465, %v2529
        %vm2531 = vcmp.eq.f32.partialorder %v2465, inf
        %v2532 = vsel %vm2531, %v2465, %v2530
        %vm2533 = vcmp.eq.f32.partialorder %v2465, 0.0
        %v2534 = vand.u32 %v2465, 2147483648
        %v2535 = vsel %vm2533, %v2534, %v2532
        %v2536 = vrsqrt.pop %v2466
        %v2537 = vmul.f32 %v2466, %v2536
        %vm2538 = vcmp.eq.f32.partialorder %v2466, inf
        %v2539 = vsel %vm2538, %v2466, %v2537
        %vm2540 = vcmp.eq.f32.partialorder %v2466, 0.0
        %v2541 = vand.u32 %v2466, 2147483648
        %v2542 = vsel %vm2540, %v2541, %v2539
        %v2543 = vrsqrt.pop %v2467
        %v2544 = vmul.f32 %v2467, %v2543
        %vm2545 = vcmp.eq.f32.partialorder %v2467, inf
        %v2546 = vsel %vm2545, %v2467, %v2544
        %vm2547 = vcmp.eq.f32.partialorder %v2467, 0.0
        %v2548 = vand.u32 %v2467, 2147483648
        %v2549 = vsel %vm2547, %v2548, %v2546
        %v2550 = vrsqrt.pop %v2468
        %v2551 = vmul.f32 %v2468, %v2550
        %vm2552 = vcmp.eq.f32.partialorder %v2468, inf
        %v2553 = vsel %vm2552, %v2468, %v2551
        %vm2554 = vcmp.eq.f32.partialorder %v2468, 0.0
        %v2555 = vand.u32 %v2468, 2147483648
        %v2556 = vsel %vm2554, %v2555, %v2553
        %v2557 = vrsqrt.pop %v2469
        %v2558 = vmul.f32 %v2469, %v2557
        %vm2559 = vcmp.eq.f32.partialorder %v2469, inf
        %v2560 = vsel %vm2559, %v2469, %v2558
        %vm2561 = vcmp.eq.f32.partialorder %v2469, 0.0
        %v2562 = vand.u32 %v2469, 2147483648
        %v2563 = vsel %vm2561, %v2562, %v2560
        %v2564 = vrsqrt.pop %v2470
        %v2565 = vmul.f32 %v2470, %v2564
        %vm2566 = vcmp.eq.f32.partialorder %v2470, inf
        %v2567 = vsel %vm2566, %v2470, %v2565
        %vm2568 = vcmp.eq.f32.partialorder %v2470, 0.0
        %v2569 = vand.u32 %v2470, 2147483648
        %v2570 = vsel %vm2568, %v2569, %v2567
        %v2571 = vrsqrt.pop %v2471
        %v2572 = vmul.f32 %v2471, %v2571
        %vm2573 = vcmp.eq.f32.partialorder %v2471, inf
        %v2574 = vsel %vm2573, %v2471, %v2572
        %vm2575 = vcmp.eq.f32.partialorder %v2471, 0.0
        %v2576 = vand.u32 %v2471, 2147483648
        %v2577 = vsel %vm2575, %v2576, %v2574
        %v2578 = vrsqrt.pop %v2472
        %v2579 = vmul.f32 %v2472, %v2578
        %vm2580 = vcmp.eq.f32.partialorder %v2472, inf
        %v2581 = vsel %vm2580, %v2472, %v2579
        %vm2582 = vcmp.eq.f32.partialorder %v2472, 0.0
        %v2583 = vand.u32 %v2472, 2147483648
        %v2584 = vsel %vm2582, %v2583, %v2581
        %v2585 = vrsqrt.pop %v2473
        %v2586 = vmul.f32 %v2473, %v2585
        %vm2587 = vcmp.eq.f32.partialorder %v2473, inf
        %v2588 = vsel %vm2587, %v2473, %v2586
        %vm2589 = vcmp.eq.f32.partialorder %v2473, 0.0
        %v2590 = vand.u32 %v2473, 2147483648
        %v2591 = vsel %vm2589, %v2590, %v2588
        %v2592 = vrsqrt.pop %v2474
        %v2593 = vmul.f32 %v2474, %v2592
        %vm2594 = vcmp.eq.f32.partialorder %v2474, inf
        %v2595 = vsel %vm2594, %v2474, %v2593
        %vm2596 = vcmp.eq.f32.partialorder %v2474, 0.0
        %v2597 = vand.u32 %v2474, 2147483648
        %v2598 = vsel %vm2596, %v2597, %v2595
        %v2599 = vrsqrt.pop %v2475
        %v2600 = vmul.f32 %v2475, %v2599
        %vm2601 = vcmp.eq.f32.partialorder %v2475, inf
        %v2602 = vsel %vm2601, %v2475, %v2600
        %vm2603 = vcmp.eq.f32.partialorder %v2475, 0.0
        %v2604 = vand.u32 %v2475, 2147483648
        %v2605 = vsel %vm2603, %v2604, %v2602
        %v2606 = vrsqrt.pop %v2476
        %v2607 = vmul.f32 %v2476, %v2606
        %vm2608 = vcmp.eq.f32.partialorder %v2476, inf
        %v2609 = vsel %vm2608, %v2476, %v2607
        %vm2610 = vcmp.eq.f32.partialorder %v2476, 0.0
        %v2611 = vand.u32 %v2476, 2147483648
        %v2612 = vsel %vm2610, %v2611, %v2609
        %v2613 = vrsqrt.pop %v2477
        %v2614 = vmul.f32 %v2477, %v2613
        %vm2615 = vcmp.eq.f32.partialorder %v2477, inf
        %v2616 = vsel %vm2615, %v2477, %v2614
        %vm2617 = vcmp.eq.f32.partialorder %v2477, 0.0
        %v2618 = vand.u32 %v2477, 2147483648
        %v2619 = vsel %vm2617, %v2618, %v2616
        %v2620 = vrsqrt.pop %v2478
        %v2621 = vmul.f32 %v2478, %v2620
        %vm2622 = vcmp.eq.f32.partialorder %v2478, inf
        %v2623 = vsel %vm2622, %v2478, %v2621
        %vm2624 = vcmp.eq.f32.partialorder %v2478, 0.0
        %v2625 = vand.u32 %v2478, 2147483648
        %v2626 = vsel %vm2624, %v2625, %v2623
        %v2627 = vrsqrt.pop %v2479
        %v2628 = vmul.f32 %v2479, %v2627
        %vm2629 = vcmp.eq.f32.partialorder %v2479, inf
        %v2630 = vsel %vm2629, %v2479, %v2628
        %vm2631 = vcmp.eq.f32.partialorder %v2479, 0.0
        %v2632 = vand.u32 %v2479, 2147483648
        %v2633 = vsel %vm2631, %v2632, %v2630
        %v2634 = vrsqrt.pop %v2480
        %v2635 = vmul.f32 %v2480, %v2634
        %vm2636 = vcmp.eq.f32.partialorder %v2480, inf
        %v2637 = vsel %vm2636, %v2480, %v2635
        %vm2638 = vcmp.eq.f32.partialorder %v2480, 0.0
        %v2639 = vand.u32 %v2480, 2147483648
        %v2640 = vsel %vm2638, %v2639, %v2637
        %v2641 = vrsqrt.pop %v2481
        %v2642 = vmul.f32 %v2481, %v2641
        %vm2643 = vcmp.eq.f32.partialorder %v2481, inf
        %v2644 = vsel %vm2643, %v2481, %v2642
        %vm2645 = vcmp.eq.f32.partialorder %v2481, 0.0
        %v2646 = vand.u32 %v2481, 2147483648
        %v2647 = vsel %vm2645, %v2646, %v2644
        %v2648 = vrsqrt.pop %v2482
        %v2649 = vmul.f32 %v2482, %v2648
        %vm2650 = vcmp.eq.f32.partialorder %v2482, inf
        %v2651 = vsel %vm2650, %v2482, %v2649
        %vm2652 = vcmp.eq.f32.partialorder %v2482, 0.0
        %v2653 = vand.u32 %v2482, 2147483648
        %v2654 = vsel %vm2652, %v2653, %v2651
        %v2655 = vrsqrt.pop %v2483
        %v2656 = vmul.f32 %v2483, %v2655
        %vm2657 = vcmp.eq.f32.partialorder %v2483, inf
        %v2658 = vsel %vm2657, %v2483, %v2656
        %vm2659 = vcmp.eq.f32.partialorder %v2483, 0.0
        %v2660 = vand.u32 %v2483, 2147483648
        %v2661 = vsel %vm2659, %v2660, %v2658
        %v2662 = vrsqrt.pop %v2484
        %v2663 = vmul.f32 %v2484, %v2662
        %vm2664 = vcmp.eq.f32.partialorder %v2484, inf
        %v2665 = vsel %vm2664, %v2484, %v2663
        %vm2666 = vcmp.eq.f32.partialorder %v2484, 0.0
        %v2667 = vand.u32 %v2484, 2147483648
        %v2668 = vsel %vm2666, %v2667, %v2665
        %v2669 = vrsqrt.pop %v2485
        %v2670 = vmul.f32 %v2485, %v2669
        %vm2671 = vcmp.eq.f32.partialorder %v2485, inf
        %v2672 = vsel %vm2671, %v2485, %v2670
        %vm2673 = vcmp.eq.f32.partialorder %v2485, 0.0
        %v2674 = vand.u32 %v2485, 2147483648
        %v2675 = vsel %vm2673, %v2674, %v2672
        %v2676 = vrsqrt.pop %v2486
        %v2677 = vmul.f32 %v2486, %v2676
        %vm2678 = vcmp.eq.f32.partialorder %v2486, inf
        %v2679 = vsel %vm2678, %v2486, %v2677
        %vm2680 = vcmp.eq.f32.partialorder %v2486, 0.0
        %v2681 = vand.u32 %v2486, 2147483648
        %v2682 = vsel %vm2680, %v2681, %v2679
        %v2683 = vrsqrt.pop %v2487
        %v2684 = vmul.f32 %v2487, %v2683
        %vm2685 = vcmp.eq.f32.partialorder %v2487, inf
        %v2686 = vsel %vm2685, %v2487, %v2684
        %vm2687 = vcmp.eq.f32.partialorder %v2487, 0.0
        %v2688 = vand.u32 %v2487, 2147483648
        %v2689 = vsel %vm2687, %v2688, %v2686
        %v2690 = vrsqrt.pop %v2488
        %v2691 = vmul.f32 %v2488, %v2690
        %vm2692 = vcmp.eq.f32.partialorder %v2488, inf
        %v2693 = vsel %vm2692, %v2488, %v2691
        %vm2694 = vcmp.eq.f32.partialorder %v2488, 0.0
        %v2695 = vand.u32 %v2488, 2147483648
        %v2696 = vsel %vm2694, %v2695, %v2693
        %v2697 = vrsqrt.pop %v2489
        %v2698 = vmul.f32 %v2489, %v2697
        %vm2699 = vcmp.eq.f32.partialorder %v2489, inf
        %v2700 = vsel %vm2699, %v2489, %v2698
        %vm2701 = vcmp.eq.f32.partialorder %v2489, 0.0
        %v2702 = vand.u32 %v2489, 2147483648
        %v2703 = vsel %vm2701, %v2702, %v2700
        %v2704 = vrsqrt.pop %v2490
        %v2705 = vmul.f32 %v2490, %v2704
        %vm2706 = vcmp.eq.f32.partialorder %v2490, inf
        %v2707 = vsel %vm2706, %v2490, %v2705
        %vm2708 = vcmp.eq.f32.partialorder %v2490, 0.0
        %v2709 = vand.u32 %v2490, 2147483648
        %v2710 = vsel %vm2708, %v2709, %v2707
        %v2711 = vrsqrt.pop %v2491
        %v2712 = vmul.f32 %v2491, %v2711
        %vm2713 = vcmp.eq.f32.partialorder %v2491, inf
        %v2714 = vsel %vm2713, %v2491, %v2712
        %vm2715 = vcmp.eq.f32.partialorder %v2491, 0.0
        %v2716 = vand.u32 %v2491, 2147483648
        %v2717 = vsel %vm2715, %v2716, %v2714
        %v2718 = vrsqrt.pop %v2492
        %v2719 = vmul.f32 %v2492, %v2718
        %vm2720 = vcmp.eq.f32.partialorder %v2492, inf
        %v2721 = vsel %vm2720, %v2492, %v2719
        %vm2722 = vcmp.eq.f32.partialorder %v2492, 0.0
        %v2723 = vand.u32 %v2492, 2147483648
        %v2724 = vsel %vm2722, %v2723, %v2721
        %v2725 = vrsqrt.pop %v2493
        %v2726 = vmul.f32 %v2493, %v2725
        %vm2727 = vcmp.eq.f32.partialorder %v2493, inf
        %v2728 = vsel %vm2727, %v2493, %v2726
        %vm2729 = vcmp.eq.f32.partialorder %v2493, 0.0
        %v2730 = vand.u32 %v2493, 2147483648
        %v2731 = vsel %vm2729, %v2730, %v2728
        %v2732 = vrsqrt.pop %v2494
        %v2733 = vmul.f32 %v2494, %v2732
        %vm2734 = vcmp.eq.f32.partialorder %v2494, inf
        %v2735 = vsel %vm2734, %v2494, %v2733
        %vm2736 = vcmp.eq.f32.partialorder %v2494, 0.0
        %v2737 = vand.u32 %v2494, 2147483648
        %v2738 = vsel %vm2736, %v2737, %v2735
        %v2739 = vrsqrt.pop %v2495
        %v2740 = vmul.f32 %v2495, %v2739
        %vm2741 = vcmp.eq.f32.partialorder %v2495, inf
        %v2742 = vsel %vm2741, %v2495, %v2740
        %vm2743 = vcmp.eq.f32.partialorder %v2495, 0.0
        %v2744 = vand.u32 %v2495, 2147483648
        %v2745 = vsel %vm2743, %v2744, %v2742
        %v2746 = vrsqrt.pop %v2496
        %v2747 = vmul.f32 %v2496, %v2746
        %vm2748 = vcmp.eq.f32.partialorder %v2496, inf
        %v2749 = vsel %vm2748, %v2496, %v2747
        %vm2750 = vcmp.eq.f32.partialorder %v2496, 0.0
        %v2751 = vand.u32 %v2496, 2147483648
        %v2752 = vsel %vm2750, %v2751, %v2749
        %v2753 = vrsqrt.pop %v2497
        %v2754 = vmul.f32 %v2497, %v2753
        %vm2755 = vcmp.eq.f32.partialorder %v2497, inf
        %v2756 = vsel %vm2755, %v2497, %v2754
        %vm2757 = vcmp.eq.f32.partialorder %v2497, 0.0
        %v2758 = vand.u32 %v2497, 2147483648
        %v2759 = vsel %vm2757, %v2758, %v2756
        %v2760 = vrsqrt.pop %v2498
        %v2761 = vmul.f32 %v2498, %v2760
        %vm2762 = vcmp.eq.f32.partialorder %v2498, inf
        %v2763 = vsel %vm2762, %v2498, %v2761
        %vm2764 = vcmp.eq.f32.partialorder %v2498, 0.0
        %v2765 = vand.u32 %v2498, 2147483648
        %v2766 = vsel %vm2764, %v2765, %v2763
        %v2767 = vrsqrt.pop %v2499
        %v2768 = vmul.f32 %v2499, %v2767
        %vm2769 = vcmp.eq.f32.partialorder %v2499, inf
        %v2770 = vsel %vm2769, %v2499, %v2768
        %vm2771 = vcmp.eq.f32.partialorder %v2499, 0.0
        %v2772 = vand.u32 %v2499, 2147483648
        %v2773 = vsel %vm2771, %v2772, %v2770
        %v2774 = vrsqrt.pop %v2500
        %v2775 = vmul.f32 %v2500, %v2774
        %vm2776 = vcmp.eq.f32.partialorder %v2500, inf
        %v2777 = vsel %vm2776, %v2500, %v2775
        %vm2778 = vcmp.eq.f32.partialorder %v2500, 0.0
        %v2779 = vand.u32 %v2500, 2147483648
        %v2780 = vsel %vm2778, %v2779, %v2777
        %v2781 = vrsqrt.pop %v2501
        %v2782 = vmul.f32 %v2501, %v2781
        %vm2783 = vcmp.eq.f32.partialorder %v2501, inf
        %v2784 = vsel %vm2783, %v2501, %v2782
        %vm2785 = vcmp.eq.f32.partialorder %v2501, 0.0
        %v2786 = vand.u32 %v2501, 2147483648
        %v2787 = vsel %vm2785, %v2786, %v2784
        %v2788 = vrsqrt.pop %v2502
        %v2789 = vmul.f32 %v2502, %v2788
        %vm2790 = vcmp.eq.f32.partialorder %v2502, inf
        %v2791 = vsel %vm2790, %v2502, %v2789
        %vm2792 = vcmp.eq.f32.partialorder %v2502, 0.0
        %v2793 = vand.u32 %v2502, 2147483648
        %v2794 = vsel %vm2792, %v2793, %v2791
        %v2795 = vrsqrt.pop %v2503
        %v2796 = vmul.f32 %v2503, %v2795
        %vm2797 = vcmp.eq.f32.partialorder %v2503, inf
        %v2798 = vsel %vm2797, %v2503, %v2796
        %vm2799 = vcmp.eq.f32.partialorder %v2503, 0.0
        %v2800 = vand.u32 %v2503, 2147483648
        %v2801 = vsel %vm2799, %v2800, %v2798
        %v2802 = vrsqrt.pop %v2504
        %v2803 = vmul.f32 %v2504, %v2802
        %vm2804 = vcmp.eq.f32.partialorder %v2504, inf
        %v2805 = vsel %vm2804, %v2504, %v2803
        %vm2806 = vcmp.eq.f32.partialorder %v2504, 0.0
        %v2807 = vand.u32 %v2504, 2147483648
        %v2808 = vsel %vm2806, %v2807, %v2805
        %v2809 = vrsqrt.pop %v2505
        %v2810 = vmul.f32 %v2505, %v2809
        %vm2811 = vcmp.eq.f32.partialorder %v2505, inf
        %v2812 = vsel %vm2811, %v2505, %v2810
        %vm2813 = vcmp.eq.f32.partialorder %v2505, 0.0
        %v2814 = vand.u32 %v2505, 2147483648
        %v2815 = vsel %vm2813, %v2814, %v2812
        %v2816 = vrsqrt.pop %v2506
        %v2817 = vmul.f32 %v2506, %v2816
        %vm2818 = vcmp.eq.f32.partialorder %v2506, inf
        %v2819 = vsel %vm2818, %v2506, %v2817
        %vm2820 = vcmp.eq.f32.partialorder %v2506, 0.0
        %v2821 = vand.u32 %v2506, 2147483648
        %v2822 = vsel %vm2820, %v2821, %v2819
        %v2823 = vrsqrt.pop %v2507
        %v2824 = vmul.f32 %v2507, %v2823
        %vm2825 = vcmp.eq.f32.partialorder %v2507, inf
        %v2826 = vsel %vm2825, %v2507, %v2824
        %vm2827 = vcmp.eq.f32.partialorder %v2507, 0.0
        %v2828 = vand.u32 %v2507, 2147483648
        %v2829 = vsel %vm2827, %v2828, %v2826
        %v2830 = vrsqrt.pop %v2508
        %v2831 = vmul.f32 %v2508, %v2830
        %vm2832 = vcmp.eq.f32.partialorder %v2508, inf
        %v2833 = vsel %vm2832, %v2508, %v2831
        %vm2834 = vcmp.eq.f32.partialorder %v2508, 0.0
        %v2835 = vand.u32 %v2508, 2147483648
        %v2836 = vsel %vm2834, %v2835, %v2833
        %v2837 = vrsqrt.pop %v2509
        %v2838 = vmul.f32 %v2509, %v2837
        %vm2839 = vcmp.eq.f32.partialorder %v2509, inf
        %v2840 = vsel %vm2839, %v2509, %v2838
        %vm2841 = vcmp.eq.f32.partialorder %v2509, 0.0
        %v2842 = vand.u32 %v2509, 2147483648
        %v2843 = vsel %vm2841, %v2842, %v2840
        %v2844 = vrsqrt.pop %v2510
        %v2845 = vmul.f32 %v2510, %v2844
        %vm2846 = vcmp.eq.f32.partialorder %v2510, inf
        %v2847 = vsel %vm2846, %v2510, %v2845
        %vm2848 = vcmp.eq.f32.partialorder %v2510, 0.0
        %v2849 = vand.u32 %v2510, 2147483648
        %v2850 = vsel %vm2848, %v2849, %v2847
        %v2851 = vrsqrt.pop %v2511
        %v2852 = vmul.f32 %v2511, %v2851
        %vm2853 = vcmp.eq.f32.partialorder %v2511, inf
        %v2854 = vsel %vm2853, %v2511, %v2852
        %vm2855 = vcmp.eq.f32.partialorder %v2511, 0.0
        %v2856 = vand.u32 %v2511, 2147483648
        %v2857 = vsel %vm2855, %v2856, %v2854
        %v2858 = vrsqrt.pop %v2512
        %v2859 = vmul.f32 %v2512, %v2858
        %vm2860 = vcmp.eq.f32.partialorder %v2512, inf
        %v2861 = vsel %vm2860, %v2512, %v2859
        %vm2862 = vcmp.eq.f32.partialorder %v2512, 0.0
        %v2863 = vand.u32 %v2512, 2147483648
        %v2864 = vsel %vm2862, %v2863, %v2861
        %v2865 = vrsqrt.pop %v2513
        %v2866 = vmul.f32 %v2513, %v2865
        %vm2867 = vcmp.eq.f32.partialorder %v2513, inf
        %v2868 = vsel %vm2867, %v2513, %v2866
        %vm2869 = vcmp.eq.f32.partialorder %v2513, 0.0
        %v2870 = vand.u32 %v2513, 2147483648
        %v2871 = vsel %vm2869, %v2870, %v2868
        %v2872 = vrsqrt.pop %v2514
        %v2873 = vmul.f32 %v2514, %v2872
        %vm2874 = vcmp.eq.f32.partialorder %v2514, inf
        %v2875 = vsel %vm2874, %v2514, %v2873
        %vm2876 = vcmp.eq.f32.partialorder %v2514, 0.0
        %v2877 = vand.u32 %v2514, 2147483648
        %v2878 = vsel %vm2876, %v2877, %v2875
        %v2879 = vrsqrt.pop %v2515
        %v2880 = vmul.f32 %v2515, %v2879
        %vm2881 = vcmp.eq.f32.partialorder %v2515, inf
        %v2882 = vsel %vm2881, %v2515, %v2880
        %vm2883 = vcmp.eq.f32.partialorder %v2515, 0.0
        %v2884 = vand.u32 %v2515, 2147483648
        %v2885 = vsel %vm2883, %v2884, %v2882
        %v2886 = vrsqrt.pop %v2516
        %v2887 = vmul.f32 %v2516, %v2886
        %vm2888 = vcmp.eq.f32.partialorder %v2516, inf
        %v2889 = vsel %vm2888, %v2516, %v2887
        %vm2890 = vcmp.eq.f32.partialorder %v2516, 0.0
        %v2891 = vand.u32 %v2516, 2147483648
        %v2892 = vsel %vm2890, %v2891, %v2889
        %v2893 = vrsqrt.pop %v2517
        %v2894 = vmul.f32 %v2517, %v2893
        %vm2895 = vcmp.eq.f32.partialorder %v2517, inf
        %v2896 = vsel %vm2895, %v2517, %v2894
        %vm2897 = vcmp.eq.f32.partialorder %v2517, 0.0
        %v2898 = vand.u32 %v2517, 2147483648
        %v2899 = vsel %vm2897, %v2898, %v2896
        %v2900 = vrsqrt.pop %v2518
        %v2901 = vmul.f32 %v2518, %v2900
        %vm2902 = vcmp.eq.f32.partialorder %v2518, inf
        %v2903 = vsel %vm2902, %v2518, %v2901
        %vm2904 = vcmp.eq.f32.partialorder %v2518, 0.0
        %v2905 = vand.u32 %v2518, 2147483648
        %v2906 = vsel %vm2904, %v2905, %v2903
        %v2907 = vrsqrt.pop %v2519
        %v2908 = vmul.f32 %v2519, %v2907
        %vm2909 = vcmp.eq.f32.partialorder %v2519, inf
        %v2910 = vsel %vm2909, %v2519, %v2908
        %vm2911 = vcmp.eq.f32.partialorder %v2519, 0.0
        %v2912 = vand.u32 %v2519, 2147483648
        %v2913 = vsel %vm2911, %v2912, %v2910
        %v2914 = vrsqrt.pop %v2520
        %v2915 = vmul.f32 %v2520, %v2914
        %vm2916 = vcmp.eq.f32.partialorder %v2520, inf
        %v2917 = vsel %vm2916, %v2520, %v2915
        %vm2918 = vcmp.eq.f32.partialorder %v2520, 0.0
        %v2919 = vand.u32 %v2520, 2147483648
        %v2920 = vsel %vm2918, %v2919, %v2917
        %v2921 = vrsqrt.pop %v2521
        %v2922 = vmul.f32 %v2521, %v2921
        %vm2923 = vcmp.eq.f32.partialorder %v2521, inf
        %v2924 = vsel %vm2923, %v2521, %v2922
        %vm2925 = vcmp.eq.f32.partialorder %v2521, 0.0
        %v2926 = vand.u32 %v2521, 2147483648
        %v2927 = vsel %vm2925, %v2926, %v2924
        %v2928 = vrsqrt.pop %v2522
        %v2929 = vmul.f32 %v2522, %v2928
        %vm2930 = vcmp.eq.f32.partialorder %v2522, inf
        %v2931 = vsel %vm2930, %v2522, %v2929
        %vm2932 = vcmp.eq.f32.partialorder %v2522, 0.0
        %v2933 = vand.u32 %v2522, 2147483648
        %v2934 = vsel %vm2932, %v2933, %v2931
        %v2935 = vrsqrt.pop %v2523
        %v2936 = vmul.f32 %v2523, %v2935
        %vm2937 = vcmp.eq.f32.partialorder %v2523, inf
        %v2938 = vsel %vm2937, %v2523, %v2936
        %vm2939 = vcmp.eq.f32.partialorder %v2523, 0.0
        %v2940 = vand.u32 %v2523, 2147483648
        %v2941 = vsel %vm2939, %v2940, %v2938
        %v2942 = vrsqrt.pop %v2524
        %v2943 = vmul.f32 %v2524, %v2942
        %vm2944 = vcmp.eq.f32.partialorder %v2524, inf
        %v2945 = vsel %vm2944, %v2524, %v2943
        %vm2946 = vcmp.eq.f32.partialorder %v2524, 0.0
        %v2947 = vand.u32 %v2524, 2147483648
        %v2948 = vsel %vm2946, %v2947, %v2945
        %v2949 = vrsqrt.pop %v2525
        %v2950 = vmul.f32 %v2525, %v2949
        %vm2951 = vcmp.eq.f32.partialorder %v2525, inf
        %v2952 = vsel %vm2951, %v2525, %v2950
        %vm2953 = vcmp.eq.f32.partialorder %v2525, 0.0
        %v2954 = vand.u32 %v2525, 2147483648
        %v2955 = vsel %vm2953, %v2954, %v2952
        %v2956 = vrsqrt.pop %v2526
        %v2957 = vmul.f32 %v2526, %v2956
        %vm2958 = vcmp.eq.f32.partialorder %v2526, inf
        %v2959 = vsel %vm2958, %v2526, %v2957
        %vm2960 = vcmp.eq.f32.partialorder %v2526, 0.0
        %v2961 = vand.u32 %v2526, 2147483648
        %v2962 = vsel %vm2960, %v2961, %v2959
        %v2963 = vrsqrt.pop %v2527
        %v2964 = vmul.f32 %v2527, %v2963
        %vm2965 = vcmp.eq.f32.partialorder %v2527, inf
        %v2966 = vsel %vm2965, %v2527, %v2964
        %vm2967 = vcmp.eq.f32.partialorder %v2527, 0.0
        %v2968 = vand.u32 %v2527, 2147483648
        %v2969 = vsel %vm2967, %v2968, %v2966
        %v2970 = vrsqrt.pop %v2528
        %v2971 = vmul.f32 %v2528, %v2970
        %vm2972 = vcmp.eq.f32.partialorder %v2528, inf
        %v2973 = vsel %vm2972, %v2528, %v2971
        %vm2974 = vcmp.eq.f32.partialorder %v2528, 0.0
        %v2975 = vand.u32 %v2528, 2147483648
        %v2976 = vsel %vm2974, %v2975, %v2973
        %v3041 = vcombine.low %v2535, %v2542
        %v3042 = vcombine.low %v2549, %v2556
        %v3044 = vunpack.c.l.s4 1983009808
        %v3045 = vunpack.c.0.s8 %v3044
        %v3046 = vlaneseq
        %v3047 = vshrl.u32 %v3046, 7
        %v3048 = vsub.s32 %v3045, %v3047
        %v3049 = vrot.slane %v3041, %v3048
        %v3051 = vunpack.c.l.s4 1983009808
        %v3052 = vunpack.c.0.s8 %v3051
        %v3053 = vlaneseq
        %v3054 = vshrl.u32 %v3053, 7
        %v3055 = vsub.s32 %v3052, %v3054
        %v3056 = vrot.slane %v3042, %v3055
        %v3057 = vcombine.low %v3049, %v3056
        %v3058 = vcombine.low %v2563, %v2570
        %v3059 = vcombine.low %v2577, %v2584
        %v3061 = vunpack.c.l.s4 1983009808
        %v3062 = vunpack.c.0.s8 %v3061
        %v3063 = vlaneseq
        %v3064 = vshrl.u32 %v3063, 7
        %v3065 = vsub.s32 %v3062, %v3064
        %v3066 = vrot.slane %v3058, %v3065
        %v3068 = vunpack.c.l.s4 1983009808
        %v3069 = vunpack.c.0.s8 %v3068
        %v3070 = vlaneseq
        %v3071 = vshrl.u32 %v3070, 7
        %v3072 = vsub.s32 %v3069, %v3071
        %v3073 = vrot.slane %v3059, %v3072
        %v3074 = vcombine.low %v3066, %v3073
        %v3075 = vcombine.low %v2591, %v2598
        %v3076 = vcombine.low %v2605, %v2612
        %v3078 = vunpack.c.l.s4 1983009808
        %v3079 = vunpack.c.0.s8 %v3078
        %v3080 = vlaneseq
        %v3081 = vshrl.u32 %v3080, 7
        %v3082 = vsub.s32 %v3079, %v3081
        %v3083 = vrot.slane %v3075, %v3082
        %v3085 = vunpack.c.l.s4 1983009808
        %v3086 = vunpack.c.0.s8 %v3085
        %v3087 = vlaneseq
        %v3088 = vshrl.u32 %v3087, 7
        %v3089 = vsub.s32 %v3086, %v3088
        %v3090 = vrot.slane %v3076, %v3089
        %v3091 = vcombine.low %v3083, %v3090
        %v3092 = vcombine.low %v2619, %v2626
        %v3093 = vcombine.low %v2633, %v2640
        %v3095 = vunpack.c.l.s4 1983009808
        %v3096 = vunpack.c.0.s8 %v3095
        %v3097 = vlaneseq
        %v3098 = vshrl.u32 %v3097, 7
        %v3099 = vsub.s32 %v3096, %v3098
        %v3100 = vrot.slane %v3092, %v3099
        %v3102 = vunpack.c.l.s4 1983009808
        %v3103 = vunpack.c.0.s8 %v3102
        %v3104 = vlaneseq
        %v3105 = vshrl.u32 %v3104, 7
        %v3106 = vsub.s32 %v3103, %v3105
        %v3107 = vrot.slane %v3093, %v3106
        %v3108 = vcombine.low %v3100, %v3107
        %v3109 = vcombine.low %v2647, %v2654
        %v3110 = vcombine.low %v2661, %v2668
        %v3112 = vunpack.c.l.s4 1983009808
        %v3113 = vunpack.c.0.s8 %v3112
        %v3114 = vlaneseq
        %v3115 = vshrl.u32 %v3114, 7
        %v3116 = vsub.s32 %v3113, %v3115
        %v3117 = vrot.slane %v3109, %v3116
        %v3119 = vunpack.c.l.s4 1983009808
        %v3120 = vunpack.c.0.s8 %v3119
        %v3121 = vlaneseq
        %v3122 = vshrl.u32 %v3121, 7
        %v3123 = vsub.s32 %v3120, %v3122
        %v3124 = vrot.slane %v3110, %v3123
        %v3125 = vcombine.low %v3117, %v3124
        %v3126 = vcombine.low %v2675, %v2682
        %v3127 = vcombine.low %v2689, %v2696
        %v3129 = vunpack.c.l.s4 1983009808
        %v3130 = vunpack.c.0.s8 %v3129
        %v3131 = vlaneseq
        %v3132 = vshrl.u32 %v3131, 7
        %v3133 = vsub.s32 %v3130, %v3132
        %v3134 = vrot.slane %v3126, %v3133
        %v3136 = vunpack.c.l.s4 1983009808
        %v3137 = vunpack.c.0.s8 %v3136
        %v3138 = vlaneseq
        %v3139 = vshrl.u32 %v3138, 7
        %v3140 = vsub.s32 %v3137, %v3139
        %v3141 = vrot.slane %v3127, %v3140
        %v3142 = vcombine.low %v3134, %v3141
        %v3143 = vcombine.low %v2703, %v2710
        %v3144 = vcombine.low %v2717, %v2724
        %v3146 = vunpack.c.l.s4 1983009808
        %v3147 = vunpack.c.0.s8 %v3146
        %v3148 = vlaneseq
        %v3149 = vshrl.u32 %v3148, 7
        %v3150 = vsub.s32 %v3147, %v3149
        %v3151 = vrot.slane %v3143, %v3150
        %v3153 = vunpack.c.l.s4 1983009808
        %v3154 = vunpack.c.0.s8 %v3153
        %v3155 = vlaneseq
        %v3156 = vshrl.u32 %v3155, 7
        %v3157 = vsub.s32 %v3154, %v3156
        %v3158 = vrot.slane %v3144, %v3157
        %v3159 = vcombine.low %v3151, %v3158
        %v3160 = vcombine.low %v2731, %v2738
        %v3161 = vcombine.low %v2745, %v2752
        %v3163 = vunpack.c.l.s4 1983009808
        %v3164 = vunpack.c.0.s8 %v3163
        %v3165 = vlaneseq
        %v3166 = vshrl.u32 %v3165, 7
        %v3167 = vsub.s32 %v3164, %v3166
        %v3168 = vrot.slane %v3160, %v3167
        %v3170 = vunpack.c.l.s4 1983009808
        %v3171 = vunpack.c.0.s8 %v3170
        %v3172 = vlaneseq
        %v3173 = vshrl.u32 %v3172, 7
        %v3174 = vsub.s32 %v3171, %v3173
        %v3175 = vrot.slane %v3161, %v3174
        %v3176 = vcombine.low %v3168, %v3175
        %v3177 = vcombine.low %v2759, %v2766
        %v3178 = vcombine.low %v2773, %v2780
        %v3180 = vunpack.c.l.s4 1983009808
        %v3181 = vunpack.c.0.s8 %v3180
        %v3182 = vlaneseq
        %v3183 = vshrl.u32 %v3182, 7
        %v3184 = vsub.s32 %v3181, %v3183
        %v3185 = vrot.slane %v3177, %v3184
        %v3187 = vunpack.c.l.s4 1983009808
        %v3188 = vunpack.c.0.s8 %v3187
        %v3189 = vlaneseq
        %v3190 = vshrl.u32 %v3189, 7
        %v3191 = vsub.s32 %v3188, %v3190
        %v3192 = vrot.slane %v3178, %v3191
        %v3193 = vcombine.low %v3185, %v3192
        %v3194 = vcombine.low %v2787, %v2794
        %v3195 = vcombine.low %v2801, %v2808
        %v3197 = vunpack.c.l.s4 1983009808
        %v3198 = vunpack.c.0.s8 %v3197
        %v3199 = vlaneseq
        %v3200 = vshrl.u32 %v3199, 7
        %v3201 = vsub.s32 %v3198, %v3200
        %v3202 = vrot.slane %v3194, %v3201
        %v3204 = vunpack.c.l.s4 1983009808
        %v3205 = vunpack.c.0.s8 %v3204
        %v3206 = vlaneseq
        %v3207 = vshrl.u32 %v3206, 7
        %v3208 = vsub.s32 %v3205, %v3207
        %v3209 = vrot.slane %v3195, %v3208
        %v3210 = vcombine.low %v3202, %v3209
        %v3211 = vcombine.low %v2815, %v2822
        %v3212 = vcombine.low %v2829, %v2836
        %v3214 = vunpack.c.l.s4 1983009808
        %v3215 = vunpack.c.0.s8 %v3214
        %v3216 = vlaneseq
        %v3217 = vshrl.u32 %v3216, 7
        %v3218 = vsub.s32 %v3215, %v3217
        %v3219 = vrot.slane %v3211, %v3218
        %v3221 = vunpack.c.l.s4 1983009808
        %v3222 = vunpack.c.0.s8 %v3221
        %v3223 = vlaneseq
        %v3224 = vshrl.u32 %v3223, 7
        %v3225 = vsub.s32 %v3222, %v3224
        %v3226 = vrot.slane %v3212, %v3225
        %v3227 = vcombine.low %v3219, %v3226
        %v3228 = vcombine.low %v2843, %v2850
        %v3229 = vcombine.low %v2857, %v2864
        %v3231 = vunpack.c.l.s4 1983009808
        %v3232 = vunpack.c.0.s8 %v3231
        %v3233 = vlaneseq
        %v3234 = vshrl.u32 %v3233, 7
        %v3235 = vsub.s32 %v3232, %v3234
        %v3236 = vrot.slane %v3228, %v3235
        %v3238 = vunpack.c.l.s4 1983009808
        %v3239 = vunpack.c.0.s8 %v3238
        %v3240 = vlaneseq
        %v3241 = vshrl.u32 %v3240, 7
        %v3242 = vsub.s32 %v3239, %v3241
        %v3243 = vrot.slane %v3229, %v3242
        %v3244 = vcombine.low %v3236, %v3243
        %v3245 = vcombine.low %v2871, %v2878
        %v3246 = vcombine.low %v2885, %v2892
        %v3248 = vunpack.c.l.s4 1983009808
        %v3249 = vunpack.c.0.s8 %v3248
        %v3250 = vlaneseq
        %v3251 = vshrl.u32 %v3250, 7
        %v3252 = vsub.s32 %v3249, %v3251
        %v3253 = vrot.slane %v3245, %v3252
        %v3255 = vunpack.c.l.s4 1983009808
        %v3256 = vunpack.c.0.s8 %v3255
        %v3257 = vlaneseq
        %v3258 = vshrl.u32 %v3257, 7
        %v3259 = vsub.s32 %v3256, %v3258
        %v3260 = vrot.slane %v3246, %v3259
        %v3261 = vcombine.low %v3253, %v3260
        %v3262 = vcombine.low %v2899, %v2906
        %v3263 = vcombine.low %v2913, %v2920
        %v3265 = vunpack.c.l.s4 1983009808
        %v3266 = vunpack.c.0.s8 %v3265
        %v3267 = vlaneseq
        %v3268 = vshrl.u32 %v3267, 7
        %v3269 = vsub.s32 %v3266, %v3268
        %v3270 = vrot.slane %v3262, %v3269
        %v3272 = vunpack.c.l.s4 1983009808
        %v3273 = vunpack.c.0.s8 %v3272
        %v3274 = vlaneseq
        %v3275 = vshrl.u32 %v3274, 7
        %v3276 = vsub.s32 %v3273, %v3275
        %v3277 = vrot.slane %v3263, %v3276
        %v3278 = vcombine.low %v3270, %v3277
        %v3279 = vcombine.low %v2927, %v2934
        %v3280 = vcombine.low %v2941, %v2948
        %v3282 = vunpack.c.l.s4 1983009808
        %v3283 = vunpack.c.0.s8 %v3282
        %v3284 = vlaneseq
        %v3285 = vshrl.u32 %v3284, 7
        %v3286 = vsub.s32 %v3283, %v3285
        %v3287 = vrot.slane %v3279, %v3286
        %v3289 = vunpack.c.l.s4 1983009808
        %v3290 = vunpack.c.0.s8 %v3289
        %v3291 = vlaneseq
        %v3292 = vshrl.u32 %v3291, 7
        %v3293 = vsub.s32 %v3290, %v3292
        %v3294 = vrot.slane %v3280, %v3293
        %v3295 = vcombine.low %v3287, %v3294
        %v3296 = vcombine.low %v2955, %v2962
        %v3297 = vcombine.low %v2969, %v2976
        %v3299 = vunpack.c.l.s4 1983009808
        %v3300 = vunpack.c.0.s8 %v3299
        %v3301 = vlaneseq
        %v3302 = vshrl.u32 %v3301, 7
        %v3303 = vsub.s32 %v3300, %v3302
        %v3304 = vrot.slane %v3296, %v3303
        %v3306 = vunpack.c.l.s4 1983009808
        %v3307 = vunpack.c.0.s8 %v3306
        %v3308 = vlaneseq
        %v3309 = vshrl.u32 %v3308, 7
        %v3310 = vsub.s32 %v3307, %v3309
        %v3311 = vrot.slane %v3297, %v3310
        %v3312 = vcombine.low %v3304, %v3311
        %vm3313 = vcmask 1044484
        %v3314 = vsel %vm3313, %v3057, %v3057
        %vm3315 = vcmask 1046534
        %v3316 = vsel %vm3315, %v3057, %v3314
        %v3317 = vrot.slane %v3193, 7
        %vm3318 = vcmask 1041409
        %v3319 = vsel %vm3318, %v3317, %v3316
        %vm3320 = vcmask 1043459
        %v3321 = vsel %vm3320, %v3317, %v3319
        %vm3322 = vcmask 1045509
        %v3323 = vsel %vm3322, %v3317, %v3321
        %vm3324 = vcmask 1047559
        %v3325 = vsel %vm3324, %v3317, %v3323
        %v3326 = vsel %vm3313, %v3074, %v3074
        %v3327 = vsel %vm3315, %v3074, %v3326
        %v3328 = vrot.slane %v3210, 7
        %v3329 = vsel %vm3318, %v3328, %v3327
        %v3330 = vsel %vm3320, %v3328, %v3329
        %v3331 = vsel %vm3322, %v3328, %v3330
        %v3332 = vsel %vm3324, %v3328, %v3331
        %v3333 = vsel %vm3313, %v3091, %v3091
        %v3334 = vsel %vm3315, %v3091, %v3333
        %v3335 = vrot.slane %v3227, 7
        %v3336 = vsel %vm3318, %v3335, %v3334
        %v3337 = vsel %vm3320, %v3335, %v3336
        %v3338 = vsel %vm3322, %v3335, %v3337
        %v3339 = vsel %vm3324, %v3335, %v3338
        %v3340 = vsel %vm3313, %v3108, %v3108
        %v3341 = vsel %vm3315, %v3108, %v3340
        %v3342 = vrot.slane %v3244, 7
        %v3343 = vsel %vm3318, %v3342, %v3341
        %v3344 = vsel %vm3320, %v3342, %v3343
        %v3345 = vsel %vm3322, %v3342, %v3344
        %v3346 = vsel %vm3324, %v3342, %v3345
        %v3347 = vsel %vm3313, %v3125, %v3125
        %v3348 = vsel %vm3315, %v3125, %v3347
        %v3349 = vrot.slane %v3261, 7
        %v3350 = vsel %vm3318, %v3349, %v3348
        %v3351 = vsel %vm3320, %v3349, %v3350
        %v3352 = vsel %vm3322, %v3349, %v3351
        %v3353 = vsel %vm3324, %v3349, %v3352
        %v3354 = vsel %vm3313, %v3142, %v3142
        %v3355 = vsel %vm3315, %v3142, %v3354
        %v3356 = vrot.slane %v3278, 7
        %v3357 = vsel %vm3318, %v3356, %v3355
        %v3358 = vsel %vm3320, %v3356, %v3357
        %v3359 = vsel %vm3322, %v3356, %v3358
        %v3360 = vsel %vm3324, %v3356, %v3359
        %v3361 = vsel %vm3313, %v3159, %v3159
        %v3362 = vsel %vm3315, %v3159, %v3361
        %v3363 = vrot.slane %v3295, 7
        %v3364 = vsel %vm3318, %v3363, %v3362
        %v3365 = vsel %vm3320, %v3363, %v3364
        %v3366 = vsel %vm3322, %v3363, %v3365
        %v3367 = vsel %vm3324, %v3363, %v3366
        %v3368 = vsel %vm3313, %v3176, %v3176
        %v3369 = vsel %vm3315, %v3176, %v3368
        %v3370 = vrot.slane %v3312, 7
        %v3371 = vsel %vm3318, %v3370, %v3369
        %v3372 = vsel %vm3320, %v3370, %v3371
        %v3373 = vsel %vm3322, %v3370, %v3372
        %v3374 = vsel %vm3324, %v3370, %v3373
        %3383 = vst [vmem:[%s243] sm:$0xff] %v3325
        %3384 = vst [vmem:[%s243 + $0x8] sm:$0xff] %v3332
        %3385 = vst [vmem:[%s243 + $0x10] sm:$0xff] %v3339
        %3386 = vst [vmem:[%s243 + $0x18] sm:$0xff] %v3346
        %3387 = vst [vmem:[%s243 + $0x20] sm:$0xff] %v3353
        %3388 = vst [vmem:[%s243 + $0x28] sm:$0xff] %v3360
        %3389 = vst [vmem:[%s243 + $0x30] sm:$0xff] %v3367
        %3390 = vst [vmem:[%s243 + $0x38] sm:$0xff] %v3374
        %v3391 = vcombine.low %v1721, %v1722
        %v3392 = vcombine.low %v1723, %v1724
        %v3394 = vunpack.c.l.s4 1983009808
        %v3395 = vunpack.c.0.s8 %v3394
        %v3396 = vlaneseq
        %v3397 = vshrl.u32 %v3396, 7
        %v3398 = vsub.s32 %v3395, %v3397
        %v3399 = vrot.slane %v3391, %v3398
        %v3401 = vunpack.c.l.s4 1983009808
        %v3402 = vunpack.c.0.s8 %v3401
        %v3403 = vlaneseq
        %v3404 = vshrl.u32 %v3403, 7
        %v3405 = vsub.s32 %v3402, %v3404
        %v3406 = vrot.slane %v3392, %v3405
        %v3407 = vcombine.low %v3399, %v3406
        %v3408 = vcombine.low %v1725, %v1726
        %v3409 = vcombine.low %v1727, %v1728
        %v3411 = vunpack.c.l.s4 1983009808
        %v3412 = vunpack.c.0.s8 %v3411
        %v3413 = vlaneseq
        %v3414 = vshrl.u32 %v3413, 7
        %v3415 = vsub.s32 %v3412, %v3414
        %v3416 = vrot.slane %v3408, %v3415
        %v3418 = vunpack.c.l.s4 1983009808
        %v3419 = vunpack.c.0.s8 %v3418
        %v3420 = vlaneseq
        %v3421 = vshrl.u32 %v3420, 7
        %v3422 = vsub.s32 %v3419, %v3421
        %v3423 = vrot.slane %v3409, %v3422
        %v3424 = vcombine.low %v3416, %v3423
        %v3425 = vcombine.low %v1729, %v1730
        %v3426 = vcombine.low %v1731, %v1732
        %v3428 = vunpack.c.l.s4 1983009808
        %v3429 = vunpack.c.0.s8 %v3428
        %v3430 = vlaneseq
        %v3431 = vshrl.u32 %v3430, 7
        %v3432 = vsub.s32 %v3429, %v3431
        %v3433 = vrot.slane %v3425, %v3432
        %v3435 = vunpack.c.l.s4 1983009808
        %v3436 = vunpack.c.0.s8 %v3435
        %v3437 = vlaneseq
        %v3438 = vshrl.u32 %v3437, 7
        %v3439 = vsub.s32 %v3436, %v3438
        %v3440 = vrot.slane %v3426, %v3439
        %v3441 = vcombine.low %v3433, %v3440
        %v3442 = vcombine.low %v1733, %v1734
        %v3443 = vcombine.low %v1735, %v1736
        %v3445 = vunpack.c.l.s4 1983009808
        %v3446 = vunpack.c.0.s8 %v3445
        %v3447 = vlaneseq
        %v3448 = vshrl.u32 %v3447, 7
        %v3449 = vsub.s32 %v3446, %v3448
        %v3450 = vrot.slane %v3442, %v3449
        %v3452 = vunpack.c.l.s4 1983009808
        %v3453 = vunpack.c.0.s8 %v3452
        %v3454 = vlaneseq
        %v3455 = vshrl.u32 %v3454, 7
        %v3456 = vsub.s32 %v3453, %v3455
        %v3457 = vrot.slane %v3443, %v3456
        %v3458 = vcombine.low %v3450, %v3457
        %v3459 = vcombine.low %v1737, %v1738
        %v3460 = vcombine.low %v1739, %v1740
        %v3462 = vunpack.c.l.s4 1983009808
        %v3463 = vunpack.c.0.s8 %v3462
        %v3464 = vlaneseq
        %v3465 = vshrl.u32 %v3464, 7
        %v3466 = vsub.s32 %v3463, %v3465
        %v3467 = vrot.slane %v3459, %v3466
        %v3469 = vunpack.c.l.s4 1983009808
        %v3470 = vunpack.c.0.s8 %v3469
        %v3471 = vlaneseq
        %v3472 = vshrl.u32 %v3471, 7
        %v3473 = vsub.s32 %v3470, %v3472
        %v3474 = vrot.slane %v3460, %v3473
        %v3475 = vcombine.low %v3467, %v3474
        %v3476 = vcombine.low %v1741, %v1742
        %v3477 = vcombine.low %v1743, %v1744
        %v3479 = vunpack.c.l.s4 1983009808
        %v3480 = vunpack.c.0.s8 %v3479
        %v3481 = vlaneseq
        %v3482 = vshrl.u32 %v3481, 7
        %v3483 = vsub.s32 %v3480, %v3482
        %v3484 = vrot.slane %v3476, %v3483
        %v3486 = vunpack.c.l.s4 1983009808
        %v3487 = vunpack.c.0.s8 %v3486
        %v3488 = vlaneseq
        %v3489 = vshrl.u32 %v3488, 7
        %v3490 = vsub.s32 %v3487, %v3489
        %v3491 = vrot.slane %v3477, %v3490
        %v3492 = vcombine.low %v3484, %v3491
        %v3493 = vcombine.low %v1745, %v1746
        %v3494 = vcombine.low %v1747, %v1748
        %v3496 = vunpack.c.l.s4 1983009808
        %v3497 = vunpack.c.0.s8 %v3496
        %v3498 = vlaneseq
        %v3499 = vshrl.u32 %v3498, 7
        %v3500 = vsub.s32 %v3497, %v3499
        %v3501 = vrot.slane %v3493, %v3500
        %v3503 = vunpack.c.l.s4 1983009808
        %v3504 = vunpack.c.0.s8 %v3503
        %v3505 = vlaneseq
        %v3506 = vshrl.u32 %v3505, 7
        %v3507 = vsub.s32 %v3504, %v3506
        %v3508 = vrot.slane %v3494, %v3507
        %v3509 = vcombine.low %v3501, %v3508
        %v3510 = vcombine.low %v1749, %v1750
        %v3511 = vcombine.low %v1751, %v1752
        %v3513 = vunpack.c.l.s4 1983009808
        %v3514 = vunpack.c.0.s8 %v3513
        %v3515 = vlaneseq
        %v3516 = vshrl.u32 %v3515, 7
        %v3517 = vsub.s32 %v3514, %v3516
        %v3518 = vrot.slane %v3510, %v3517
        %v3520 = vunpack.c.l.s4 1983009808
        %v3521 = vunpack.c.0.s8 %v3520
        %v3522 = vlaneseq
        %v3523 = vshrl.u32 %v3522, 7
        %v3524 = vsub.s32 %v3521, %v3523
        %v3525 = vrot.slane %v3511, %v3524
        %v3526 = vcombine.low %v3518, %v3525
        %v3527 = vcombine.low %v1753, %v1754
        %v3528 = vcombine.low %v1755, %v1756
        %v3530 = vunpack.c.l.s4 1983009808
        %v3531 = vunpack.c.0.s8 %v3530
        %v3532 = vlaneseq
        %v3533 = vshrl.u32 %v3532, 7
        %v3534 = vsub.s32 %v3531, %v3533
        %v3535 = vrot.slane %v3527, %v3534
        %v3537 = vunpack.c.l.s4 1983009808
        %v3538 = vunpack.c.0.s8 %v3537
        %v3539 = vlaneseq
        %v3540 = vshrl.u32 %v3539, 7
        %v3541 = vsub.s32 %v3538, %v3540
        %v3542 = vrot.slane %v3528, %v3541
        %v3543 = vcombine.low %v3535, %v3542
        %v3544 = vcombine.low %v1757, %v1758
        %v3545 = vcombine.low %v1759, %v1760
        %v3547 = vunpack.c.l.s4 1983009808
        %v3548 = vunpack.c.0.s8 %v3547
        %v3549 = vlaneseq
        %v3550 = vshrl.u32 %v3549, 7
        %v3551 = vsub.s32 %v3548, %v3550
        %v3552 = vrot.slane %v3544, %v3551
        %v3554 = vunpack.c.l.s4 1983009808
        %v3555 = vunpack.c.0.s8 %v3554
        %v3556 = vlaneseq
        %v3557 = vshrl.u32 %v3556, 7
        %v3558 = vsub.s32 %v3555, %v3557
        %v3559 = vrot.slane %v3545, %v3558
        %v3560 = vcombine.low %v3552, %v3559
        %v3561 = vcombine.low %v1761, %v1762
        %v3562 = vcombine.low %v1763, %v1764
        %v3564 = vunpack.c.l.s4 1983009808
        %v3565 = vunpack.c.0.s8 %v3564
        %v3566 = vlaneseq
        %v3567 = vshrl.u32 %v3566, 7
        %v3568 = vsub.s32 %v3565, %v3567
        %v3569 = vrot.slane %v3561, %v3568
        %v3571 = vunpack.c.l.s4 1983009808
        %v3572 = vunpack.c.0.s8 %v3571
        %v3573 = vlaneseq
        %v3574 = vshrl.u32 %v3573, 7
        %v3575 = vsub.s32 %v3572, %v3574
        %v3576 = vrot.slane %v3562, %v3575
        %v3577 = vcombine.low %v3569, %v3576
        %v3578 = vcombine.low %v1765, %v1766
        %v3579 = vcombine.low %v1767, %v1768
        %v3581 = vunpack.c.l.s4 1983009808
        %v3582 = vunpack.c.0.s8 %v3581
        %v3583 = vlaneseq
        %v3584 = vshrl.u32 %v3583, 7
        %v3585 = vsub.s32 %v3582, %v3584
        %v3586 = vrot.slane %v3578, %v3585
        %v3588 = vunpack.c.l.s4 1983009808
        %v3589 = vunpack.c.0.s8 %v3588
        %v3590 = vlaneseq
        %v3591 = vshrl.u32 %v3590, 7
        %v3592 = vsub.s32 %v3589, %v3591
        %v3593 = vrot.slane %v3579, %v3592
        %v3594 = vcombine.low %v3586, %v3593
        %v3595 = vcombine.low %v1769, %v1770
        %v3596 = vcombine.low %v1771, %v1772
        %v3598 = vunpack.c.l.s4 1983009808
        %v3599 = vunpack.c.0.s8 %v3598
        %v3600 = vlaneseq
        %v3601 = vshrl.u32 %v3600, 7
        %v3602 = vsub.s32 %v3599, %v3601
        %v3603 = vrot.slane %v3595, %v3602
        %v3605 = vunpack.c.l.s4 1983009808
        %v3606 = vunpack.c.0.s8 %v3605
        %v3607 = vlaneseq
        %v3608 = vshrl.u32 %v3607, 7
        %v3609 = vsub.s32 %v3606, %v3608
        %v3610 = vrot.slane %v3596, %v3609
        %v3611 = vcombine.low %v3603, %v3610
        %v3612 = vcombine.low %v1773, %v1774
        %v3613 = vcombine.low %v1775, %v1776
        %v3615 = vunpack.c.l.s4 1983009808
        %v3616 = vunpack.c.0.s8 %v3615
        %v3617 = vlaneseq
        %v3618 = vshrl.u32 %v3617, 7
        %v3619 = vsub.s32 %v3616, %v3618
        %v3620 = vrot.slane %v3612, %v3619
        %v3622 = vunpack.c.l.s4 1983009808
        %v3623 = vunpack.c.0.s8 %v3622
        %v3624 = vlaneseq
        %v3625 = vshrl.u32 %v3624, 7
        %v3626 = vsub.s32 %v3623, %v3625
        %v3627 = vrot.slane %v3613, %v3626
        %v3628 = vcombine.low %v3620, %v3627
        %v3629 = vcombine.low %v1777, %v1778
        %v3630 = vcombine.low %v1779, %v1780
        %v3632 = vunpack.c.l.s4 1983009808
        %v3633 = vunpack.c.0.s8 %v3632
        %v3634 = vlaneseq
        %v3635 = vshrl.u32 %v3634, 7
        %v3636 = vsub.s32 %v3633, %v3635
        %v3637 = vrot.slane %v3629, %v3636
        %v3639 = vunpack.c.l.s4 1983009808
        %v3640 = vunpack.c.0.s8 %v3639
        %v3641 = vlaneseq
        %v3642 = vshrl.u32 %v3641, 7
        %v3643 = vsub.s32 %v3640, %v3642
        %v3644 = vrot.slane %v3630, %v3643
        %v3645 = vcombine.low %v3637, %v3644
        %v3646 = vcombine.low %v1781, %v1782
        %v3647 = vcombine.low %v1783, %v1784
        %v3649 = vunpack.c.l.s4 1983009808
        %v3650 = vunpack.c.0.s8 %v3649
        %v3651 = vlaneseq
        %v3652 = vshrl.u32 %v3651, 7
        %v3653 = vsub.s32 %v3650, %v3652
        %v3654 = vrot.slane %v3646, %v3653
        %v3656 = vunpack.c.l.s4 1983009808
        %v3657 = vunpack.c.0.s8 %v3656
        %v3658 = vlaneseq
        %v3659 = vshrl.u32 %v3658, 7
        %v3660 = vsub.s32 %v3657, %v3659
        %v3661 = vrot.slane %v3647, %v3660
        %v3662 = vcombine.low %v3654, %v3661
        %v3663 = vsel %vm3313, %v3407, %v3407
        %v3664 = vsel %vm3315, %v3407, %v3663
        %v3665 = vrot.slane %v3543, 7
        %v3666 = vsel %vm3318, %v3665, %v3664
        %v3667 = vsel %vm3320, %v3665, %v3666
        %v3668 = vsel %vm3322, %v3665, %v3667
        %v3669 = vsel %vm3324, %v3665, %v3668
        %v3670 = vsel %vm3313, %v3424, %v3424
        %v3671 = vsel %vm3315, %v3424, %v3670
        %v3672 = vrot.slane %v3560, 7
        %v3673 = vsel %vm3318, %v3672, %v3671
        %v3674 = vsel %vm3320, %v3672, %v3673
        %v3675 = vsel %vm3322, %v3672, %v3674
        %v3676 = vsel %vm3324, %v3672, %v3675
        %v3677 = vsel %vm3313, %v3441, %v3441
        %v3678 = vsel %vm3315, %v3441, %v3677
        %v3679 = vrot.slane %v3577, 7
        %v3680 = vsel %vm3318, %v3679, %v3678
        %v3681 = vsel %vm3320, %v3679, %v3680
        %v3682 = vsel %vm3322, %v3679, %v3681
        %v3683 = vsel %vm3324, %v3679, %v3682
        %v3684 = vsel %vm3313, %v3458, %v3458
        %v3685 = vsel %vm3315, %v3458, %v3684
        %v3686 = vrot.slane %v3594, 7
        %v3687 = vsel %vm3318, %v3686, %v3685
        %v3688 = vsel %vm3320, %v3686, %v3687
        %v3689 = vsel %vm3322, %v3686, %v3688
        %v3690 = vsel %vm3324, %v3686, %v3689
        %v3691 = vsel %vm3313, %v3475, %v3475
        %v3692 = vsel %vm3315, %v3475, %v3691
        %v3693 = vrot.slane %v3611, 7
        %v3694 = vsel %vm3318, %v3693, %v3692
        %v3695 = vsel %vm3320, %v3693, %v3694
        %v3696 = vsel %vm3322, %v3693, %v3695
        %v3697 = vsel %vm3324, %v3693, %v3696
        %v3698 = vsel %vm3313, %v3492, %v3492
        %v3699 = vsel %vm3315, %v3492, %v3698
        %v3700 = vrot.slane %v3628, 7
        %v3701 = vsel %vm3318, %v3700, %v3699
        %v3702 = vsel %vm3320, %v3700, %v3701
        %v3703 = vsel %vm3322, %v3700, %v3702
        %v3704 = vsel %vm3324, %v3700, %v3703
        %v3705 = vsel %vm3313, %v3509, %v3509
        %v3706 = vsel %vm3315, %v3509, %v3705
        %v3707 = vrot.slane %v3645, 7
        %v3708 = vsel %vm3318, %v3707, %v3706
        %v3709 = vsel %vm3320, %v3707, %v3708
        %v3710 = vsel %vm3322, %v3707, %v3709
        %v3711 = vsel %vm3324, %v3707, %v3710
        %v3712 = vsel %vm3313, %v3526, %v3526
        %v3713 = vsel %vm3315, %v3526, %v3712
        %v3714 = vrot.slane %v3662, 7
        %v3715 = vsel %vm3318, %v3714, %v3713
        %v3716 = vsel %vm3320, %v3714, %v3715
        %v3717 = vsel %vm3322, %v3714, %v3716
        %v3718 = vsel %vm3324, %v3714, %v3717
        %3719 = vst [vmem:[%s250] sm:$0xff] %v3669
        %3720 = vst [vmem:[%s250 + $0x8] sm:$0xff] %v3676
        %3721 = vst [vmem:[%s250 + $0x10] sm:$0xff] %v3683
        %3722 = vst [vmem:[%s250 + $0x18] sm:$0xff] %v3690
        %3723 = vst [vmem:[%s250 + $0x20] sm:$0xff] %v3697
        %3724 = vst [vmem:[%s250 + $0x28] sm:$0xff] %v3704
        %3725 = vst [vmem:[%s250 + $0x30] sm:$0xff] %v3711
        %3726 = vst [vmem:[%s250 + $0x38] sm:$0xff] %v3718
        %s3727 = sand.u32 %s87, 1
        %s3728 = scalar_lea.sflag [#allocation4], %s3727
        %s3729 = sand.u32 %s87, 1
        %s3730 = smul.addr %s3729, 64
        %s3731 = scalar_lea.vmem [#allocation7], %s3730
        %s3732 = sand.u32 %s113, 1
        %s3733 = scalar_lea.sflag [#allocation9], %s3732
        %s3734 = sand.u32 %s113, 1
        %s3735 = smul.addr %s3734, 64
        %s3736 = scalar_lea.vmem [#allocation8], %s3735
        // Predicated region
        $region37: #{tpu_custom_call.1} parent=27 // pred_check
          %p3737 = pneg %p97
        $region38: #{tpu_custom_call.1} parent=27 // pred_check_branch
          %3739 = sbr.rel (%p3737) target = $region40
        $region39: #{tpu_custom_call.1} parent=27 // pred_region
          %s3740 = smul.u32 32, %s27
          %s3741 = ssub.s32 36, %s3740
          %p3742 = scmp.lt.s32.totalorder %s3741, 32
          %s3743 = scalar_select %p3742, %s3741, 32
          %s3744 = smul.u32 32, %s3743
          %s3746 = ssub.s32 1024, %s3744
          %3747 = vsyncadd %s3728, %s3746
          %p3748 = scmp.ne.s32.totalorder 0, %s3744
          %s3749 = smul.addr %s3740, 32
          %s3750 = scalar_lea.hbm %s2, %s3749
          %s3751 = smul.u32 %s3743, 2
          %s3752 = sshll.u32 %s3751, 4
          %s3753 = sshll.u32 %s3731, 4
          %s3754 = int_to_ptr.vmem [resolvable:$true] %s3753
          %3756 = dma.vmem_to_hbm [thread:$0]  (%p3748), %s3754, %s3752, %s3750, %s3728
        $region40: #{tpu_custom_call.1} parent=27 // pred_fallthru
          _
        // Predicated region
        $region41: #{tpu_custom_call.1} parent=27 // pred_check
          %p3757 = pneg %p123
        $region42: #{tpu_custom_call.1} parent=27 // pred_check_branch
          %3759 = sbr.rel (%p3757) target = $region44
        $region43: #{tpu_custom_call.1} parent=27 // pred_region
          %s3760 = smul.u32 32, %s27
          %s3761 = ssub.s32 36, %s3760
          %p3762 = scmp.lt.s32.totalorder %s3761, 32
          %s3763 = scalar_select %p3762, %s3761, 32
          %s3764 = smul.u32 32, %s3763
          %s3766 = ssub.s32 1024, %s3764
          %3767 = vsyncadd %s3733, %s3766
          %p3768 = scmp.ne.s32.totalorder 0, %s3764
          %s3769 = smul.addr %s3760, 32
          %s3770 = scalar_lea.hbm %s3, %s3769
          %s3771 = smul.u32 %s3763, 2
          %s3772 = sshll.u32 %s3771, 4
          %s3773 = sshll.u32 %s3736, 4
          %s3774 = int_to_ptr.vmem [resolvable:$true] %s3773
          %3776 = dma.vmem_to_hbm [thread:$0]  (%p3768), %s3774, %s3772, %s3770, %s3733
        $region44: #{tpu_custom_call.1} parent=27 // pred_fallthru
          _
      $region28: #{tpu_custom_call.1} parent=5 // pred_fallthru
        _
      %p3777 = scmp.le.s32.totalorder 2, %s22
      // Predicated region
      $region45: #{tpu_custom_call.1} parent=5 // pred_check
        %p3778 = pneg %p3777
      $region46: #{tpu_custom_call.1} parent=5 // pred_check_branch
        %3780 = sbr.rel (%p3778) target = $region48
      $region47: #{tpu_custom_call.1} parent=5 // pred_region
        %s3781 = ssub.s32 %s22, 2
        // Predicated region
        $region49: #{tpu_custom_call.1} parent=47 // pred_check
          %p3782 = pneg %p103
        $region50: #{tpu_custom_call.1} parent=47 // pred_check_branch
          %3784 = sbr.rel (%p3782) target = $region52
        $region51: #{tpu_custom_call.1} parent=47 // pred_region
          %s3785 = sand.u32 %s88, 1
          %s3786 = scalar_lea.sflag [#allocation4], %s3785
          %s3787 = sand.u32 %s88, 1
          %s3788 = smul.addr %s3787, 64
          %s3789 = scalar_lea.vmem [#allocation7], %s3788
          %3790 = dma.done %s3786, 1024
        $region52: #{tpu_custom_call.1} parent=47 // pred_fallthru
          _
        // Predicated region
        $region53: #{tpu_custom_call.1} parent=47 // pred_check
          %p3791 = pneg %p129
        $region54: #{tpu_custom_call.1} parent=47 // pred_check_branch
          %3793 = sbr.rel (%p3791) target = $region56
        $region55: #{tpu_custom_call.1} parent=47 // pred_region
          %s3794 = sand.u32 %s114, 1
          %s3795 = scalar_lea.sflag [#allocation9], %s3794
          %s3796 = sand.u32 %s114, 1
          %s3797 = smul.addr %s3796, 64
          %s3798 = scalar_lea.vmem [#allocation8], %s3797
          %3799 = dma.done %s3795, 1024
        $region56: #{tpu_custom_call.1} parent=47 // pred_fallthru
          _
      $region48: #{tpu_custom_call.1} parent=5 // pred_fallthru
        _
    $region6: #{tpu_custom_call.1} parent=1 // loop_footer
      %s26 = sadd.s32 1, %s22
    $region7: #{tpu_custom_call.1} parent=1 // loop_footer_branch
      %21 = sbr.rel target = $region3
    $region8: #{tpu_custom_call.1} parent=1 // loop_exit
      _
    %3800 = vsyncpa [#allocation3], 1
    %s3801 = scalar_lea.sflag [#allocation3], 1
    %3802 = vsyncpa %s3801, 1
    %3803 = vsyncpa [#allocation6], 1
    %s3804 = scalar_lea.sflag [#allocation6], 1
    %3805 = vsyncpa %s3804, 1
    %3806 = vsyncpa [#allocation4], 1
    %s3807 = scalar_lea.sflag [#allocation4], 1
    %3808 = vsyncpa %s3807, 1
    %3809 = vsyncpa [#allocation9], 1
    %s3810 = scalar_lea.sflag [#allocation9], 1
    %3811 = vsyncpa %s3810, 1

</llo_original>
